<compile_context>
chip_gen: v7x
topology: tpu7x:2x2x1
jax: 0.10.0
libtpu: 0.0.40
codegen_flags: <defaults>
</compile_context>

<pallas_src>
import functools

import jax
import jax.numpy as jnp
from jax.experimental import pallas as pl
from jax.experimental.pallas import tpu as pltpu

F_HID = 8      # hidden channels of the synthetic regularizer CNN
KS = 3         # conv kernel size
LAM = 0.5      # data-consistency step size (data_weight of the DC layer)
NUM_ITER = 2   # num_iter_total of MWDunet (shared_params=True -> same weights every iteration)


# ----------------------------------------------------------------------------
# Generation-aware tiling / VMEM helpers
# ----------------------------------------------------------------------------
@functools.lru_cache(maxsize=None)
def _vmem_limit_bytes():
    # ~half of physical VMEM: 64 MiB on v5e/v6e (128 MiB), 32 MiB on v7x (64 MiB).
    try:
        cap = int(pltpu.get_tpu_info().vmem_capacity_bytes)
    except Exception:
        cap = 64 << 20
    return max(16 << 20, min(cap // 2, 64 << 20))


def _pick_strip_rows(H, W, max_lanes=4096):
    # Rows per strip for kernel A: RS | H, RS*W multiple of 128 (lane-block constraint),
    # RS*W >= 2W+2 so the halo window fits inside the three fetched blocks.
    cands = [rs for rs in range(1, H + 1)
             if H % rs == 0 and rs * W >= 2 * W + 2 and (rs * W) % 128 == 0]
    if not cands:
        raise ValueError(f"unsupported image size for strip tiling: H={H}, W={W}")
    small = [rs for rs in cands if rs * W <= max_lanes]
    return max(small) if small else min(cands)


def _pick_row_tile(H, max_rows=64):
    # Row tile for kernel B: multiple of 8 dividing H (or full H), bounded for VMEM / pipelining.
    best = H
    for rh in range(8, min(H, max_rows) + 1, 8):
        if H % rh == 0:
            best = rh
    return best


def _pick_coil_tile(C, RH, W):
    # Coils sit on a non-minor block dim, so any divisor of C is legal; pick the largest that
    # keeps the double-buffered per-step working set under a fraction of the scoped VMEM limit.
    budget = _vmem_limit_bytes() // 3
    per_coil = 4 * RH * W * 4 * 2          # ir, ii, sr, si  (f32, double-buffered)
    fixed = 3 * 2 * RH * W * 4 * 2         # xt, bias, out   (2-plane blocks)
    best = 1
    for tc in range(1, C + 1):
        if C % tc == 0 and fixed + tc * per_coil <= budget:
            best = tc
    return best


# ----------------------------------------------------------------------------
# Kernel A: fused regularizer + coil expansion (strip-tiled, MXU conv)
#   x_thalf = x - CNN(x)      (conv3x3(2->F_HID) + ReLU + conv3x3(F_HID->2), zero pad 1)
#   coil_c  = S_c * x_thalf   (complex multiply, all coils of the strip)
# The flattened x plane is zero-padded by one strip on each side in HBM; the halo is delivered by
# the BlockSpec (same array passed with s, s+1, s+2 index maps), so no rolls / dynamic slices.
# ----------------------------------------------------------------------------
def _make_reg_coil_kernel(W):
    def kernel(xl_ref, xc_ref, xr_ref,                 # (1, 2, SHW) x blocks s-1 / s / s+1
               sr_ref, si_ref,                         # (1, C, SHW) smaps re/im for this strip
               w1t_ref, w2s_ref, b1_ref, b2_ref,       # small VMEM weight operands
               ml_ref, mr_ref,                         # (1, EXT) static column masks
               xt_ref, cr_ref, ci_ref):                # outputs
        s = pl.program_id(1)
        n_s = pl.num_programs(1)
        SHW = xc_ref.shape[2]            # rows-per-strip * W, multiple of 128
        EXT = SHW + 2 * W                # strip + one halo row on each side

        # 3*SHW window of the padded flattened plane around this strip (halo comes from the DMA).
        win = jnp.concatenate([xl_ref[0], xc_ref[0], xr_ref[0]], axis=-1)    # (2, 3*SHW)
        ml = ml_ref[...]                                                     # col >= 1
        mr = mr_ref[...]                                                     # col <= W-2

        # ---- conv1: im2col patch matrix (18, EXT) + one MXU matmul (F_HID,18)@(18,EXT) ----
        pieces = []
        for ky in range(KS):
            for kx in range(KS):
                off = (ky - 1) * W + (kx - 1)
                a = SHW - W + off
                p = win[:, a:a + EXT]                  # (2, EXT) shifted patch (both channels)
                if kx == 0:
                    p = p * ml                         # zero-pad across row boundary (dx = -1)
                elif kx == 2:
                    p = p * mr                         # (dx = +1)
                pieces.append(p)
        patches = jnp.concatenate(pieces, axis=0)      # (18, EXT), row = 2*tap + channel

        hid = jnp.dot(w1t_ref[...], patches, preferred_element_type=jnp.float32)
        hid = jnp.maximum(hid + b1_ref[...], 0.0)      # (F_HID, EXT)

        # conv2 zero-pads the *hidden* map: zero the halo lanes that fall outside the image.
        lane = jax.lax.broadcasted_iota(jnp.int32, (1, EXT), 1)
        keep = (jnp.logical_or(s != 0, lane >= W) &
                jnp.logical_or(s != n_s - 1, lane < EXT - W))
        hid = jnp.where(keep, hid, 0.0)

        # ---- conv2: one MXU matmul (18,F_HID)@(F_HID,EXT) + 9 statically-shifted adds ----
        partial = jnp.dot(w2s_ref[...], hid, preferred_element_type=jnp.float32)   # (18, EXT)
        zcol = jnp.zeros((2 * KS * KS, 1), jnp.float32)
        partial = jnp.concatenate([zcol, partial, zcol], axis=1)                   # (18, EXT+2)

        mls = ml[:, :SHW]
        mrs = mr[:, :SHW]
        acc = jnp.zeros((2, SHW), jnp.float32)
        for t in range(KS * KS):
            ky, kx = t // KS, t % KS
            off = (ky - 1) * W + (kx - 1)
            a = W + 1 + off
            sl = partial[2 * t:2 * t + 2, a:a + SHW]                                # (2, SHW)
            if kx == 0:
                sl = sl * mls
            elif kx == 2:
                sl = sl * mrs
            acc = acc + sl

        # residual:  x_thalf = x - conv_out
        xt = xc_ref[0] - (acc + b2_ref[...])           # (2, SHW)
        xt_ref[0] = xt

        # fused coil expansion:  S_c * x_thalf  (complex multiply, broadcast over coils)
        sr = sr_ref[0]                                  # (C, SHW)
        si = si_ref[0]
        xr_, xi_ = xt[0:1, :], xt[1:2, :]
        cr_ref[0] = sr * xr_ - si * xi_
        ci_ref[0] = sr * xi_ + si * xr_

    return kernel


def reg_coil_apply(x2p, sr_flat, si_flat, w1t, w2s, b1c, b2c, ml, mr, *, H, W, RS):
    B = x2p.shape[0]
    C = sr_flat.shape[1]
    SHW = RS * W
    n_s = H // RS

    xspec = lambda off: pl.BlockSpec((1, 2, SHW), lambda b, s, _o=off: (b, 0, s + _o))
    coil_spec = pl.BlockSpec((1, C, SHW), lambda b, s: (b, 0, s))
    full = lambda shape: pl.BlockSpec(shape, lambda b, s, _n=len(shape): (0,) * _n)

    return pl.pallas_call(
        _make_reg_coil_kernel(W),
        grid=(B, n_s),
        in_specs=[xspec(0), xspec(1), xspec(2),
                  coil_spec, coil_spec,
                  full(w1t.shape), full(w2s.shape), full(b1c.shape), full(b2c.shape),
                  full(ml.shape), full(mr.shape)],
        out_specs=(pl.BlockSpec((1, 2, SHW), lambda b, s: (b, 0, s)),
                   coil_spec, coil_spec),
        out_shape=(jax.ShapeDtypeStruct((B, 2, H * W), jnp.float32),
                   jax.ShapeDtypeStruct((B, C, H * W), jnp.float32),
                   jax.ShapeDtypeStruct((B, C, H * W), jnp.float32)),
        compiler_params=pltpu.CompilerParams(
            dimension_semantics=("parallel", "parallel"),
            vmem_limit_bytes=_vmem_limit_bytes()),
    )(x2p, x2p, x2p, sr_flat, si_flat, w1t, w2s, b1c, b2c, ml, mr)


# ----------------------------------------------------------------------------
# Kernel B: DC combine + update (row-tiled, coil-tiled reduction, sublane-dense)
#   x = x_thalf - lam * sum_c conj(S_c) * img_c + bias
# ----------------------------------------------------------------------------
def _dc_update_kernel(ir_ref, ii_ref, sr_ref, si_ref,    # (1, TC, RH, W) coil blocks
                      xt_ref, b_ref,                      # (1, 2, RH, W) image blocks
                      o_ref,                              # (1, 2, RH, W) output
                      gr_ref, gi_ref):                    # (RH, W) accumulators
    ct = pl.program_id(2)

    @pl.when(ct == 0)
    def _():
        gr_ref[...] = jnp.zeros_like(gr_ref)
        gi_ref[...] = jnp.zeros_like(gi_ref)

    sr, si = sr_ref[0], si_ref[0]                        # (TC, RH, W)
    ir, ii = ir_ref[0], ii_ref[0]
    gr_ref[...] += jnp.sum(sr * ir + si * ii, axis=0)    # Re(conj(S)*img), major-axis reduce
    gi_ref[...] += jnp.sum(sr * ii - si * ir, axis=0)    # Im(conj(S)*img)

    @pl.when(ct == pl.num_programs(2) - 1)
    def _():
        o_ref[0, 0] = xt_ref[0, 0] - LAM * gr_ref[...] + b_ref[0, 0]
        o_ref[0, 1] = xt_ref[0, 1] - LAM * gi_ref[...] + b_ref[0, 1]


def dc_update_apply(ir, ii, sr4, si4, xt4, bias4, *, RH, TC):
    B, C, H, W = sr4.shape
    n_r = H // RH
    n_ct = C // TC
    coil_spec = pl.BlockSpec((1, TC, RH, W), lambda b, r, ct: (b, ct, r, 0))
    img_spec = pl.BlockSpec((1, 2, RH, W), lambda b, r, ct: (b, 0, r, 0))
    return pl.pallas_call(
        _dc_update_kernel,
        grid=(B, n_r, n_ct),
        in_specs=[coil_spec, coil_spec, coil_spec, coil_spec, img_spec, img_spec],
        out_specs=img_spec,
        out_shape=jax.ShapeDtypeStruct((B, 2, H, W), jnp.float32),
        scratch_shapes=[pltpu.VMEM((RH, W), jnp.float32),
                        pltpu.VMEM((RH, W), jnp.float32)],
        compiler_params=pltpu.CompilerParams(
            dimension_semantics=("parallel", "parallel", "arbitrary"),
            vmem_limit_bytes=_vmem_limit_bytes()),
    )(ir, ii, sr4, si4, xt4, bias4)


# ----------------------------------------------------------------------------
# Parameters (deterministic, synthetic)
# ----------------------------------------------------------------------------
def init_params(key):
    k1, k2, k3, k4 = jax.random.split(key, 4)
    w1 = 0.1 * jax.random.normal(k1, (KS, KS, 2, F_HID), jnp.float32)
    b1 = 0.01 * jax.random.normal(k2, (F_HID,), jnp.float32)
    w2 = 0.1 * jax.random.normal(k3, (KS, KS, F_HID, 2), jnp.float32)
    b2 = 0.01 * jax.random.normal(k4, (2,), jnp.float32)
    return {"w1": w1, "b1": b1, "w2": w2, "b2": b2}


# ----------------------------------------------------------------------------
# MWDunet forward (forward_save_space semantics; shared_params=True)
# ----------------------------------------------------------------------------
def mwdunet_forward(img, smaps, mask, kspace, params, num_iter=NUM_ITER):
    B, C, H, W = smaps.shape
    HW = H * W
    RS = _pick_strip_rows(H, W)
    SHW = RS * W
    EXT = SHW + 2 * W
    RH = _pick_row_tile(H)
    TC = _pick_coil_tile(C, RH, W)

    sr4 = jnp.real(smaps).astype(jnp.float32)
    si4 = jnp.imag(smaps).astype(jnp.float32)
    sr_flat = sr4.reshape(B, C, HW)
    si_flat = si4.reshape(B, C, HW)
    maskf = mask.astype(jnp.float32)[:, None, :, :]                       # (B, 1, H, W)

    # y *= mask (as in the module).  IFFT linearity => the y-dependent part of the DC update is
    # iteration-invariant:  bias = lam * sum_c conj(S_c) * IFFT(y_c)   (hoisted out of the loop)
    y = kspace * maskf
    y_img = jnp.fft.ifft2(y, norm="ortho")
    bias = LAM * jnp.sum(jnp.conj(smaps) * y_img, axis=1)                 # (B, H, W) complex
    bias4 = jnp.stack([jnp.real(bias), jnp.imag(bias)], axis=1).astype(jnp.float32)

    # conv weights rearranged for the MXU formulation (row/col index = 2*tap + channel)
    w1t = jnp.transpose(params["w1"], (3, 0, 1, 2)).reshape(F_HID, 2 * KS * KS)
    w2s = jnp.transpose(params["w2"], (0, 1, 3, 2)).reshape(2 * KS * KS, F_HID)
    b1c = params["b1"].reshape(F_HID, 1)
    b2c = params["b2"].reshape(2, 1)

    # static column masks (zero padding across row boundaries for dx = -1 / +1 taps)
    col = jnp.arange(EXT, dtype=jnp.int32) % W
    ml = (col >= 1).astype(jnp.float32).reshape(1, EXT)
    mr = (col <= W - 2).astype(jnp.float32).reshape(1, EXT)

    x2 = jnp.stack([jnp.real(img), jnp.imag(img)], axis=1).astype(jnp.float32)   # (B, 2, H, W)

    for _ in range(num_iter):                                             # shared weights
        # ---- x_thalf = x - gradR(x); coil expansion S_c * x_thalf (fused Pallas kernel A) ----
        x2p = jnp.pad(x2.reshape(B, 2, HW), ((0, 0), (0, 0), (SHW, SHW)))
        xt, cr, ci = reg_coil_apply(x2p, sr_flat, si_flat, w1t, w2s, b1c, b2c, ml, mr,
                                    H=H, W=W, RS=RS)

        # ---- k-space consistency ----
        # TODO(synk): 2-D FFT/IFFT have no Pallas primitive; they stay in plain JAX glue.
        k = jnp.fft.fft2(jax.lax.complex(cr, ci).reshape(B, C, H, W), norm="ortho")
        res = jnp.fft.ifft2(maskf * k, norm="ortho")                      # IFFT(mask * A(x_thalf))
        # TODO(synk): feed `res` to kernel B via a complex<->(...,2) f32 bitcast view to drop the
        # real/imag split copies once lax.bitcast_convert_type complex support is guaranteed.
        ir = jnp.real(res).astype(jnp.float32)
        ii = jnp.imag(res).astype(jnp.float32)

        # ---- x = x_thalf - lam * A^H(residual) + bias  (Pallas kernel B) ----
        x2 = dc_update_apply(ir, ii, sr4, si4, xt.reshape(B, 2, H, W), bias4, RH=RH, TC=TC)

    # view_as_complex(x.squeeze(1).squeeze(1))
    return jax.lax.complex(x2[:, 0], x2[:, 1]).astype(jnp.complex64)


if __name__ == "__main__":
    key = jax.random.PRNGKey(0)
    B, C, H, W = 2, 4, 16, 16
    k0, k1, k2, k3, k4, k5, k6, k7 = jax.random.split(key, 8)

    random_sample_img = (jax.random.normal(k0, (B, H, W)) +
                         1j * jax.random.normal(k1, (B, H, W))).astype(jnp.complex64)
    sensemap = (jax.random.normal(k2, (B, C, H, W)) +
                1j * jax.random.normal(k3, (B, C, H, W))).astype(jnp.complex64)
    random_sample_mask = (jax.random.uniform(k4, (B, H, W)) > 0.5).astype(jnp.float32)
    full_sampling_kspace = (jax.random.normal(k5, (B, C, H, W)) +
                            1j * jax.random.normal(k6, (B, C, H, W))).astype(jnp.complex64)

    params = init_params(k7)

    fwd = jax.jit(functools.partial(mwdunet_forward, num_iter=NUM_ITER))
    out = fwd(random_sample_img, sensemap, random_sample_mask, full_sampling_kspace, params)
    out = jax.block_until_ready(out)

    assert out.shape == (B, H, W) and out.dtype == jnp.complex64
    assert bool(jnp.all(jnp.isfinite(jnp.real(out))) & jnp.all(jnp.isfinite(jnp.imag(out))))
    print("KERNEL_OK")
</pallas_src>

<mosaic_0001>
module attributes {stable_mosaic.version = 11 : i64} {
  func.func @kernel(%arg0: i32, %arg1: i32, %arg2: memref<1x2x256xf32, #tpu.memory_space<vmem>>, %arg3: memref<1x2x256xf32, #tpu.memory_space<vmem>>, %arg4: memref<1x2x256xf32, #tpu.memory_space<vmem>>, %arg5: memref<1x4x256xf32, #tpu.memory_space<vmem>>, %arg6: memref<1x4x256xf32, #tpu.memory_space<vmem>>, %arg7: memref<8x18xf32, #tpu.memory_space<vmem>>, %arg8: memref<18x8xf32, #tpu.memory_space<vmem>>, %arg9: memref<8x1xf32, #tpu.memory_space<vmem>>, %arg10: memref<2x1xf32, #tpu.memory_space<vmem>>, %arg11: memref<1x288xf32, #tpu.memory_space<vmem>>, %arg12: memref<1x288xf32, #tpu.memory_space<vmem>>, %arg13: memref<1x2x256xf32, #tpu.memory_space<vmem>>, %arg14: memref<1x4x256xf32, #tpu.memory_space<vmem>>, %arg15: memref<1x4x256xf32, #tpu.memory_space<vmem>>) attributes {dimension_semantics = [#tpu.dimension_semantics<parallel>, #tpu.dimension_semantics<parallel>], iteration_bounds = array<i64: 2, 1>, scalar_prefetch = 0 : i64, scratch_operands = 0 : i64, tpu.core_type = #tpu.core_type<tc>, window_params = [{transform_indices = @transform_0, window_bounds = array<i64: 1, 2, 256>}, {transform_indices = @transform_1, window_bounds = array<i64: 1, 2, 256>}, {transform_indices = @transform_2, window_bounds = array<i64: 1, 2, 256>}, {transform_indices = @transform_3, window_bounds = array<i64: 1, 4, 256>}, {transform_indices = @transform_4, window_bounds = array<i64: 1, 4, 256>}, {pipeline_mode = #tpu.pipeline_mode<synchronous>, transform_indices = @transform_5, window_bounds = array<i64: 8, 18>}, {pipeline_mode = #tpu.pipeline_mode<synchronous>, transform_indices = @transform_6, window_bounds = array<i64: 18, 8>}, {pipeline_mode = #tpu.pipeline_mode<synchronous>, transform_indices = @transform_7, window_bounds = array<i64: 8, 1>}, {pipeline_mode = #tpu.pipeline_mode<synchronous>, transform_indices = @transform_8, window_bounds = array<i64: 2, 1>}, {pipeline_mode = #tpu.pipeline_mode<synchronous>, transform_indices = @transform_9, window_bounds = array<i64: 1, 288>}, {pipeline_mode = #tpu.pipeline_mode<synchronous>, transform_indices = @transform_10, window_bounds = array<i64: 1, 288>}, {transform_indices = @transform_11, window_bounds = array<i64: 1, 2, 256>}, {transform_indices = @transform_12, window_bounds = array<i64: 1, 4, 256>}, {transform_indices = @transform_13, window_bounds = array<i64: 1, 4, 256>}]} {
    %c0 = arith.constant 0 : index
    %c0_0 = arith.constant 0 : index
    %c0_1 = arith.constant 0 : index
    %0 = vector.load %arg2[%c0, %c0_0, %c0_1] : memref<1x2x256xf32, #tpu.memory_space<vmem>>, vector<1x2x256xf32>
    %1 = vector.shape_cast %0 : vector<1x2x256xf32> to vector<2x256xf32>
    %c0_2 = arith.constant 0 : index
    %c0_3 = arith.constant 0 : index
    %c0_4 = arith.constant 0 : index
    %2 = vector.load %arg3[%c0_2, %c0_3, %c0_4] : memref<1x2x256xf32, #tpu.memory_space<vmem>>, vector<1x2x256xf32>
    %3 = vector.shape_cast %2 : vector<1x2x256xf32> to vector<2x256xf32>
    %c0_5 = arith.constant 0 : index
    %c0_6 = arith.constant 0 : index
    %c0_7 = arith.constant 0 : index
    %4 = vector.load %arg4[%c0_5, %c0_6, %c0_7] : memref<1x2x256xf32, #tpu.memory_space<vmem>>, vector<1x2x256xf32>
    %5 = vector.shape_cast %4 : vector<1x2x256xf32> to vector<2x256xf32>
    %6 = tpu.concatenate %1, %3, %5 in 1 : vector<2x256xf32>, vector<2x256xf32>, vector<2x256xf32> -> vector<2x768xf32>
    %c0_8 = arith.constant 0 : index
    %c0_9 = arith.constant 0 : index
    %7 = vector.load %arg11[%c0_8, %c0_9] : memref<1x288xf32, #tpu.memory_space<vmem>>, vector<1x288xf32>
    %c0_10 = arith.constant 0 : index
    %c0_11 = arith.constant 0 : index
    %8 = vector.load %arg12[%c0_10, %c0_11] : memref<1x288xf32, #tpu.memory_space<vmem>>, vector<1x288xf32>
    %9 = vector.extract_strided_slice %6 {offsets = [0, 223], sizes = [2, 288], strides = [1, 1]} : vector<2x768xf32> to vector<2x288xf32>
    %10 = vector.broadcast %7 : vector<1x288xf32> to vector<2x288xf32>
    %11 = arith.mulf %9, %10 : vector<2x288xf32>
    %12 = vector.extract_strided_slice %6 {offsets = [0, 224], sizes = [2, 288], strides = [1, 1]} : vector<2x768xf32> to vector<2x288xf32>
    %13 = vector.extract_strided_slice %6 {offsets = [0, 225], sizes = [2, 288], strides = [1, 1]} : vector<2x768xf32> to vector<2x288xf32>
    %14 = vector.broadcast %8 : vector<1x288xf32> to vector<2x288xf32>
    %15 = arith.mulf %13, %14 : vector<2x288xf32>
    %16 = vector.extract_strided_slice %6 {offsets = [0, 239], sizes = [2, 288], strides = [1, 1]} : vector<2x768xf32> to vector<2x288xf32>
    %17 = vector.broadcast %7 : vector<1x288xf32> to vector<2x288xf32>
    %18 = arith.mulf %16, %17 : vector<2x288xf32>
    %19 = vector.extract_strided_slice %6 {offsets = [0, 240], sizes = [2, 288], strides = [1, 1]} : vector<2x768xf32> to vector<2x288xf32>
    %20 = vector.extract_strided_slice %6 {offsets = [0, 241], sizes = [2, 288], strides = [1, 1]} : vector<2x768xf32> to vector<2x288xf32>
    %21 = vector.broadcast %8 : vector<1x288xf32> to vector<2x288xf32>
    %22 = arith.mulf %20, %21 : vector<2x288xf32>
    %23 = vector.extract_strided_slice %6 {offsets = [0, 255], sizes = [2, 288], strides = [1, 1]} : vector<2x768xf32> to vector<2x288xf32>
    %24 = vector.broadcast %7 : vector<1x288xf32> to vector<2x288xf32>
    %25 = arith.mulf %23, %24 : vector<2x288xf32>
    %26 = vector.extract_strided_slice %6 {offsets = [0, 256], sizes = [2, 288], strides = [1, 1]} : vector<2x768xf32> to vector<2x288xf32>
    %27 = vector.extract_strided_slice %6 {offsets = [0, 257], sizes = [2, 288], strides = [1, 1]} : vector<2x768xf32> to vector<2x288xf32>
    %28 = vector.broadcast %8 : vector<1x288xf32> to vector<2x288xf32>
    %29 = arith.mulf %27, %28 : vector<2x288xf32>
    %30 = tpu.concatenate %11, %12, %15, %18, %19, %22, %25, %26, %29 in 0 : vector<2x288xf32>, vector<2x288xf32>, vector<2x288xf32>, vector<2x288xf32>, vector<2x288xf32>, vector<2x288xf32>, vector<2x288xf32>, vector<2x288xf32>, vector<2x288xf32> -> vector<18x288xf32>
    %c0_12 = arith.constant 0 : index
    %c0_13 = arith.constant 0 : index
    %31 = vector.load %arg7[%c0_12, %c0_13] : memref<8x18xf32, #tpu.memory_space<vmem>>, vector<8x18xf32>
    %cst = arith.constant dense<0.000000e+00> : vector<8x288xf32>
    %32 = tpu.matmul %31, %30, %cst {dimension_numbers = #tpu.dot_dimension_numbers<[1], [0], [0], [1], [0, 0, 1, 1], [], []>} : vector<8x18xf32>, vector<18x288xf32>, vector<8x288xf32> -> vector<8x288xf32>
    %c0_14 = arith.constant 0 : index
    %c0_15 = arith.constant 0 : index
    %33 = vector.load %arg9[%c0_14, %c0_15] : memref<8x1xf32, #tpu.memory_space<vmem>>, vector<8x1xf32>
    %34 = vector.broadcast %33 : vector<8x1xf32> to vector<8x288xf32>
    %35 = arith.addf %32, %34 : vector<8x288xf32>
    %cst_16 = arith.constant 0.000000e+00 : f32
    %36 = vector.broadcast %cst_16 : f32 to vector<8x288xf32>
    %37 = arith.maximumf %35, %36 : vector<8x288xf32>
    %38 = tpu.iota {dimensions = array<i32: 1>} : vector<1x288xi32>
    %c0_i32 = arith.constant 0 : i32
    %39 = arith.cmpi ne, %arg1, %c0_i32 : i32
    %c16_i32 = arith.constant 16 : i32
    %40 = vector.broadcast %c16_i32 : i32 to vector<1x288xi32>
    %41 = arith.cmpi sge, %38, %40 : vector<1x288xi32>
    %42 = vector.broadcast %39 : i1 to vector<1x288xi1>
    %43 = arith.ori %42, %41 : vector<1x288xi1>
    %c0_i32_17 = arith.constant 0 : i32
    %44 = arith.cmpi ne, %arg1, %c0_i32_17 : i32
    %c272_i32 = arith.constant 272 : i32
    %45 = vector.broadcast %c272_i32 : i32 to vector<1x288xi32>
    %46 = arith.cmpi slt, %38, %45 : vector<1x288xi32>
    %47 = vector.broadcast %44 : i1 to vector<1x288xi1>
    %48 = arith.ori %47, %46 : vector<1x288xi1>
    %49 = arith.andi %43, %48 : vector<1x288xi1>
    %cst_18 = arith.constant 0.000000e+00 : f32
    %50 = vector.shape_cast %49 : vector<1x288xi1> to vector<1x288xi1>
    %51 = vector.broadcast %50 : vector<1x288xi1> to vector<8x288xi1>
    %52 = vector.broadcast %cst_18 : f32 to vector<8x288xf32>
    %53 = arith.select %51, %37, %52 : vector<8x288xi1>, vector<8x288xf32>
    %c0_19 = arith.constant 0 : index
    %c0_20 = arith.constant 0 : index
    %54 = vector.load %arg8[%c0_19, %c0_20] : memref<18x8xf32, #tpu.memory_space<vmem>>, vector<18x8xf32>
    %cst_21 = arith.constant dense<0.000000e+00> : vector<18x288xf32>
    %55 = tpu.matmul %54, %53, %cst_21 {dimension_numbers = #tpu.dot_dimension_numbers<[1], [0], [0], [1], [0, 0, 1, 1], [], []>} : vector<18x8xf32>, vector<8x288xf32>, vector<18x288xf32> -> vector<18x288xf32>
    %cst_22 = arith.constant 0.000000e+00 : f32
    %56 = vector.broadcast %cst_22 : f32 to vector<18x1xf32>
    %57 = tpu.concatenate %56, %55, %56 in 1 : vector<18x1xf32>, vector<18x288xf32>, vector<18x1xf32> -> vector<18x290xf32>
    %58 = vector.extract_strided_slice %7 {offsets = [0, 0], sizes = [1, 256], strides = [1, 1]} : vector<1x288xf32> to vector<1x256xf32>
    %59 = vector.extract_strided_slice %8 {offsets = [0, 0], sizes = [1, 256], strides = [1, 1]} : vector<1x288xf32> to vector<1x256xf32>
    %cst_23 = arith.constant 0.000000e+00 : f32
    %60 = vector.broadcast %cst_23 : f32 to vector<2x256xf32>
    %61 = vector.extract_strided_slice %57 {offsets = [0, 0], sizes = [2, 256], strides = [1, 1]} : vector<18x290xf32> to vector<2x256xf32>
    %62 = vector.broadcast %58 : vector<1x256xf32> to vector<2x256xf32>
    %63 = arith.mulf %61, %62 : vector<2x256xf32>
    %64 = arith.addf %60, %63 : vector<2x256xf32>
    %65 = vector.extract_strided_slice %57 {offsets = [2, 1], sizes = [2, 256], strides = [1, 1]} : vector<18x290xf32> to vector<2x256xf32>
    %66 = arith.addf %64, %65 : vector<2x256xf32>
    %67 = vector.extract_strided_slice %57 {offsets = [4, 2], sizes = [2, 256], strides = [1, 1]} : vector<18x290xf32> to vector<2x256xf32>
    %68 = vector.broadcast %59 : vector<1x256xf32> to vector<2x256xf32>
    %69 = arith.mulf %67, %68 : vector<2x256xf32>
    %70 = arith.addf %66, %69 : vector<2x256xf32>
    %71 = vector.extract_strided_slice %57 {offsets = [6, 16], sizes = [2, 256], strides = [1, 1]} : vector<18x290xf32> to vector<2x256xf32>
    %72 = vector.broadcast %58 : vector<1x256xf32> to vector<2x256xf32>
    %73 = arith.mulf %71, %72 : vector<2x256xf32>
    %74 = arith.addf %70, %73 : vector<2x256xf32>
    %75 = vector.extract_strided_slice %57 {offsets = [8, 17], sizes = [2, 256], strides = [1, 1]} : vector<18x290xf32> to vector<2x256xf32>
    %76 = arith.addf %74, %75 : vector<2x256xf32>
    %77 = vector.extract_strided_slice %57 {offsets = [10, 18], sizes = [2, 256], strides = [1, 1]} : vector<18x290xf32> to vector<2x256xf32>
    %78 = vector.broadcast %59 : vector<1x256xf32> to vector<2x256xf32>
    %79 = arith.mulf %77, %78 : vector<2x256xf32>
    %80 = arith.addf %76, %79 : vector<2x256xf32>
    %81 = vector.extract_strided_slice %57 {offsets = [12, 32], sizes = [2, 256], strides = [1, 1]} : vector<18x290xf32> to vector<2x256xf32>
    %82 = vector.broadcast %58 : vector<1x256xf32> to vector<2x256xf32>
    %83 = arith.mulf %81, %82 : vector<2x256xf32>
    %84 = arith.addf %80, %83 : vector<2x256xf32>
    %85 = vector.extract_strided_slice %57 {offsets = [14, 33], sizes = [2, 256], strides = [1, 1]} : vector<18x290xf32> to vector<2x256xf32>
    %86 = arith.addf %84, %85 : vector<2x256xf32>
    %87 = vector.extract_strided_slice %57 {offsets = [16, 34], sizes = [2, 256], strides = [1, 1]} : vector<18x290xf32> to vector<2x256xf32>
    %88 = vector.broadcast %59 : vector<1x256xf32> to vector<2x256xf32>
    %89 = arith.mulf %87, %88 : vector<2x256xf32>
    %90 = arith.addf %86, %89 : vector<2x256xf32>
    %c0_24 = arith.constant 0 : index
    %c0_25 = arith.constant 0 : index
    %c0_26 = arith.constant 0 : index
    %91 = vector.load %arg3[%c0_24, %c0_25, %c0_26] : memref<1x2x256xf32, #tpu.memory_space<vmem>>, vector<1x2x256xf32>
    %92 = vector.shape_cast %91 : vector<1x2x256xf32> to vector<2x256xf32>
    %c0_27 = arith.constant 0 : index
    %c0_28 = arith.constant 0 : index
    %93 = vector.load %arg10[%c0_27, %c0_28] : memref<2x1xf32, #tpu.memory_space<vmem>>, vector<2x1xf32>
    %94 = vector.broadcast %93 : vector<2x1xf32> to vector<2x256xf32>
    %95 = arith.addf %90, %94 : vector<2x256xf32>
    %96 = arith.subf %92, %95 : vector<2x256xf32>
    %c0_29 = arith.constant 0 : index
    %c0_30 = arith.constant 0 : index
    %c0_31 = arith.constant 0 : index
    %97 = vector.load %arg13[%c0_29, %c0_30, %c0_31] : memref<1x2x256xf32, #tpu.memory_space<vmem>>, vector<1x2x256xf32>
    %98 = vector.shape_cast %97 : vector<1x2x256xf32> to vector<2x256xf32>
    %99 = vector.shape_cast %96 : vector<2x256xf32> to vector<1x2x256xf32>
    tpu.vector_store %arg13[%c0_29, %c0_30, %c0_31], %99 {strides = array<i32>} : memref<1x2x256xf32, #tpu.memory_space<vmem>>, vector<1x2x256xf32>,
    %c0_32 = arith.constant 0 : index
    %c0_33 = arith.constant 0 : index
    %c0_34 = arith.constant 0 : index
    %100 = vector.load %arg5[%c0_32, %c0_33, %c0_34] : memref<1x4x256xf32, #tpu.memory_space<vmem>>, vector<1x4x256xf32>
    %101 = vector.shape_cast %100 : vector<1x4x256xf32> to vector<4x256xf32>
    %c0_35 = arith.constant 0 : index
    %c0_36 = arith.constant 0 : index
    %c0_37 = arith.constant 0 : index
    %102 = vector.load %arg6[%c0_35, %c0_36, %c0_37] : memref<1x4x256xf32, #tpu.memory_space<vmem>>, vector<1x4x256xf32>
    %103 = vector.shape_cast %102 : vector<1x4x256xf32> to vector<4x256xf32>
    %104 = vector.extract_strided_slice %96 {offsets = [0, 0], sizes = [1, 256], strides = [1, 1]} : vector<2x256xf32> to vector<1x256xf32>
    %105 = vector.extract_strided_slice %96 {offsets = [1, 0], sizes = [1, 256], strides = [1, 1]} : vector<2x256xf32> to vector<1x256xf32>
    %106 = vector.broadcast %104 : vector<1x256xf32> to vector<4x256xf32>
    %107 = arith.mulf %101, %106 : vector<4x256xf32>
    %108 = vector.broadcast %105 : vector<1x256xf32> to vector<4x256xf32>
    %109 = arith.mulf %103, %108 : vector<4x256xf32>
    %110 = arith.subf %107, %109 : vector<4x256xf32>
    %c0_38 = arith.constant 0 : index
    %c0_39 = arith.constant 0 : index
    %c0_40 = arith.constant 0 : index
    %111 = vector.load %arg14[%c0_38, %c0_39, %c0_40] : memref<1x4x256xf32, #tpu.memory_space<vmem>>, vector<1x4x256xf32>
    %112 = vector.shape_cast %111 : vector<1x4x256xf32> to vector<4x256xf32>
    %113 = vector.shape_cast %110 : vector<4x256xf32> to vector<1x4x256xf32>
    tpu.vector_store %arg14[%c0_38, %c0_39, %c0_40], %113 {strides = array<i32>} : memref<1x4x256xf32, #tpu.memory_space<vmem>>, vector<1x4x256xf32>,
    %114 = vector.broadcast %105 : vector<1x256xf32> to vector<4x256xf32>
    %115 = arith.mulf %101, %114 : vector<4x256xf32>
    %116 = vector.broadcast %104 : vector<1x256xf32> to vector<4x256xf32>
    %117 = arith.mulf %103, %116 : vector<4x256xf32>
    %118 = arith.addf %115, %117 : vector<4x256xf32>
    %c0_41 = arith.constant 0 : index
    %c0_42 = arith.constant 0 : index
    %c0_43 = arith.constant 0 : index
    %119 = vector.load %arg15[%c0_41, %c0_42, %c0_43] : memref<1x4x256xf32, #tpu.memory_space<vmem>>, vector<1x4x256xf32>
    %120 = vector.shape_cast %119 : vector<1x4x256xf32> to vector<4x256xf32>
    %121 = vector.shape_cast %118 : vector<4x256xf32> to vector<1x4x256xf32>
    tpu.vector_store %arg15[%c0_41, %c0_42, %c0_43], %121 {strides = array<i32>} : memref<1x4x256xf32, #tpu.memory_space<vmem>>, vector<1x4x256xf32>,
    return
  }
  func.func @transform_0(%arg0: i32, %arg1: i32) -> (i32, i32, i32) {
    %c0_i32 = arith.constant 0 : i32
    %0 = arith.addi %arg1, %c0_i32 : i32
    %c0_i32_0 = arith.constant 0 : i32
    %c0_i32_1 = arith.constant 0 : i32
    return %arg0, %c0_i32_0, %0 : i32, i32, i32
  }
  func.func @transform_1(%arg0: i32, %arg1: i32) -> (i32, i32, i32) {
    %c1_i32 = arith.constant 1 : i32
    %0 = arith.addi %arg1, %c1_i32 : i32
    %c0_i32 = arith.constant 0 : i32
    %c0_i32_0 = arith.constant 0 : i32
    return %arg0, %c0_i32, %0 : i32, i32, i32
  }
  func.func @transform_2(%arg0: i32, %arg1: i32) -> (i32, i32, i32) {
    %c2_i32 = arith.constant 2 : i32
    %0 = arith.addi %arg1, %c2_i32 : i32
    %c0_i32 = arith.constant 0 : i32
    %c0_i32_0 = arith.constant 0 : i32
    return %arg0, %c0_i32, %0 : i32, i32, i32
  }
  func.func @transform_3(%arg0: i32, %arg1: i32) -> (i32, i32, i32) {
    %c0_i32 = arith.constant 0 : i32
    %c0_i32_0 = arith.constant 0 : i32
    return %arg0, %c0_i32, %arg1 : i32, i32, i32
  }
  func.func @transform_4(%arg0: i32, %arg1: i32) -> (i32, i32, i32) {
    %c0_i32 = arith.constant 0 : i32
    %c0_i32_0 = arith.constant 0 : i32
    return %arg0, %c0_i32, %arg1 : i32, i32, i32
  }
  func.func @transform_5(%arg0: i32, %arg1: i32) -> (i32, i32) {
    %c0_i32 = arith.constant 0 : i32
    %c0_i32_0 = arith.constant 0 : i32
    %c0_i32_1 = arith.constant 0 : i32
    return %c0_i32, %c0_i32_0 : i32, i32
  }
  func.func @transform_6(%arg0: i32, %arg1: i32) -> (i32, i32) {
    %c0_i32 = arith.constant 0 : i32
    %c0_i32_0 = arith.constant 0 : i32
    %c0_i32_1 = arith.constant 0 : i32
    return %c0_i32, %c0_i32_0 : i32, i32
  }
  func.func @transform_7(%arg0: i32, %arg1: i32) -> (i32, i32) {
    %c0_i32 = arith.constant 0 : i32
    %c0_i32_0 = arith.constant 0 : i32
    %c0_i32_1 = arith.constant 0 : i32
    return %c0_i32, %c0_i32_0 : i32, i32
  }
  func.func @transform_8(%arg0: i32, %arg1: i32) -> (i32, i32) {
    %c0_i32 = arith.constant 0 : i32
    %c0_i32_0 = arith.constant 0 : i32
    %c0_i32_1 = arith.constant 0 : i32
    return %c0_i32, %c0_i32_0 : i32, i32
  }
  func.func @transform_9(%arg0: i32, %arg1: i32) -> (i32, i32) {
    %c0_i32 = arith.constant 0 : i32
    %c0_i32_0 = arith.constant 0 : i32
    %c0_i32_1 = arith.constant 0 : i32
    return %c0_i32, %c0_i32_0 : i32, i32
  }
  func.func @transform_10(%arg0: i32, %arg1: i32) -> (i32, i32) {
    %c0_i32 = arith.constant 0 : i32
    %c0_i32_0 = arith.constant 0 : i32
    %c0_i32_1 = arith.constant 0 : i32
    return %c0_i32, %c0_i32_0 : i32, i32
  }
  func.func @transform_11(%arg0: i32, %arg1: i32) -> (i32, i32, i32) {
    %c0_i32 = arith.constant 0 : i32
    %c0_i32_0 = arith.constant 0 : i32
    return %arg0, %c0_i32, %arg1 : i32, i32, i32
  }
  func.func @transform_12(%arg0: i32, %arg1: i32) -> (i32, i32, i32) {
    %c0_i32 = arith.constant 0 : i32
    %c0_i32_0 = arith.constant 0 : i32
    return %arg0, %c0_i32, %arg1 : i32, i32, i32
  }
  func.func @transform_13(%arg0: i32, %arg1: i32) -> (i32, i32, i32) {
    %c0_i32 = arith.constant 0 : i32
    %c0_i32_0 = arith.constant 0 : i32
    return %arg0, %c0_i32, %arg1 : i32, i32, i32
  }
}

module attributes {stable_mosaic.version = 11 : i64} {
  func.func @_dc_update_kernel(%arg0: i32, %arg1: i32, %arg2: i32, %arg3: memref<1x4x16x16xf32, #tpu.memory_space<vmem>>, %arg4: memref<1x4x16x16xf32, #tpu.memory_space<vmem>>, %arg5: memref<1x4x16x16xf32, #tpu.memory_space<vmem>>, %arg6: memref<1x4x16x16xf32, #tpu.memory_space<vmem>>, %arg7: memref<1x2x16x16xf32, #tpu.memory_space<vmem>>, %arg8: memref<1x2x16x16xf32, #tpu.memory_space<vmem>>, %arg9: memref<1x2x16x16xf32, #tpu.memory_space<vmem>>, %arg10: memref<16x16xf32, #tpu.memory_space<vmem>>, %arg11: memref<16x16xf32, #tpu.memory_space<vmem>>) attributes {dimension_semantics = [#tpu.dimension_semantics<parallel>, #tpu.dimension_semantics<parallel>, #tpu.dimension_semantics<arbitrary>], iteration_bounds = array<i64: 2, 1, 1>, scalar_prefetch = 0 : i64, scratch_operands = 2 : i64, tpu.core_type = #tpu.core_type<tc>, window_params = [{transform_indices = @transform_0, window_bounds = array<i64: 1, 4, 16, 16>}, {transform_indices = @transform_1, window_bounds = array<i64: 1, 4, 16, 16>}, {transform_indices = @transform_2, window_bounds = array<i64: 1, 4, 16, 16>}, {transform_indices = @transform_3, window_bounds = array<i64: 1, 4, 16, 16>}, {transform_indices = @transform_4, window_bounds = array<i64: 1, 2, 16, 16>}, {transform_indices = @transform_5, window_bounds = array<i64: 1, 2, 16, 16>}, {transform_indices = @transform_6, window_bounds = array<i64: 1, 2, 16, 16>}]} {
    %c0_i32 = arith.constant 0 : i32
    %0 = arith.cmpi eq, %arg2, %c0_i32 : i32
    %1 = arith.extui %0 : i1 to i32
    %c0_i32_0 = arith.constant 0 : i32
    %2 = arith.cmpi ne, %1, %c0_i32_0 : i32
    scf.if %2 {
      %cst_27 = arith.constant 0.000000e+00 : f32
      %28 = vector.broadcast %cst_27 : f32 to vector<16x16xf32>
      %c0_28 = arith.constant 0 : index
      %c0_29 = arith.constant 0 : index
      %29 = vector.load %arg10[%c0_28, %c0_29] : memref<16x16xf32, #tpu.memory_space<vmem>>, vector<16x16xf32>
      tpu.vector_store %arg10[%c0_28, %c0_29], %28 {strides = array<i32>} : memref<16x16xf32, #tpu.memory_space<vmem>>, vector<16x16xf32>,
      %cst_30 = arith.constant 0.000000e+00 : f32
      %30 = vector.broadcast %cst_30 : f32 to vector<16x16xf32>
      %c0_31 = arith.constant 0 : index
      %c0_32 = arith.constant 0 : index
      %31 = vector.load %arg11[%c0_31, %c0_32] : memref<16x16xf32, #tpu.memory_space<vmem>>, vector<16x16xf32>
      tpu.vector_store %arg11[%c0_31, %c0_32], %30 {strides = array<i32>} : memref<16x16xf32, #tpu.memory_space<vmem>>, vector<16x16xf32>,
    } else {
    }
    %c0 = arith.constant 0 : index
    %c0_1 = arith.constant 0 : index
    %c0_2 = arith.constant 0 : index
    %c0_3 = arith.constant 0 : index
    %3 = vector.load %arg5[%c0, %c0_1, %c0_2, %c0_3] : memref<1x4x16x16xf32, #tpu.memory_space<vmem>>, vector<1x4x16x16xf32>
    %4 = vector.shape_cast %3 : vector<1x4x16x16xf32> to vector<4x16x16xf32>
    %c0_4 = arith.constant 0 : index
    %c0_5 = arith.constant 0 : index
    %c0_6 = arith.constant 0 : index
    %c0_7 = arith.constant 0 : index
    %5 = vector.load %arg6[%c0_4, %c0_5, %c0_6, %c0_7] : memref<1x4x16x16xf32, #tpu.memory_space<vmem>>, vector<1x4x16x16xf32>
    %6 = vector.shape_cast %5 : vector<1x4x16x16xf32> to vector<4x16x16xf32>
    %c0_8 = arith.constant 0 : index
    %c0_9 = arith.constant 0 : index
    %c0_10 = arith.constant 0 : index
    %c0_11 = arith.constant 0 : index
    %7 = vector.load %arg3[%c0_8, %c0_9, %c0_10, %c0_11] : memref<1x4x16x16xf32, #tpu.memory_space<vmem>>, vector<1x4x16x16xf32>
    %8 = vector.shape_cast %7 : vector<1x4x16x16xf32> to vector<4x16x16xf32>
    %c0_12 = arith.constant 0 : index
    %c0_13 = arith.constant 0 : index
    %c0_14 = arith.constant 0 : index
    %c0_15 = arith.constant 0 : index
    %9 = vector.load %arg4[%c0_12, %c0_13, %c0_14, %c0_15] : memref<1x4x16x16xf32, #tpu.memory_space<vmem>>, vector<1x4x16x16xf32>
    %10 = vector.shape_cast %9 : vector<1x4x16x16xf32> to vector<4x16x16xf32>
    %c0_16 = arith.constant 0 : index
    %c0_17 = arith.constant 0 : index
    %11 = vector.load %arg10[%c0_16, %c0_17] : memref<16x16xf32, #tpu.memory_space<vmem>>, vector<16x16xf32>
    %12 = arith.mulf %4, %8 : vector<4x16x16xf32>
    %13 = arith.mulf %6, %10 : vector<4x16x16xf32>
    %14 = arith.addf %12, %13 : vector<4x16x16xf32>
    %cst = arith.constant dense<0.000000e+00> : vector<16x16xf32>
    %15 = vector.multi_reduction <add>, %14, %cst [0] : vector<4x16x16xf32> to vector<16x16xf32>
    %16 = arith.addf %11, %15 : vector<16x16xf32>
    %c0_18 = arith.constant 0 : index
    %c0_19 = arith.constant 0 : index
    %17 = vector.load %arg10[%c0_18, %c0_19] : memref<16x16xf32, #tpu.memory_space<vmem>>, vector<16x16xf32>
    tpu.vector_store %arg10[%c0_18, %c0_19], %16 {strides = array<i32>} : memref<16x16xf32, #tpu.memory_space<vmem>>, vector<16x16xf32>,
    %c0_20 = arith.constant 0 : index
    %c0_21 = arith.constant 0 : index
    %18 = vector.load %arg11[%c0_20, %c0_21] : memref<16x16xf32, #tpu.memory_space<vmem>>, vector<16x16xf32>
    %19 = arith.mulf %4, %10 : vector<4x16x16xf32>
    %20 = arith.mulf %6, %8 : vector<4x16x16xf32>
    %21 = arith.subf %19, %20 : vector<4x16x16xf32>
    %cst_22 = arith.constant dense<0.000000e+00> : vector<16x16xf32>
    %22 = vector.multi_reduction <add>, %21, %cst_22 [0] : vector<4x16x16xf32> to vector<16x16xf32>
    %23 = arith.addf %18, %22 : vector<16x16xf32>
    %c0_23 = arith.constant 0 : index
    %c0_24 = arith.constant 0 : index
    %24 = vector.load %arg11[%c0_23, %c0_24] : memref<16x16xf32, #tpu.memory_space<vmem>>, vector<16x16xf32>
    tpu.vector_store %arg11[%c0_23, %c0_24], %23 {strides = array<i32>} : memref<16x16xf32, #tpu.memory_space<vmem>>, vector<16x16xf32>,
    %c0_i32_25 = arith.constant 0 : i32
    %25 = arith.cmpi eq, %arg2, %c0_i32_25 : i32
    %26 = arith.extui %25 : i1 to i32
    %c0_i32_26 = arith.constant 0 : i32
    %27 = arith.cmpi ne, %26, %c0_i32_26 : i32
    scf.if %27 {
      %c0_27 = arith.constant 0 : index
      %c0_28 = arith.constant 0 : index
      %c0_29 = arith.constant 0 : index
      %c0_30 = arith.constant 0 : index
      %28 = vector.load %arg7[%c0_27, %c0_28, %c0_29, %c0_30] : memref<1x2x16x16xf32, #tpu.memory_space<vmem>>, vector<1x1x16x16xf32>
      %29 = vector.shape_cast %28 : vector<1x1x16x16xf32> to vector<16x16xf32>
      %c0_31 = arith.constant 0 : index
      %c0_32 = arith.constant 0 : index
      %30 = vector.load %arg10[%c0_31, %c0_32] : memref<16x16xf32, #tpu.memory_space<vmem>>, vector<16x16xf32>
      %cst_33 = arith.constant 5.000000e-01 : f32
      %31 = vector.broadcast %cst_33 : f32 to vector<16x16xf32>
      %32 = arith.mulf %31, %30 : vector<16x16xf32>
      %33 = arith.subf %29, %32 : vector<16x16xf32>
      %c0_34 = arith.constant 0 : index
      %c0_35 = arith.constant 0 : index
      %c0_36 = arith.constant 0 : index
      %c0_37 = arith.constant 0 : index
      %34 = vector.load %arg8[%c0_34, %c0_35, %c0_36, %c0_37] : memref<1x2x16x16xf32, #tpu.memory_space<vmem>>, vector<1x1x16x16xf32>
      %35 = vector.shape_cast %34 : vector<1x1x16x16xf32> to vector<16x16xf32>
      %36 = arith.addf %33, %35 : vector<16x16xf32>
      %c0_38 = arith.constant 0 : index
      %c0_39 = arith.constant 0 : index
      %c0_40 = arith.constant 0 : index
      %c0_41 = arith.constant 0 : index
      %37 = vector.load %arg9[%c0_38, %c0_39, %c0_40, %c0_41] : memref<1x2x16x16xf32, #tpu.memory_space<vmem>>, vector<1x1x16x16xf32>
      %38 = vector.shape_cast %37 : vector<1x1x16x16xf32> to vector<16x16xf32>
      %39 = vector.shape_cast %36 : vector<16x16xf32> to vector<1x1x16x16xf32>
      tpu.vector_store %arg9[%c0_38, %c0_39, %c0_40, %c0_41], %39 {strides = array<i32>} : memref<1x2x16x16xf32, #tpu.memory_space<vmem>>, vector<1x1x16x16xf32>,
      %c0_42 = arith.constant 0 : index
      %c1 = arith.constant 1 : index
      %c0_43 = arith.constant 0 : index
      %c0_44 = arith.constant 0 : index
      %40 = vector.load %arg7[%c0_42, %c1, %c0_43, %c0_44] : memref<1x2x16x16xf32, #tpu.memory_space<vmem>>, vector<1x1x16x16xf32>
      %41 = vector.shape_cast %40 : vector<1x1x16x16xf32> to vector<16x16xf32>
      %c0_45 = arith.constant 0 : index
      %c0_46 = arith.constant 0 : index
      %42 = vector.load %arg11[%c0_45, %c0_46] : memref<16x16xf32, #tpu.memory_space<vmem>>, vector<16x16xf32>
      %cst_47 = arith.constant 5.000000e-01 : f32
      %43 = vector.broadcast %cst_47 : f32 to vector<16x16xf32>
      %44 = arith.mulf %43, %42 : vector<16x16xf32>
      %45 = arith.subf %41, %44 : vector<16x16xf32>
      %c0_48 = arith.constant 0 : index
      %c1_49 = arith.constant 1 : index
      %c0_50 = arith.constant 0 : index
      %c0_51 = arith.constant 0 : index
      %46 = vector.load %arg8[%c0_48, %c1_49, %c0_50, %c0_51] : memref<1x2x16x16xf32, #tpu.memory_space<vmem>>, vector<1x1x16x16xf32>
      %47 = vector.shape_cast %46 : vector<1x1x16x16xf32> to vector<16x16xf32>
      %48 = arith.addf %45, %47 : vector<16x16xf32>
      %c0_52 = arith.constant 0 : index
      %c1_53 = arith.constant 1 : index
      %c0_54 = arith.constant 0 : index
      %c0_55 = arith.constant 0 : index
      %49 = vector.load %arg9[%c0_52, %c1_53, %c0_54, %c0_55] : memref<1x2x16x16xf32, #tpu.memory_space<vmem>>, vector<1x1x16x16xf32>
      %50 = vector.shape_cast %49 : vector<1x1x16x16xf32> to vector<16x16xf32>
      %51 = vector.shape_cast %48 : vector<16x16xf32> to vector<1x1x16x16xf32>
      tpu.vector_store %arg9[%c0_52, %c1_53, %c0_54, %c0_55], %51 {strides = array<i32>} : memref<1x2x16x16xf32, #tpu.memory_space<vmem>>, vector<1x1x16x16xf32>,
    } else {
    }
    return
  }
  func.func @transform_0(%arg0: i32, %arg1: i32, %arg2: i32) -> (i32, i32, i32, i32) {
    %c0_i32 = arith.constant 0 : i32
    %c0_i32_0 = arith.constant 0 : i32
    return %arg0, %arg2, %arg1, %c0_i32 : i32, i32, i32, i32
  }
  func.func @transform_1(%arg0: i32, %arg1: i32, %arg2: i32) -> (i32, i32, i32, i32) {
    %c0_i32 = arith.constant 0 : i32
    %c0_i32_0 = arith.constant 0 : i32
    return %arg0, %arg2, %arg1, %c0_i32 : i32, i32, i32, i32
  }
  func.func @transform_2(%arg0: i32, %arg1: i32, %arg2: i32) -> (i32, i32, i32, i32) {
    %c0_i32 = arith.constant 0 : i32
    %c0_i32_0 = arith.constant 0 : i32
    return %arg0, %arg2, %arg1, %c0_i32 : i32, i32, i32, i32
  }
  func.func @transform_3(%arg0: i32, %arg1: i32, %arg2: i32) -> (i32, i32, i32, i32) {
    %c0_i32 = arith.constant 0 : i32
    %c0_i32_0 = arith.constant 0 : i32
    return %arg0, %arg2, %arg1, %c0_i32 : i32, i32, i32, i32
  }
  func.func @transform_4(%arg0: i32, %arg1: i32, %arg2: i32) -> (i32, i32, i32, i32) {
    %c0_i32 = arith.constant 0 : i32
    %c0_i32_0 = arith.constant 0 : i32
    %c0_i32_1 = arith.constant 0 : i32
    return %arg0, %c0_i32, %arg1, %c0_i32_0 : i32, i32, i32, i32
  }
  func.func @transform_5(%arg0: i32, %arg1: i32, %arg2: i32) -> (i32, i32, i32, i32) {
    %c0_i32 = arith.constant 0 : i32
    %c0_i32_0 = arith.constant 0 : i32
    %c0_i32_1 = arith.constant 0 : i32
    return %arg0, %c0_i32, %arg1, %c0_i32_0 : i32, i32, i32, i32
  }
  func.func @transform_6(%arg0: i32, %arg1: i32, %arg2: i32) -> (i32, i32, i32, i32) {
    %c0_i32 = arith.constant 0 : i32
    %c0_i32_0 = arith.constant 0 : i32
    %c0_i32_1 = arith.constant 0 : i32
    return %arg0, %c0_i32, %arg1, %c0_i32_0 : i32, i32, i32, i32
  }
}

</mosaic_0001>

<llo_original>
// kernel: custom-call.5
$region0: #{custom-call.5}
  %s0 = inlined_call_operand.hbm [shape: c64[2,4,16,16], index: 0, kind: input, shape index: {}]
  %s1 = inlined_call_operand.vmem [shape: f32[2,4,16,16], index: 1, kind: output, shape index: {}]
  %s2 = scalar_lea.hbm %s0, 2048
  $region1: #{custom-call.5} parent=0
    #allocation0 [shape = 's32[1]{0}', space=sflag, size = 0x4, scoped, tag = 'scoped memory for custom-call.5']
    %3 = vsyncpa [#allocation0], 0
    %s4 = sshll.u32 %s1, 4
    %s5 = int_to_ptr.vmem [resolvable:$true] %s4
    %7 = dma.hbm_to_vmem [thread:$0]  %s2, 2048, %s5, [#allocation0]
    %8 = dma.done [#allocation0], 2048
    %9 = vsyncpa [#allocation0], 1

// kernel: custom-call.4
$region0: #{custom-call.4}
  %s0 = inlined_call_operand.hbm [shape: c64[2,4,16,16], index: 0, kind: input, shape index: {}]
  %s1 = inlined_call_operand.vmem [shape: f32[2,4,16,16], index: 1, kind: output, shape index: {}]
  $region1: #{custom-call.4} parent=0
    #allocation0 [shape = 's32[1]{0}', space=sflag, size = 0x4, scoped, tag = 'scoped memory for custom-call.4']
    %2 = vsyncpa [#allocation0], 0
    %s3 = sshll.u32 %s1, 4
    %s4 = int_to_ptr.vmem [resolvable:$true] %s3
    %6 = dma.hbm_to_vmem [thread:$0]  %s0, 2048, %s4, [#allocation0]
    %7 = dma.done [#allocation0], 2048
    %8 = vsyncpa [#allocation0], 1

// kernel: custom-call
$region0: #{custom-call}
  %s0 = inlined_call_operand.hbm [shape: c64[2,16,16], index: 0, kind: input, shape index: {}]
  %s1 = inlined_call_operand.vmem [shape: f32[2,16,16], index: 1, kind: output, shape index: {}]
  $region1: #{custom-call} parent=0
    #allocation0 [shape = 's32[1]{0}', space=sflag, size = 0x4, scoped, tag = 'scoped memory for custom-call']
    %2 = vsyncpa [#allocation0], 0
    %s3 = sshll.u32 %s1, 4
    %s4 = int_to_ptr.vmem [resolvable:$true] %s3
    %6 = dma.hbm_to_vmem [thread:$0]  %s0, 512, %s4, [#allocation0]
    %7 = dma.done [#allocation0], 512
    %8 = vsyncpa [#allocation0], 1

// kernel: custom-call.1
$region0: #{custom-call.1}
  %s0 = inlined_call_operand.hbm [shape: c64[2,16,16], index: 0, kind: input, shape index: {}]
  %s1 = inlined_call_operand.vmem [shape: f32[2,16,16], index: 1, kind: output, shape index: {}]
  %s2 = scalar_lea.hbm %s0, 512
  $region1: #{custom-call.1} parent=0
    #allocation0 [shape = 's32[1]{0}', space=sflag, size = 0x4, scoped, tag = 'scoped memory for custom-call.1']
    %3 = vsyncpa [#allocation0], 0
    %s4 = sshll.u32 %s1, 4
    %s5 = int_to_ptr.vmem [resolvable:$true] %s4
    %7 = dma.hbm_to_vmem [thread:$0]  %s2, 512, %s5, [#allocation0]
    %8 = dma.done [#allocation0], 512
    %9 = vsyncpa [#allocation0], 1

// kernel: mwdunet_forward.4
$region0: #{mwdunet_forward.4}
  #allocation0 [shape = 'u32[]', space=smem, size = 0x4, offset = 0x4, fixed_abs, tag = 'smem constant byte address 0x4 - core index']
  #allocation1 [shape = 'u32[144,128]{1,0:T(1,128)}', space=vmem, size = 0x12000, scoped, tag = 'internal scratch']
  %s0 = inlined_call_operand.vmem [shape: f32[2,2,768], index: 0, kind: input, shape index: {}, may-alias: {0,1,2}]
  %s1 = inlined_call_operand.vmem [shape: f32[2,2,768], index: 1, kind: input, shape index: {}, may-alias: {0,1,2}]
  %s2 = inlined_call_operand.vmem [shape: f32[2,2,768], index: 2, kind: input, shape index: {}, may-alias: {0,1,2}]
  %s3 = inlined_call_operand.vmem [shape: f32[2,4,256], index: 3, kind: input, shape index: {}]
  %s4 = inlined_call_operand.vmem [shape: f32[2,4,256], index: 4, kind: input, shape index: {}]
  %s5 = inlined_call_operand.vmem [shape: f32[8,18], index: 5, kind: input, shape index: {}]
  %s6 = inlined_call_operand.vmem [shape: f32[18,8], index: 6, kind: input, shape index: {}]
  %s7 = inlined_call_operand.vmem [shape: f32[8,1], index: 7, kind: input, shape index: {}]
  %s8 = inlined_call_operand.vmem [shape: f32[2,1], index: 8, kind: input, shape index: {}]
  %s9 = inlined_call_operand.vmem [shape: f32[1,288], index: 9, kind: input, shape index: {}]
  %s10 = inlined_call_operand.vmem [shape: f32[1,288], index: 10, kind: input, shape index: {}]
  %s11 = inlined_call_operand.vmem [shape: f32[2,2,256], index: 11, kind: output, shape index: {0}]
  %s12 = inlined_call_operand.vmem [shape: f32[2,4,256], index: 12, kind: output, shape index: {1}]
  %s13 = inlined_call_operand.vmem [shape: f32[2,4,256], index: 13, kind: output, shape index: {2}]
  %14 = xla_tuple %s11, %s12, %s13
  %s15 = sld [smem:[#allocation0]]
  $region93: #{mwdunet_forward.4} parent=0
    _
  %s17 = ssub.s32 1, %s15
  %s18 = scalar_select 0, %s17, %s15
  loop: start=0, step=1, limit=4
  $region2: #{mwdunet_forward.4} parent=0 // loop_pre_header
    _
  $region3: #{mwdunet_forward.4} parent=0 // loop_header
    %s20 = sphi 0, %s24
    %p21 = scmp.ge.s32.totalorder %s20, 4
    %s27 = sphi 0, %s39
    %s28 = sphi 0, %s35
    %s29 = sphi 0, %s27
    %s30 = sphi 0, %s28
    %s31 = sphi 0, %s29
    %s32 = sphi 0, %s30
    %s44 = sphi 0, %s46
    %s47 = sphi 0, %s44
    %s48 = sphi 0, %s47
    %s64 = sphi 0, %s48
    %s74 = sphi 0, %s76
    %s77 = sphi 0, %s74
    %s78 = sphi 0, %s77
    %s94 = sphi 0, %s78
    %s104 = sphi 0, %s106
    %s107 = sphi 0, %s104
    %s108 = sphi 0, %s107
    %s124 = sphi 0, %s108
    %s132 = sphi 0, %s134
    %s135 = sphi 0, %s132
    %s136 = sphi 0, %s135
    %s152 = sphi 0, %s136
    %s160 = sphi 0, %s162
    %s163 = sphi 0, %s160
    %s164 = sphi 0, %s163
    %s180 = sphi 0, %s164
    %s184 = sphi 0, %s184
    %s186 = sphi 0, %s184
    %s187 = sphi 0, %s186
    %s201 = sphi 0, %s187
    %s205 = sphi 0, %s205
    %s207 = sphi 0, %s205
    %s208 = sphi 0, %s207
    %s222 = sphi 0, %s208
    %s226 = sphi 0, %s226
    %s228 = sphi 0, %s226
    %s229 = sphi 0, %s228
    %s243 = sphi 0, %s229
    %s247 = sphi 0, %s247
    %s249 = sphi 0, %s247
    %s250 = sphi 0, %s249
    %s264 = sphi 0, %s250
    %s268 = sphi 0, %s268
    %s270 = sphi 0, %s268
    %s271 = sphi 0, %s270
    %s285 = sphi 0, %s271
    %s289 = sphi 0, %s289
    %s291 = sphi 0, %s289
    %s292 = sphi 0, %s291
    %s306 = sphi 0, %s292
    %s314 = sphi 0, %s316
    %s317 = sphi 0, %s314
    %s318 = sphi 0, %s317
    %s334 = sphi 0, %s318
    %s342 = sphi 0, %s344
    %s345 = sphi 0, %s342
    %s346 = sphi 0, %s345
    %s362 = sphi 0, %s346
    %s370 = sphi 0, %s372
    %s373 = sphi 0, %s370
    %s374 = sphi 0, %s373
    %s390 = sphi 0, %s374
  $region4: #{mwdunet_forward.4} parent=0 // loop_header_branch
    %23 = sbr.rel (%p21) target = $region8
  $region5: #{mwdunet_forward.4} parent=0 // loop_body
    %s25 = ssub.s32 %s20, 1
    %s26 = ssub.s32 %s20, 2
    %s33 = sadd.s32 1, %s28
    %p34 = scmp.ge.s32.totalorder %s33, 1
    %s35 = scalar_select %p34, 0, %s33
    %s36 = sadd.s32 1, %s27
    %s37 = scalar_select %p34, %s36, %s27
    %p38 = scmp.ge.s32.totalorder %s37, 2
    %s39 = scalar_select %p38, 0, %s37
    %s40 = ssub.s32 %s27, %s39
    %s41 = ssub.s32 %s28, %s35
    %s42 = sor.u32 %s40, %s41
    %p43 = scmp.eq.s32.totalorder %s42, 0
    %s45 = sadd.s32 %s44, 1
    %s46 = scalar_select %p43, %s44, %s45
    %p49 = pneg %p43
    %p50 = scmp.eq.s32.totalorder %s20, 1
    %p51 = por %p49, %p50
    %p52 = scmp.ne.s32.totalorder %s44, %s47
    %p53 = scmp.eq.s32.totalorder %s20, 0
    %p54 = por %p52, %p53
    %p55 = scmp.ne.s32.totalorder %s44, %s47
    %p56 = scmp.eq.s32.totalorder %s25, 1
    %p57 = por %p55, %p56
    %p58 = scmp.ne.s32.totalorder %s47, %s48
    %p59 = scmp.eq.s32.totalorder %s25, 0
    %p60 = por %p58, %p59
    %p61 = scmp.ne.s32.totalorder %s47, %s48
    %p62 = scmp.eq.s32.totalorder %s26, 1
    %p63 = por %p61, %p62
    %p65 = scmp.ne.s32.totalorder %s48, %s64
    %p66 = scmp.eq.s32.totalorder %s26, 0
    %p67 = por %p65, %p66
    %s68 = sadd.s32 %s28, 1
    %s69 = sadd.s32 %s35, 1
    %s70 = ssub.s32 %s27, %s39
    %s71 = ssub.s32 %s68, %s69
    %s72 = sor.u32 %s70, %s71
    %p73 = scmp.eq.s32.totalorder %s72, 0
    %s75 = sadd.s32 %s74, 1
    %s76 = scalar_select %p73, %s74, %s75
    %p79 = pneg %p73
    %p80 = scmp.eq.s32.totalorder %s20, 1
    %p81 = por %p79, %p80
    %p82 = scmp.ne.s32.totalorder %s74, %s77
    %p83 = scmp.eq.s32.totalorder %s20, 0
    %p84 = por %p82, %p83
    %p85 = scmp.ne.s32.totalorder %s74, %s77
    %p86 = scmp.eq.s32.totalorder %s25, 1
    %p87 = por %p85, %p86
    %p88 = scmp.ne.s32.totalorder %s77, %s78
    %p89 = scmp.eq.s32.totalorder %s25, 0
    %p90 = por %p88, %p89
    %p91 = scmp.ne.s32.totalorder %s77, %s78
    %p92 = scmp.eq.s32.totalorder %s26, 1
    %p93 = por %p91, %p92
    %p95 = scmp.ne.s32.totalorder %s78, %s94
    %p96 = scmp.eq.s32.totalorder %s26, 0
    %p97 = por %p95, %p96
    %s98 = sadd.s32 %s28, 2
    %s99 = sadd.s32 %s35, 2
    %s100 = ssub.s32 %s27, %s39
    %s101 = ssub.s32 %s98, %s99
    %s102 = sor.u32 %s100, %s101
    %p103 = scmp.eq.s32.totalorder %s102, 0
    %s105 = sadd.s32 %s104, 1
    %s106 = scalar_select %p103, %s104, %s105
    %p109 = pneg %p103
    %p110 = scmp.eq.s32.totalorder %s20, 1
    %p111 = por %p109, %p110
    %p112 = scmp.ne.s32.totalorder %s104, %s107
    %p113 = scmp.eq.s32.totalorder %s20, 0
    %p114 = por %p112, %p113
    %p115 = scmp.ne.s32.totalorder %s104, %s107
    %p116 = scmp.eq.s32.totalorder %s25, 1
    %p117 = por %p115, %p116
    %p118 = scmp.ne.s32.totalorder %s107, %s108
    %p119 = scmp.eq.s32.totalorder %s25, 0
    %p120 = por %p118, %p119
    %p121 = scmp.ne.s32.totalorder %s107, %s108
    %p122 = scmp.eq.s32.totalorder %s26, 1
    %p123 = por %p121, %p122
    %p125 = scmp.ne.s32.totalorder %s108, %s124
    %p126 = scmp.eq.s32.totalorder %s26, 0
    %p127 = por %p125, %p126
    %s128 = ssub.s32 %s27, %s39
    %s129 = ssub.s32 %s28, %s35
    %s130 = sor.u32 %s128, %s129
    %p131 = scmp.eq.s32.totalorder %s130, 0
    %s133 = sadd.s32 %s132, 1
    %s134 = scalar_select %p131, %s132, %s133
    %p137 = pneg %p131
    %p138 = scmp.eq.s32.totalorder %s20, 1
    %p139 = por %p137, %p138
    %p140 = scmp.ne.s32.totalorder %s132, %s135
    %p141 = scmp.eq.s32.totalorder %s20, 0
    %p142 = por %p140, %p141
    %p143 = scmp.ne.s32.totalorder %s132, %s135
    %p144 = scmp.eq.s32.totalorder %s25, 1
    %p145 = por %p143, %p144
    %p146 = scmp.ne.s32.totalorder %s135, %s136
    %p147 = scmp.eq.s32.totalorder %s25, 0
    %p148 = por %p146, %p147
    %p149 = scmp.ne.s32.totalorder %s135, %s136
    %p150 = scmp.eq.s32.totalorder %s26, 1
    %p151 = por %p149, %p150
    %p153 = scmp.ne.s32.totalorder %s136, %s152
    %p154 = scmp.eq.s32.totalorder %s26, 0
    %p155 = por %p153, %p154
    %s156 = ssub.s32 %s27, %s39
    %s157 = ssub.s32 %s28, %s35
    %s158 = sor.u32 %s156, %s157
    %p159 = scmp.eq.s32.totalorder %s158, 0
    %s161 = sadd.s32 %s160, 1
    %s162 = scalar_select %p159, %s160, %s161
    %p165 = pneg %p159
    %p166 = scmp.eq.s32.totalorder %s20, 1
    %p167 = por %p165, %p166
    %p168 = scmp.ne.s32.totalorder %s160, %s163
    %p169 = scmp.eq.s32.totalorder %s20, 0
    %p170 = por %p168, %p169
    %p171 = scmp.ne.s32.totalorder %s160, %s163
    %p172 = scmp.eq.s32.totalorder %s25, 1
    %p173 = por %p171, %p172
    %p174 = scmp.ne.s32.totalorder %s163, %s164
    %p175 = scmp.eq.s32.totalorder %s25, 0
    %p176 = por %p174, %p175
    %p177 = scmp.ne.s32.totalorder %s163, %s164
    %p178 = scmp.eq.s32.totalorder %s26, 1
    %p179 = por %p177, %p178
    %p181 = scmp.ne.s32.totalorder %s164, %s180
    %p182 = scmp.eq.s32.totalorder %s26, 0
    %p183 = por %p181, %p182
    %s185 = sadd.s32 %s184, 1
    %p188 = scmp.eq.s32.totalorder %s20, 1
    %p189 = scmp.ne.s32.totalorder %s184, %s186
    %p190 = scmp.eq.s32.totalorder %s20, 0
    %p191 = por %p189, %p190
    %p192 = scmp.ne.s32.totalorder %s184, %s186
    %p193 = scmp.eq.s32.totalorder %s25, 1
    %p194 = por %p192, %p193
    %p195 = scmp.ne.s32.totalorder %s186, %s187
    %p196 = scmp.eq.s32.totalorder %s25, 0
    %p197 = por %p195, %p196
    %p198 = scmp.ne.s32.totalorder %s186, %s187
    %p199 = scmp.eq.s32.totalorder %s26, 1
    %p200 = por %p198, %p199
    %p202 = scmp.ne.s32.totalorder %s187, %s201
    %p203 = scmp.eq.s32.totalorder %s26, 0
    %p204 = por %p202, %p203
    %s206 = sadd.s32 %s205, 1
    %p209 = scmp.eq.s32.totalorder %s20, 1
    %p210 = scmp.ne.s32.totalorder %s205, %s207
    %p211 = scmp.eq.s32.totalorder %s20, 0
    %p212 = por %p210, %p211
    %p213 = scmp.ne.s32.totalorder %s205, %s207
    %p214 = scmp.eq.s32.totalorder %s25, 1
    %p215 = por %p213, %p214
    %p216 = scmp.ne.s32.totalorder %s207, %s208
    %p217 = scmp.eq.s32.totalorder %s25, 0
    %p218 = por %p216, %p217
    %p219 = scmp.ne.s32.totalorder %s207, %s208
    %p220 = scmp.eq.s32.totalorder %s26, 1
    %p221 = por %p219, %p220
    %p223 = scmp.ne.s32.totalorder %s208, %s222
    %p224 = scmp.eq.s32.totalorder %s26, 0
    %p225 = por %p223, %p224
    %s227 = sadd.s32 %s226, 1
    %p230 = scmp.eq.s32.totalorder %s20, 1
    %p231 = scmp.ne.s32.totalorder %s226, %s228
    %p232 = scmp.eq.s32.totalorder %s20, 0
    %p233 = por %p231, %p232
    %p234 = scmp.ne.s32.totalorder %s226, %s228
    %p235 = scmp.eq.s32.totalorder %s25, 1
    %p236 = por %p234, %p235
    %p237 = scmp.ne.s32.totalorder %s228, %s229
    %p238 = scmp.eq.s32.totalorder %s25, 0
    %p239 = por %p237, %p238
    %p240 = scmp.ne.s32.totalorder %s228, %s229
    %p241 = scmp.eq.s32.totalorder %s26, 1
    %p242 = por %p240, %p241
    %p244 = scmp.ne.s32.totalorder %s229, %s243
    %p245 = scmp.eq.s32.totalorder %s26, 0
    %p246 = por %p244, %p245
    %s248 = sadd.s32 %s247, 1
    %p251 = scmp.eq.s32.totalorder %s20, 1
    %p252 = scmp.ne.s32.totalorder %s247, %s249
    %p253 = scmp.eq.s32.totalorder %s20, 0
    %p254 = por %p252, %p253
    %p255 = scmp.ne.s32.totalorder %s247, %s249
    %p256 = scmp.eq.s32.totalorder %s25, 1
    %p257 = por %p255, %p256
    %p258 = scmp.ne.s32.totalorder %s249, %s250
    %p259 = scmp.eq.s32.totalorder %s25, 0
    %p260 = por %p258, %p259
    %p261 = scmp.ne.s32.totalorder %s249, %s250
    %p262 = scmp.eq.s32.totalorder %s26, 1
    %p263 = por %p261, %p262
    %p265 = scmp.ne.s32.totalorder %s250, %s264
    %p266 = scmp.eq.s32.totalorder %s26, 0
    %p267 = por %p265, %p266
    %s269 = sadd.s32 %s268, 1
    %p272 = scmp.eq.s32.totalorder %s20, 1
    %p273 = scmp.ne.s32.totalorder %s268, %s270
    %p274 = scmp.eq.s32.totalorder %s20, 0
    %p275 = por %p273, %p274
    %p276 = scmp.ne.s32.totalorder %s268, %s270
    %p277 = scmp.eq.s32.totalorder %s25, 1
    %p278 = por %p276, %p277
    %p279 = scmp.ne.s32.totalorder %s270, %s271
    %p280 = scmp.eq.s32.totalorder %s25, 0
    %p281 = por %p279, %p280
    %p282 = scmp.ne.s32.totalorder %s270, %s271
    %p283 = scmp.eq.s32.totalorder %s26, 1
    %p284 = por %p282, %p283
    %p286 = scmp.ne.s32.totalorder %s271, %s285
    %p287 = scmp.eq.s32.totalorder %s26, 0
    %p288 = por %p286, %p287
    %s290 = sadd.s32 %s289, 1
    %p293 = scmp.eq.s32.totalorder %s20, 1
    %p294 = scmp.ne.s32.totalorder %s289, %s291
    %p295 = scmp.eq.s32.totalorder %s20, 0
    %p296 = por %p294, %p295
    %p297 = scmp.ne.s32.totalorder %s289, %s291
    %p298 = scmp.eq.s32.totalorder %s25, 1
    %p299 = por %p297, %p298
    %p300 = scmp.ne.s32.totalorder %s291, %s292
    %p301 = scmp.eq.s32.totalorder %s25, 0
    %p302 = por %p300, %p301
    %p303 = scmp.ne.s32.totalorder %s291, %s292
    %p304 = scmp.eq.s32.totalorder %s26, 1
    %p305 = por %p303, %p304
    %p307 = scmp.ne.s32.totalorder %s292, %s306
    %p308 = scmp.eq.s32.totalorder %s26, 0
    %p309 = por %p307, %p308
    %s310 = ssub.s32 %s27, %s39
    %s311 = ssub.s32 %s28, %s35
    %s312 = sor.u32 %s310, %s311
    %p313 = scmp.eq.s32.totalorder %s312, 0
    %s315 = sadd.s32 %s314, 1
    %s316 = scalar_select %p313, %s314, %s315
    %p319 = pneg %p313
    %p320 = scmp.eq.s32.totalorder %s20, 1
    %p321 = por %p319, %p320
    %p322 = scmp.ne.s32.totalorder %s314, %s317
    %p323 = scmp.eq.s32.totalorder %s20, 0
    %p324 = por %p322, %p323
    %p325 = scmp.ne.s32.totalorder %s314, %s317
    %p326 = scmp.eq.s32.totalorder %s25, 1
    %p327 = por %p325, %p326
    %p328 = scmp.ne.s32.totalorder %s317, %s318
    %p329 = scmp.eq.s32.totalorder %s25, 0
    %p330 = por %p328, %p329
    %p331 = scmp.ne.s32.totalorder %s317, %s318
    %p332 = scmp.eq.s32.totalorder %s26, 1
    %p333 = por %p331, %p332
    %p335 = scmp.ne.s32.totalorder %s318, %s334
    %p336 = scmp.eq.s32.totalorder %s26, 0
    %p337 = por %p335, %p336
    %s338 = ssub.s32 %s27, %s39
    %s339 = ssub.s32 %s28, %s35
    %s340 = sor.u32 %s338, %s339
    %p341 = scmp.eq.s32.totalorder %s340, 0
    %s343 = sadd.s32 %s342, 1
    %s344 = scalar_select %p341, %s342, %s343
    %p347 = pneg %p341
    %p348 = scmp.eq.s32.totalorder %s20, 1
    %p349 = por %p347, %p348
    %p350 = scmp.ne.s32.totalorder %s342, %s345
    %p351 = scmp.eq.s32.totalorder %s20, 0
    %p352 = por %p350, %p351
    %p353 = scmp.ne.s32.totalorder %s342, %s345
    %p354 = scmp.eq.s32.totalorder %s25, 1
    %p355 = por %p353, %p354
    %p356 = scmp.ne.s32.totalorder %s345, %s346
    %p357 = scmp.eq.s32.totalorder %s25, 0
    %p358 = por %p356, %p357
    %p359 = scmp.ne.s32.totalorder %s345, %s346
    %p360 = scmp.eq.s32.totalorder %s26, 1
    %p361 = por %p359, %p360
    %p363 = scmp.ne.s32.totalorder %s346, %s362
    %p364 = scmp.eq.s32.totalorder %s26, 0
    %p365 = por %p363, %p364
    %s366 = ssub.s32 %s27, %s39
    %s367 = ssub.s32 %s28, %s35
    %s368 = sor.u32 %s366, %s367
    %p369 = scmp.eq.s32.totalorder %s368, 0
    %s371 = sadd.s32 %s370, 1
    %s372 = scalar_select %p369, %s370, %s371
    %p375 = pneg %p369
    %p376 = scmp.eq.s32.totalorder %s20, 1
    %p377 = por %p375, %p376
    %p378 = scmp.ne.s32.totalorder %s370, %s373
    %p379 = scmp.eq.s32.totalorder %s20, 0
    %p380 = por %p378, %p379
    %p381 = scmp.ne.s32.totalorder %s370, %s373
    %p382 = scmp.eq.s32.totalorder %s25, 1
    %p383 = por %p381, %p382
    %p384 = scmp.ne.s32.totalorder %s373, %s374
    %p385 = scmp.eq.s32.totalorder %s25, 0
    %p386 = por %p384, %p385
    %p387 = scmp.ne.s32.totalorder %s373, %s374
    %p388 = scmp.eq.s32.totalorder %s26, 1
    %p389 = por %p387, %p388
    %p391 = scmp.ne.s32.totalorder %s374, %s390
    %p392 = scmp.eq.s32.totalorder %s26, 0
    %p393 = por %p391, %p392
    %p394 = scmp.le.s32.totalorder 1, %s20
    %p395 = scmp.lt.s32.totalorder %s20, 3
    %p396 = pnand %p394, %p395
    %p397 = pneg %p396
    // Predicated region
    $region9: #{mwdunet_forward.4} parent=5 // pred_check
      _
    $region10: #{mwdunet_forward.4} parent=5 // pred_check_branch
      %399 = sbr.rel (%p396) target = $region12
    $region11: #{mwdunet_forward.4} parent=5 // pred_region
      %s400 = ssub.s32 %s20, 1
      // Predicated region
      $region13: #{mwdunet_forward.4} parent=11 // pred_check
        %p401 = pneg %p197
      $region14: #{mwdunet_forward.4} parent=11 // pred_check_branch
        %403 = sbr.rel (%p401) target = $region16
      $region15: #{mwdunet_forward.4} parent=11 // pred_region
        _
      $region16: #{mwdunet_forward.4} parent=11 // pred_fallthru
        _
      // Predicated region
      $region17: #{mwdunet_forward.4} parent=11 // pred_check
        %p404 = pneg %p218
      $region18: #{mwdunet_forward.4} parent=11 // pred_check_branch
        %406 = sbr.rel (%p404) target = $region20
      $region19: #{mwdunet_forward.4} parent=11 // pred_region
        _
      $region20: #{mwdunet_forward.4} parent=11 // pred_fallthru
        _
      // Predicated region
      $region21: #{mwdunet_forward.4} parent=11 // pred_check
        %p407 = pneg %p239
      $region22: #{mwdunet_forward.4} parent=11 // pred_check_branch
        %409 = sbr.rel (%p407) target = $region24
      $region23: #{mwdunet_forward.4} parent=11 // pred_region
        _
      $region24: #{mwdunet_forward.4} parent=11 // pred_fallthru
        _
      // Predicated region
      $region25: #{mwdunet_forward.4} parent=11 // pred_check
        %p410 = pneg %p260
      $region26: #{mwdunet_forward.4} parent=11 // pred_check_branch
        %412 = sbr.rel (%p410) target = $region28
      $region27: #{mwdunet_forward.4} parent=11 // pred_region
        _
      $region28: #{mwdunet_forward.4} parent=11 // pred_fallthru
        _
      // Predicated region
      $region29: #{mwdunet_forward.4} parent=11 // pred_check
        %p413 = pneg %p281
      $region30: #{mwdunet_forward.4} parent=11 // pred_check_branch
        %415 = sbr.rel (%p413) target = $region32
      $region31: #{mwdunet_forward.4} parent=11 // pred_region
        _
      $region32: #{mwdunet_forward.4} parent=11 // pred_fallthru
        _
      // Predicated region
      $region33: #{mwdunet_forward.4} parent=11 // pred_check
        %p416 = pneg %p302
      $region34: #{mwdunet_forward.4} parent=11 // pred_check_branch
        %418 = sbr.rel (%p416) target = $region36
      $region35: #{mwdunet_forward.4} parent=11 // pred_region
        _
      $region36: #{mwdunet_forward.4} parent=11 // pred_fallthru
        _
    $region12: #{mwdunet_forward.4} parent=5 // pred_fallthru
      _
    %p419 = scmp.lt.s32.totalorder %s20, 2
    // Predicated region
    $region37: #{mwdunet_forward.4} parent=5 // pred_check
      %p420 = pneg %p419
    $region38: #{mwdunet_forward.4} parent=5 // pred_check_branch
      %422 = sbr.rel (%p420) target = $region40
    $region39: #{mwdunet_forward.4} parent=5 // pred_region
      // Predicated region
      $region41: #{mwdunet_forward.4} parent=39 // pred_check
        %p423 = pneg %p54
      $region42: #{mwdunet_forward.4} parent=39 // pred_check_branch
        %425 = sbr.rel (%p423) target = $region44
      $region43: #{mwdunet_forward.4} parent=39 // pred_region
        %s426 = smul.u32 2, %s28
        %p427 = scmp.lt.s32.totalorder %s27, 1
        %s428 = scalar_select %p427, %s27, 1
        %p429 = scmp.lt.s32.totalorder %s426, 5
        %s430 = scalar_select %p429, %s426, 5
        %s431 = smul.addr %s428, 6
        %s432 = sadd.s32 %s430, %s431
        %s433 = smul.addr %s432, 2
        %s434 = scalar_lea.vmem %s0, %s433
        %s435 = smul.u32 2, %s28
      $region44: #{mwdunet_forward.4} parent=39 // pred_fallthru
        _
      // Predicated region
      $region45: #{mwdunet_forward.4} parent=39 // pred_check
        %p436 = pneg %p84
      $region46: #{mwdunet_forward.4} parent=39 // pred_check_branch
        %438 = sbr.rel (%p436) target = $region48
      $region47: #{mwdunet_forward.4} parent=39 // pred_region
        %s439 = sadd.s32 %s28, 1
        %s440 = smul.u32 2, %s439
        %p441 = scmp.lt.s32.totalorder %s27, 1
        %s442 = scalar_select %p441, %s27, 1
        %p443 = scmp.lt.s32.totalorder %s440, 5
        %s444 = scalar_select %p443, %s440, 5
        %s445 = smul.addr %s442, 6
        %s446 = sadd.s32 %s444, %s445
        %s447 = smul.addr %s446, 2
        %s448 = scalar_lea.vmem %s1, %s447
        %s449 = sadd.s32 %s28, 1
        %s450 = smul.u32 2, %s449
      $region48: #{mwdunet_forward.4} parent=39 // pred_fallthru
        _
      // Predicated region
      $region49: #{mwdunet_forward.4} parent=39 // pred_check
        %p451 = pneg %p114
      $region50: #{mwdunet_forward.4} parent=39 // pred_check_branch
        %453 = sbr.rel (%p451) target = $region52
      $region51: #{mwdunet_forward.4} parent=39 // pred_region
        %s454 = sadd.s32 %s28, 2
        %s455 = smul.u32 2, %s454
        %p456 = scmp.lt.s32.totalorder %s27, 1
        %s457 = scalar_select %p456, %s27, 1
        %p458 = scmp.lt.s32.totalorder %s455, 5
        %s459 = scalar_select %p458, %s455, 5
        %s460 = smul.addr %s457, 6
        %s461 = sadd.s32 %s459, %s460
        %s462 = smul.addr %s461, 2
        %s463 = scalar_lea.vmem %s2, %s462
        %s464 = sadd.s32 %s28, 2
        %s465 = smul.u32 2, %s464
      $region52: #{mwdunet_forward.4} parent=39 // pred_fallthru
        _
      // Predicated region
      $region53: #{mwdunet_forward.4} parent=39 // pred_check
        %p466 = pneg %p142
      $region54: #{mwdunet_forward.4} parent=39 // pred_check_branch
        %468 = sbr.rel (%p466) target = $region56
      $region55: #{mwdunet_forward.4} parent=39 // pred_region
        %s469 = smul.u32 2, %s28
        %p470 = scmp.lt.s32.totalorder %s27, 1
        %s471 = scalar_select %p470, %s27, 1
        %p472 = scmp.lt.s32.totalorder %s469, 1
        %s473 = scalar_select %p472, %s469, 1
        %s474 = smul.addr %s471, 2
        %s475 = sadd.s32 %s473, %s474
        %s476 = smul.addr %s475, 4
        %s477 = scalar_lea.vmem %s3, %s476
        %s478 = smul.u32 2, %s28
      $region56: #{mwdunet_forward.4} parent=39 // pred_fallthru
        _
      // Predicated region
      $region57: #{mwdunet_forward.4} parent=39 // pred_check
        %p479 = pneg %p170
      $region58: #{mwdunet_forward.4} parent=39 // pred_check_branch
        %481 = sbr.rel (%p479) target = $region60
      $region59: #{mwdunet_forward.4} parent=39 // pred_region
        %s482 = smul.u32 2, %s28
        %p483 = scmp.lt.s32.totalorder %s27, 1
        %s484 = scalar_select %p483, %s27, 1
        %p485 = scmp.lt.s32.totalorder %s482, 1
        %s486 = scalar_select %p485, %s482, 1
        %s487 = smul.addr %s484, 2
        %s488 = sadd.s32 %s486, %s487
        %s489 = smul.addr %s488, 4
        %s490 = scalar_lea.vmem %s4, %s489
        %s491 = smul.u32 2, %s28
      $region60: #{mwdunet_forward.4} parent=39 // pred_fallthru
        _
    $region40: #{mwdunet_forward.4} parent=5 // pred_fallthru
      _
    %p492 = scmp.le.s32.totalorder 1, %s20
    %p493 = scmp.lt.s32.totalorder %s20, 3
    %p494 = pnand %p492, %p493
    %p495 = pneg %p494
    // Predicated region
    $region61: #{mwdunet_forward.4} parent=5 // pred_check
      _
    $region62: #{mwdunet_forward.4} parent=5 // pred_check_branch
      %497 = sbr.rel (%p494) target = $region64
    $region63: #{mwdunet_forward.4} parent=5 // pred_region
      %s498 = ssub.s32 %s20, 1
      %s499 = smul.u32 2, %s30
      %p500 = scmp.lt.s32.totalorder %s29, 1
      %s501 = scalar_select %p500, %s29, 1
      %p502 = scmp.lt.s32.totalorder %s499, 5
      %s503 = scalar_select %p502, %s499, 5
      %s504 = smul.addr %s501, 6
      %s505 = sadd.s32 %s503, %s504
      %s506 = smul.addr %s505, 2
      %s507 = scalar_lea.vmem %s0, %s506
      %p508 = pneg %p60
      %p509 = pneg %p57
      %s510 = sadd.s32 %s30, 1
      %s511 = smul.u32 2, %s510
      %p512 = scmp.lt.s32.totalorder %s29, 1
      %s513 = scalar_select %p512, %s29, 1
      %p514 = scmp.lt.s32.totalorder %s511, 5
      %s515 = scalar_select %p514, %s511, 5
      %s516 = smul.addr %s513, 6
      %s517 = sadd.s32 %s515, %s516
      %s518 = smul.addr %s517, 2
      %s519 = scalar_lea.vmem %s1, %s518
      %p520 = pneg %p90
      %p521 = pneg %p87
      %s522 = sadd.s32 %s30, 2
      %s523 = smul.u32 2, %s522
      %p524 = scmp.lt.s32.totalorder %s29, 1
      %s525 = scalar_select %p524, %s29, 1
      %p526 = scmp.lt.s32.totalorder %s523, 5
      %s527 = scalar_select %p526, %s523, 5
      %s528 = smul.addr %s525, 6
      %s529 = sadd.s32 %s527, %s528
      %s530 = smul.addr %s529, 2
      %s531 = scalar_lea.vmem %s2, %s530
      %p532 = pneg %p120
      %p533 = pneg %p117
      %s534 = smul.u32 2, %s30
      %p535 = scmp.lt.s32.totalorder %s29, 1
      %s536 = scalar_select %p535, %s29, 1
      %p537 = scmp.lt.s32.totalorder %s534, 1
      %s538 = scalar_select %p537, %s534, 1
      %s539 = smul.addr %s536, 2
      %s540 = sadd.s32 %s538, %s539
      %s541 = smul.addr %s540, 4
      %s542 = scalar_lea.vmem %s3, %s541
      %p543 = pneg %p148
      %p544 = pneg %p145
      %s545 = smul.u32 2, %s30
      %p546 = scmp.lt.s32.totalorder %s29, 1
      %s547 = scalar_select %p546, %s29, 1
      %p548 = scmp.lt.s32.totalorder %s545, 1
      %s549 = scalar_select %p548, %s545, 1
      %s550 = smul.addr %s547, 2
      %s551 = sadd.s32 %s549, %s550
      %s552 = smul.addr %s551, 4
      %s553 = scalar_lea.vmem %s4, %s552
      %p554 = pneg %p176
      %p555 = pneg %p173
      %p556 = pneg %p197
      %p557 = pneg %p194
      %p558 = pneg %p218
      %p559 = pneg %p215
      %p560 = pneg %p239
      %p561 = pneg %p236
      %p562 = pneg %p260
      %p563 = pneg %p257
      %p564 = pneg %p281
      %p565 = pneg %p278
      %p566 = pneg %p302
      %p567 = pneg %p299
      %p568 = pneg %p330
      %p569 = pneg %p327
      %s570 = smul.u32 2, %s30
      %p571 = scmp.lt.s32.totalorder %s29, 1
      %s572 = scalar_select %p571, %s29, 1
      %p573 = scmp.lt.s32.totalorder %s570, 1
      %s574 = scalar_select %p573, %s570, 1
      %s575 = smul.addr %s572, 2
      %s576 = sadd.s32 %s574, %s575
      %s577 = smul.addr %s576, 2
      %s578 = scalar_lea.vmem %s11, %s577
      %p579 = pneg %p358
      %p580 = pneg %p355
      %s581 = smul.u32 2, %s30
      %p582 = scmp.lt.s32.totalorder %s29, 1
      %s583 = scalar_select %p582, %s29, 1
      %p584 = scmp.lt.s32.totalorder %s581, 1
      %s585 = scalar_select %p584, %s581, 1
      %s586 = smul.addr %s583, 2
      %s587 = sadd.s32 %s585, %s586
      %s588 = smul.addr %s587, 4
      %s589 = scalar_lea.vmem %s12, %s588
      %p590 = pneg %p386
      %p591 = pneg %p383
      %s592 = smul.u32 2, %s30
      %p593 = scmp.lt.s32.totalorder %s29, 1
      %s594 = scalar_select %p593, %s29, 1
      %p595 = scmp.lt.s32.totalorder %s592, 1
      %s596 = scalar_select %p595, %s592, 1
      %s597 = smul.addr %s594, 2
      %s598 = sadd.s32 %s596, %s597
      %s599 = smul.addr %s598, 4
      %s600 = scalar_lea.vmem %s13, %s599
      %s601 = smul.u32 2, %s30
      %p602 = scmp.lt.s32.totalorder %s29, 1
      %s603 = scalar_select %p602, %s29, 1
      %p604 = scmp.lt.s32.totalorder %s601, 5
      %s605 = scalar_select %p604, %s601, 5
      %s606 = smul.addr %s603, 6
      %s607 = sadd.s32 %s605, %s606
      %s608 = smul.addr %s607, 2
      %s609 = scalar_lea.vmem %s0, %s608
      %s610 = smul.u32 2, %s30
      %s611 = sadd.s32 %s30, 1
      %s612 = smul.u32 2, %s611
      %p613 = scmp.lt.s32.totalorder %s29, 1
      %s614 = scalar_select %p613, %s29, 1
      %p615 = scmp.lt.s32.totalorder %s612, 5
      %s616 = scalar_select %p615, %s612, 5
      %s617 = smul.addr %s614, 6
      %s618 = sadd.s32 %s616, %s617
      %s619 = smul.addr %s618, 2
      %s620 = scalar_lea.vmem %s1, %s619
      %s621 = sadd.s32 %s30, 1
      %s622 = smul.u32 2, %s621
      %s623 = sadd.s32 %s30, 2
      %s624 = smul.u32 2, %s623
      %p625 = scmp.lt.s32.totalorder %s29, 1
      %s626 = scalar_select %p625, %s29, 1
      %p627 = scmp.lt.s32.totalorder %s624, 5
      %s628 = scalar_select %p627, %s624, 5
      %s629 = smul.addr %s626, 6
      %s630 = sadd.s32 %s628, %s629
      %s631 = smul.addr %s630, 2
      %s632 = scalar_lea.vmem %s2, %s631
      %s633 = sadd.s32 %s30, 2
      %s634 = smul.u32 2, %s633
      %s635 = smul.u32 2, %s30
      %p636 = scmp.lt.s32.totalorder %s29, 1
      %s637 = scalar_select %p636, %s29, 1
      %p638 = scmp.lt.s32.totalorder %s635, 1
      %s639 = scalar_select %p638, %s635, 1
      %s640 = smul.addr %s637, 2
      %s641 = sadd.s32 %s639, %s640
      %s642 = smul.addr %s641, 4
      %s643 = scalar_lea.vmem %s3, %s642
      %s644 = smul.u32 2, %s30
      %s645 = smul.u32 2, %s30
      %p646 = scmp.lt.s32.totalorder %s29, 1
      %s647 = scalar_select %p646, %s29, 1
      %p648 = scmp.lt.s32.totalorder %s645, 1
      %s649 = scalar_select %p648, %s645, 1
      %s650 = smul.addr %s647, 2
      %s651 = sadd.s32 %s649, %s650
      %s652 = smul.addr %s651, 4
      %s653 = scalar_lea.vmem %s4, %s652
      %s654 = smul.u32 2, %s30
      %s655 = smul.u32 2, %s30
      %p656 = scmp.lt.s32.totalorder %s29, 1
      %s657 = scalar_select %p656, %s29, 1
      %p658 = scmp.lt.s32.totalorder %s655, 1
      %s659 = scalar_select %p658, %s655, 1
      %s660 = smul.addr %s657, 2
      %s661 = sadd.s32 %s659, %s660
      %s662 = smul.addr %s661, 2
      %s663 = scalar_lea.vmem %s11, %s662
      %s664 = smul.u32 2, %s30
      %s665 = smul.u32 2, %s30
      %p666 = scmp.lt.s32.totalorder %s29, 1
      %s667 = scalar_select %p666, %s29, 1
      %p668 = scmp.lt.s32.totalorder %s665, 1
      %s669 = scalar_select %p668, %s665, 1
      %s670 = smul.addr %s667, 2
      %s671 = sadd.s32 %s669, %s670
      %s672 = smul.addr %s671, 4
      %s673 = scalar_lea.vmem %s12, %s672
      %s674 = smul.u32 2, %s30
      %s675 = smul.u32 2, %s30
      %p676 = scmp.lt.s32.totalorder %s29, 1
      %s677 = scalar_select %p676, %s29, 1
      %p678 = scmp.lt.s32.totalorder %s675, 1
      %s679 = scalar_select %p678, %s675, 1
      %s680 = smul.addr %s677, 2
      %s681 = sadd.s32 %s679, %s680
      %s682 = smul.addr %s681, 4
      %s683 = scalar_lea.vmem %s13, %s682
      %s684 = smul.u32 2, %s30
      %v685 = vld [vmem:[%s609] sm:$0xf]
      %v686 = vld [vmem:[%s620] sm:$0xf]
      %v687 = vld [vmem:[%s632] sm:$0xf]
      %v690 = vunpack.c.l.s4 1983009808
      %v691 = vunpack.c.0.s8 %v690
      %v692 = vlaneseq
      %v693 = vshrl.u32 %v692, 7
      %v694 = vsub.s32 %v691, %v693
      %v695 = vrot.slane %v685, %v694
      %v696 = vcombine.high %v695, %v695
      %v700 = vunpack.c.l.s4 1983009808
      %v701 = vunpack.c.0.s8 %v700
      %v702 = vlaneseq
      %v703 = vshrl.u32 %v702, 7
      %v704 = vsub.s32 %v701, %v703
      %v705 = vrot.slane %v686, %v704
      %v706 = vcombine.high %v705, %v705
      %v711 = vunpack.c.l.s4 1983009808
      %v712 = vunpack.c.0.s8 %v711
      %v713 = vlaneseq
      %v714 = vshrl.u32 %v713, 7
      %v715 = vsub.s32 %v712, %v714
      %v716 = vrot.slane %v687, %v715
      %v718 = vld [vmem:[%s9] sm:$0x7]
      %v719 = vld [vmem:[%s10] sm:$0x7]
      %v721 = vlaneseq
      %v722 = vshrl.u32 %v721, 7
      %v723 = vsub.s32 0, %v722
      %v724 = vrot.slane %v718, %v723
      %v725 = vlaneseq
      %v726 = vshrl.u32 %v725, 7
      %v727 = vsub.s32 1, %v726
      %v728 = vrot.slane %v718, %v727
      %v729 = vlaneseq
      %v730 = vshrl.u32 %v729, 7
      %v731 = vsub.s32 2, %v730
      %v732 = vrot.slane %v718, %v731
      %733 = vrot.lane.b32.xlu0 %v724, 95
      %v734 = vpop.permute.xlu0 %733
      %735 = vrot.lane.b32.xlu0 %v728, 95
      %v736 = vpop.permute.xlu0 %735
      %737 = vrot.lane.b32.xlu0 %v732, 95
      %v738 = vpop.permute.xlu0 %737
      %vm739 = vcmask 777216
      %v740 = vsel %vm739, %v734, %v736
      %v741 = vsel %vm739, %v736, %v738
      %v745 = vmul.f32 %v696, %v734
      %v746 = vmul.f32 %v705, %v740
      %v747 = vmul.f32 %v706, %v741
      %v749 = vlaneseq
      %v750 = vshrl.u32 %v749, 7
      %v751 = vsub.s32 0, %v750
      %v752 = vrot.slane %v719, %v751
      %v753 = vlaneseq
      %v754 = vshrl.u32 %v753, 7
      %v755 = vsub.s32 1, %v754
      %v756 = vrot.slane %v719, %v755
      %v757 = vlaneseq
      %v758 = vshrl.u32 %v757, 7
      %v759 = vsub.s32 2, %v758
      %v760 = vrot.slane %v719, %v759
      %761 = vrot.lane.b32.xlu0 %v752, 97
      %v762 = vpop.permute.xlu0 %761
      %763 = vrot.lane.b32.xlu0 %v756, 97
      %v764 = vpop.permute.xlu0 %763
      %765 = vrot.lane.b32.xlu0 %v760, 97
      %v766 = vpop.permute.xlu0 %765
      %vm767 = vcmask 793600
      %v768 = vsel %vm767, %v762, %v764
      %v769 = vsel %vm767, %v764, %v766
      %v774 = vmul.f32 %v696, %v762
      %v775 = vmul.f32 %v705, %v768
      %v776 = vmul.f32 %v706, %v769
      %v777 = vmul.f32 %v716, %v766
      %778 = vrot.lane.b32.xlu0 %v724, 111
      %v779 = vpop.permute.xlu0 %778
      %780 = vrot.lane.b32.xlu0 %v728, 111
      %v781 = vpop.permute.xlu0 %780
      %782 = vrot.lane.b32.xlu0 %v732, 111
      %v783 = vpop.permute.xlu0 %782
      %vm784 = vcmask 908288
      %v785 = vsel %vm784, %v779, %v781
      %v786 = vsel %vm784, %v781, %v783
      %v791 = vmul.f32 %v696, %v779
      %v792 = vmul.f32 %v705, %v785
      %v793 = vmul.f32 %v706, %v786
      %v794 = vmul.f32 %v716, %v783
      %795 = vrot.lane.b32.xlu0 %v752, 113
      %v796 = vpop.permute.xlu0 %795
      %797 = vrot.lane.b32.xlu0 %v756, 113
      %v798 = vpop.permute.xlu0 %797
      %799 = vrot.lane.b32.xlu0 %v760, 113
      %v800 = vpop.permute.xlu0 %799
      %vm801 = vcmask 924672
      %v802 = vsel %vm801, %v796, %v798
      %v803 = vsel %vm801, %v798, %v800
      %v808 = vmul.f32 %v696, %v796
      %v809 = vmul.f32 %v705, %v802
      %v810 = vmul.f32 %v706, %v803
      %v811 = vmul.f32 %v716, %v800
      %812 = vrot.lane.b32.xlu0 %v724, 127
      %v813 = vpop.permute.xlu0 %812
      %814 = vrot.lane.b32.xlu0 %v728, 127
      %v815 = vpop.permute.xlu0 %814
      %816 = vrot.lane.b32.xlu0 %v732, 127
      %v817 = vpop.permute.xlu0 %816
      %vm818 = vcmask 1039360
      %v819 = vsel %vm818, %v813, %v815
      %v820 = vsel %vm818, %v815, %v817
      %v825 = vmul.f32 %v696, %v813
      %v826 = vmul.f32 %v705, %v819
      %v827 = vmul.f32 %v706, %v820
      %v828 = vmul.f32 %v716, %v817
      %829 = vrot.lane.b32.xlu0 %v752, 1
      %v830 = vpop.permute.xlu0 %829
      %831 = vrot.lane.b32.xlu0 %v756, 1
      %v832 = vpop.permute.xlu0 %831
      %833 = vrot.lane.b32.xlu0 %v760, 1
      %v834 = vpop.permute.xlu0 %833
      %vm835 = vcmask 7168
      %v836 = vsel %vm835, %v830, %v832
      %v837 = vsel %vm835, %v832, %v834
      %v841 = vmul.f32 %v705, %v830
      %v842 = vmul.f32 %v706, %v836
      %v843 = vmul.f32 %v716, %v837
      %v844 = vrot.slane %v696, 6
      %v845 = vrot.slane %v705, 6
      %v846 = vrot.slane %v706, 6
      %847 = vrot.lane.b32.xlu0 %v844, 127
      %v848 = vpop.permute.xlu0 %847
      %849 = vrot.lane.b32.xlu0 %v845, 127
      %v850 = vpop.permute.xlu0 %849
      %851 = vrot.lane.b32.xlu0 %v846, 127
      %v852 = vpop.permute.xlu0 %851
      %v853 = vsel %vm818, %v848, %v850
      %v854 = vsel %vm818, %v850, %v852
      %v862 = vrot.slane %v774, 4
      %v863 = vrot.slane %v775, 4
      %v864 = vrot.slane %v776, 4
      %v865 = vrot.slane %v777, 4
      %866 = vrot.lane.b32.xlu0 %v862, 126
      %v867 = vpop.permute.xlu0 %866
      %868 = vrot.lane.b32.xlu0 %v863, 126
      %v869 = vpop.permute.xlu0 %868
      %870 = vrot.lane.b32.xlu0 %v864, 126
      %v871 = vpop.permute.xlu0 %870
      %872 = vrot.lane.b32.xlu0 %v865, 126
      %v873 = vpop.permute.xlu0 %872
      %vm874 = vcmask 1031168
      %v875 = vsel %vm874, %v867, %v869
      %v876 = vsel %vm874, %v869, %v871
      %v877 = vsel %vm874, %v871, %v873
      %v885 = vrot.slane %v791, 2
      %v886 = vrot.slane %v792, 2
      %v887 = vrot.slane %v793, 2
      %v888 = vrot.slane %v794, 2
      %889 = vrot.lane.b32.xlu0 %v885, 112
      %v890 = vpop.permute.xlu0 %889
      %891 = vrot.lane.b32.xlu0 %v886, 112
      %v892 = vpop.permute.xlu0 %891
      %893 = vrot.lane.b32.xlu0 %v887, 112
      %v894 = vpop.permute.xlu0 %893
      %895 = vrot.lane.b32.xlu0 %v888, 112
      %v896 = vpop.permute.xlu0 %895
      %vm897 = vcmask 916480
      %v898 = vsel %vm897, %v890, %v892
      %v899 = vsel %vm897, %v892, %v894
      %v900 = vsel %vm897, %v894, %v896
      %904 = vrot.lane.b32.xlu0 %v696, 111
      %v905 = vpop.permute.xlu0 %904
      %906 = vrot.lane.b32.xlu0 %v705, 111
      %v907 = vpop.permute.xlu0 %906
      %908 = vrot.lane.b32.xlu0 %v706, 111
      %v909 = vpop.permute.xlu0 %908
      %910 = vrot.lane.b32.xlu0 %v716, 111
      %v911 = vpop.permute.xlu0 %910
      %v912 = vsel %vm784, %v905, %v907
      %v913 = vsel %vm784, %v907, %v909
      %v914 = vsel %vm784, %v909, %v911
      %v922 = vrot.slane %v808, 6
      %v923 = vrot.slane %v809, 6
      %v924 = vrot.slane %v810, 6
      %v925 = vrot.slane %v811, 6
      %926 = vrot.lane.b32.xlu0 %v922, 110
      %v927 = vpop.permute.xlu0 %926
      %928 = vrot.lane.b32.xlu0 %v923, 110
      %v929 = vpop.permute.xlu0 %928
      %930 = vrot.lane.b32.xlu0 %v924, 110
      %v931 = vpop.permute.xlu0 %930
      %932 = vrot.lane.b32.xlu0 %v925, 110
      %v933 = vpop.permute.xlu0 %932
      %vm934 = vcmask 900096
      %v935 = vsel %vm934, %v927, %v929
      %v936 = vsel %vm934, %v929, %v931
      %v937 = vsel %vm934, %v931, %v933
      %v945 = vrot.slane %v825, 4
      %v946 = vrot.slane %v826, 4
      %v947 = vrot.slane %v827, 4
      %v948 = vrot.slane %v828, 4
      %949 = vrot.lane.b32.xlu0 %v945, 96
      %v950 = vpop.permute.xlu0 %949
      %951 = vrot.lane.b32.xlu0 %v946, 96
      %v952 = vpop.permute.xlu0 %951
      %953 = vrot.lane.b32.xlu0 %v947, 96
      %v954 = vpop.permute.xlu0 %953
      %955 = vrot.lane.b32.xlu0 %v948, 96
      %v956 = vpop.permute.xlu0 %955
      %vm957 = vcmask 785408
      %v958 = vsel %vm957, %v950, %v952
      %v959 = vsel %vm957, %v952, %v954
      %v960 = vsel %vm957, %v954, %v956
      %v964 = vrot.slane %v705, 2
      %v965 = vrot.slane %v706, 2
      %v966 = vrot.slane %v716, 2
      %967 = vrot.lane.b32.xlu0 %v964, 95
      %v968 = vpop.permute.xlu0 %967
      %969 = vrot.lane.b32.xlu0 %v965, 95
      %v970 = vpop.permute.xlu0 %969
      %971 = vrot.lane.b32.xlu0 %v966, 95
      %v972 = vpop.permute.xlu0 %971
      %v973 = vsel %vm739, %v968, %v970
      %v974 = vsel %vm739, %v970, %v972
      %981 = vrot.lane.b32.xlu0 %v841, 94
      %v982 = vpop.permute.xlu0 %981
      %983 = vrot.lane.b32.xlu0 %v842, 94
      %v984 = vpop.permute.xlu0 %983
      %985 = vrot.lane.b32.xlu0 %v843, 94
      %v986 = vpop.permute.xlu0 %985
      %vm987 = vcmask 769024
      %v988 = vsel %vm987, %v982, %v984
      %v989 = vsel %vm987, %v984, %v986
      %vm990 = vcmask 1041408
      %v991 = vsel %vm990, %v745, %v853
      %v992 = vsel %vm990, %v746, %v854
      %v993 = vsel %vm990, %v747, %v852
      %vm994 = vcmask 1043456
      %v995 = vsel %vm994, %v991, %v875
      %v996 = vsel %vm994, %v992, %v876
      %v997 = vsel %vm994, %v993, %v877
      %vm998 = vcmask 1045504
      %v999 = vsel %vm998, %v995, %v898
      %v1000 = vsel %vm998, %v996, %v899
      %v1001 = vsel %vm998, %v997, %v900
      %v1002 = vsel %vm990, %v912, %v935
      %v1003 = vsel %vm990, %v913, %v936
      %v1004 = vsel %vm990, %v914, %v937
      %v1005 = vsel %vm994, %v1002, %v958
      %v1006 = vsel %vm994, %v1003, %v959
      %v1007 = vsel %vm994, %v1004, %v960
      %v1008 = vsel %vm998, %v1005, %v968
      %v1009 = vsel %vm998, %v1006, %v973
      %v1010 = vsel %vm998, %v1007, %v974
      %v1011 = vld [vmem:[%s5] sm:$0xff]
      %v1012 = vld [vmem:[%s7] sm:$0xff]
      %1014 = vset.pattern.permute.xlu0 0
      %1015 = vperm.xlu0 %1014, %v1012
      %v1016 = vpop.permute.xlu0 %1015
      %1024 = vrot.lane.b32.xlu0 %v999, 33
      %v1025 = vpop.permute.xlu0 %1024
      %1026 = vrot.lane.b32.xlu0 %v1000, 33
      %v1027 = vpop.permute.xlu0 %1026
      %1028 = vrot.lane.b32.xlu0 %v1001, 33
      %v1029 = vpop.permute.xlu0 %1028
      %1030 = vrot.lane.b32.xlu0 %v1008, 33
      %v1031 = vpop.permute.xlu0 %1030
      %1032 = vrot.lane.b32.xlu0 %v1009, 33
      %v1033 = vpop.permute.xlu0 %1032
      %1034 = vrot.lane.b32.xlu0 %v1010, 33
      %v1035 = vpop.permute.xlu0 %1034
      %1036 = vrot.lane.b32.xlu0 %v982, 33
      %v1037 = vpop.permute.xlu0 %1036
      %1038 = vrot.lane.b32.xlu0 %v988, 33
      %v1039 = vpop.permute.xlu0 %1038
      %1040 = vrot.lane.b32.xlu0 %v989, 33
      %v1041 = vpop.permute.xlu0 %1040
      %vm1042 = vcmask 269312
      %v1043 = vsel %vm1042, %v1025, %v1027
      %v1044 = vsel %vm1042, %v1027, %v1029
      %v1045 = vsel %vm1042, %v1031, %v1033
      %v1046 = vsel %vm1042, %v1033, %v1035
      %v1047 = vsel %vm1042, %v1037, %v1039
      %v1048 = vsel %vm1042, %v1039, %v1041
      %vm1055 = vcmask 146432
      %v1057 = vsel %vm1055, %v1011, 0
      %v1059 = vsel %vm990, %v1047, 0
      %v1061 = vsel %vm990, %v1048, 0
      %v1063 = vsel %vm990, %v1041, 0
      %1065 = vmatprep.subr.mxu0 %v1044
      %1066 = vmatpush1.msra.mxu0 %v1043
      %1067 = vmatprep.subr.mxu0 %v1046
      %1068 = vmatpush1.msra.mxu0 %v1045
      %1069 = vmatprep.subr.mxu0 %v1061
      %1070 = vmatpush1.msra.mxu0 %v1059
      %1071 = vmatprep.subr.mxu0 0.0
      %1072 = vmatpush1.msra.mxu0 0.0
      %1073 = vmatprep.subr.mxu0 0.0
      %1074 = vmatpush1.msra.mxu0 0.0
      %1075 = vmatprep.subr.mxu0 0.0
      %1076 = vmatpush1.msra.mxu0 0.0
      %1077 = vmatprep.subr.mxu0 0.0
      %1078 = vmatpush1.msra.mxu0 0.0
      %1079 = vmatprep.subr.mxu0 0.0
      %1080 = vmatpush1.msra.mxu0 0.0
      %1081 = vmatprep.subr.mxu0 0.0
      %1082 = vmatpush1.msra.mxu0 0.0
      %1083 = vmatprep.subr.mxu0 0.0
      %1084 = vmatpush1.msra.mxu0 0.0
      %1085 = vmatprep.subr.mxu0 0.0
      %1086 = vmatpush1.msra.mxu0 0.0
      %1087 = vmatprep.subr.mxu0 0.0
      %1088 = vmatpush1.msra.mxu0 0.0
      %1089 = vmatprep.subr.mxu0 0.0
      %1090 = vmatpush1.msra.mxu0 0.0
      %1091 = vmatprep.subr.mxu0 0.0
      %1092 = vmatpush1.msra.mxu0 0.0
      %1093 = vmatprep.subr.mxu0 0.0
      %1094 = vmatpush1.msra.mxu0 0.0
      %1095 = vmatprep.subr.mxu0 0.0
      %1096 = vmatpush1.msra.mxu0 0.0
      %1097 = vmatprep.subr.mxu0 0.0
      %1098 = vmatpush1.msra.mxu0 0.0
      %1099 = vmatprep.subr.mxu0 0.0
      %1100 = vmatpush1.msra.mxu0 0.0
      %1101 = vmatprep.subr.mxu0 0.0
      %1102 = vmatpush1.msra.mxu0 0.0
      %1103 = vmatprep.subr.mxu0 0.0
      %1104 = vmatpush1.msra.mxu0 0.0
      %1105 = vmatprep.subr.mxu0 0.0
      %1106 = vmatpush1.msra.mxu0 0.0
      %1107 = vmatprep.subr.mxu0 0.0
      %1108 = vmatpush1.msra.mxu0 0.0
      %1109 = vmatprep.subr.mxu0 0.0
      %1110 = vmatpush1.msra.mxu0 0.0
      %1111 = vmatprep.subr.mxu0 0.0
      %1112 = vmatpush1.msra.mxu0 0.0
      %1113 = vmatprep.subr.mxu0 0.0
      %1114 = vmatpush1.msra.mxu0 0.0
      %1115 = vmatprep.subr.mxu0 0.0
      %1116 = vmatpush1.msra.mxu0 0.0
      %1117 = vmatprep.subr.mxu0 0.0
      %1118 = vmatpush1.msra.mxu0 0.0
      %1119 = vmatprep.subr.mxu0 0.0
      %1120 = vmatpush1.msra.mxu0 0.0
      %1121 = vmatprep.subr.mxu0 0.0
      %1122 = vmatpush1.msra.mxu0 0.0
      %1123 = vmatprep.subr.mxu0 0.0
      %1124 = vmatpush1.msra.mxu0 0.0
      %1125 = vmatprep.subr.mxu0 0.0
      %1126 = vmatpush1.msra.mxu0 0.0
      %1127 = vmatprep.subr.mxu0 0.0
      %1128 = vmatpush1.msra.mxu0 0.0
      %1129 = vmatprep.mubr.f32.mxu0 0.0
      %1130 = vmatmul.mubr.f32.gmra.mrb[0].mxu0 %v1057
      %v1131 = vpop.f32.mrb[0].mxu0
      %v1132 = vadd.f32 %v1016, %v1131
      %v1133 = vpop.f32.mrb[0].mxu0
      %v1134 = vadd.f32 %v1016, %v1133
      %1135 = vdwg.mxu0
      %1136 = vmatprep.subr.mxu0 0.0
      %1137 = vmatpush1.msra.mxu0 %v1029
      %1138 = vmatprep.subr.mxu0 0.0
      %1139 = vmatpush1.msra.mxu0 %v1035
      %1140 = vmatprep.subr.mxu0 0.0
      %1141 = vmatpush1.msra.mxu0 %v1063
      %1142 = vmatprep.subr.mxu0 0.0
      %1143 = vmatpush1.msra.mxu0 0.0
      %1144 = vmatprep.subr.mxu0 0.0
      %1145 = vmatpush1.msra.mxu0 0.0
      %1146 = vmatprep.subr.mxu0 0.0
      %1147 = vmatpush1.msra.mxu0 0.0
      %1148 = vmatprep.subr.mxu0 0.0
      %1149 = vmatpush1.msra.mxu0 0.0
      %1150 = vmatprep.subr.mxu0 0.0
      %1151 = vmatpush1.msra.mxu0 0.0
      %1152 = vmatprep.subr.mxu0 0.0
      %1153 = vmatpush1.msra.mxu0 0.0
      %1154 = vmatprep.subr.mxu0 0.0
      %1155 = vmatpush1.msra.mxu0 0.0
      %1156 = vmatprep.subr.mxu0 0.0
      %1157 = vmatpush1.msra.mxu0 0.0
      %1158 = vmatprep.subr.mxu0 0.0
      %1159 = vmatpush1.msra.mxu0 0.0
      %1160 = vmatprep.subr.mxu0 0.0
      %1161 = vmatpush1.msra.mxu0 0.0
      %1162 = vmatprep.subr.mxu0 0.0
      %1163 = vmatpush1.msra.mxu0 0.0
      %1164 = vmatprep.subr.mxu0 0.0
      %1165 = vmatpush1.msra.mxu0 0.0
      %1166 = vmatprep.subr.mxu0 0.0
      %1167 = vmatpush1.msra.mxu0 0.0
      %1168 = vmatprep.subr.mxu0 0.0
      %1169 = vmatpush1.msra.mxu0 0.0
      %1170 = vmatprep.subr.mxu0 0.0
      %1171 = vmatpush1.msra.mxu0 0.0
      %1172 = vmatprep.subr.mxu0 0.0
      %1173 = vmatpush1.msra.mxu0 0.0
      %1174 = vmatprep.subr.mxu0 0.0
      %1175 = vmatpush1.msra.mxu0 0.0
      %1176 = vmatprep.subr.mxu0 0.0
      %1177 = vmatpush1.msra.mxu0 0.0
      %1178 = vmatprep.subr.mxu0 0.0
      %1179 = vmatpush1.msra.mxu0 0.0
      %1180 = vmatprep.subr.mxu0 0.0
      %1181 = vmatpush1.msra.mxu0 0.0
      %1182 = vmatprep.subr.mxu0 0.0
      %1183 = vmatpush1.msra.mxu0 0.0
      %1184 = vmatprep.subr.mxu0 0.0
      %1185 = vmatpush1.msra.mxu0 0.0
      %1186 = vmatprep.subr.mxu0 0.0
      %1187 = vmatpush1.msra.mxu0 0.0
      %1188 = vmatprep.subr.mxu0 0.0
      %1189 = vmatpush1.msra.mxu0 0.0
      %1190 = vmatprep.subr.mxu0 0.0
      %1191 = vmatpush1.msra.mxu0 0.0
      %1192 = vmatprep.subr.mxu0 0.0
      %1193 = vmatpush1.msra.mxu0 0.0
      %1194 = vmatprep.subr.mxu0 0.0
      %1195 = vmatpush1.msra.mxu0 0.0
      %1196 = vmatprep.subr.mxu0 0.0
      %1197 = vmatpush1.msra.mxu0 0.0
      %1198 = vmatprep.subr.mxu0 0.0
      %1199 = vmatpush1.msra.mxu0 0.0
      %1200 = vmatprep.mubr.f32.mxu0 0.0
      %1201 = vmatmul.mubr.f32.gmra.mrb[0].mxu0 %v1057
      %v1202 = vpop.f32.mrb[0].mxu0
      %v1203 = vadd.f32 %v1016, %v1202
      %v1204 = vpop.f32.mrb[0].mxu0
      %1205 = vdwg.mxu0
      %v1206 = vmax.f32 %v1132, 0.0
      %v1207 = vmax.f32 %v1134, 0.0
      %v1208 = vmax.f32 %v1203, 0.0
      %v1209 = vlaneseq
      %v1210 = vand.u32 %v1209, 127
      %v1211 = vadd.s32 %v1210, 128
      %v1212 = vadd.s32 %v1210, 256
      %p1213 = scmp.ne.s32.totalorder %s30, 0
      %vm1214 = vcmp.ge.s32.totalorder %v1210, 16
      %vm1215 = vcmp.ge.s32.totalorder %v1211, 16
      %vm1216 = vcmp.ge.s32.totalorder %v1212, 16
      %s1217 = scalar_select %p1213, 1, 0
      %v1218 = vstv %s1217
      %vm1219 = vcmp.eq.s32.totalorder %v1218, 1
      %vm1220 = vmor %vm1219, %vm1214
      %vm1221 = vmor %vm1219, %vm1215
      %vm1222 = vmor %vm1219, %vm1216
      %vm1223 = vcmp.lt.s32.totalorder %v1210, 272
      %vm1224 = vcmp.lt.s32.totalorder %v1211, 272
      %vm1225 = vcmp.lt.s32.totalorder %v1212, 272
      %vm1226 = vmor %vm1219, %vm1223
      %vm1227 = vmor %vm1219, %vm1224
      %vm1228 = vmor %vm1219, %vm1225
      %vm1229 = vmand %vm1220, %vm1226
      %vm1230 = vmand %vm1221, %vm1227
      %vm1231 = vmand %vm1222, %vm1228
      %v1232 = vsel %vm1229, 1, 0
      %v1233 = vsel %vm1230, 1, 0
      %v1234 = vsel %vm1231, 1, 0
      %vm1235 = vcmp.eq.s32.totalorder %v1232, 1
      %vm1236 = vcmp.eq.s32.totalorder %v1233, 1
      %vm1237 = vcmp.eq.s32.totalorder %v1234, 1
      %v1238 = vsel %vm1235, %v1206, 0.0
      %v1239 = vsel %vm1236, %v1207, 0.0
      %v1240 = vsel %vm1237, %v1208, 0.0
      %v1241 = vld [vmem:[%s6] sm:$0xff]
      %v1242 = vld [vmem:[%s6 + $0x8] sm:$0xff]
      %v1243 = vld [vmem:[%s6 + $0x10] sm:$0x3]
      %vm1244 = vcmask 64512
      %v1246 = vsel %vm1244, %v1241, 0
      %v1249 = vsel %vm1244, %v1242, 0
      %v1252 = vsel %vm1244, %v1243, 0
      %1254 = vmatprep.subr.mxu0 %v1239
      %1255 = vmatpush1.msra.mxu0 %v1238
      %1256 = vmatprep.subr.mxu0 0.0
      %1257 = vmatpush1.msra.mxu0 0.0
      %1258 = vmatprep.subr.mxu0 0.0
      %1259 = vmatpush1.msra.mxu0 0.0
      %1260 = vmatprep.subr.mxu0 0.0
      %1261 = vmatpush1.msra.mxu0 0.0
      %1262 = vmatprep.subr.mxu0 0.0
      %1263 = vmatpush1.msra.mxu0 0.0
      %1264 = vmatprep.subr.mxu0 0.0
      %1265 = vmatpush1.msra.mxu0 0.0
      %1266 = vmatprep.subr.mxu0 0.0
      %1267 = vmatpush1.msra.mxu0 0.0
      %1268 = vmatprep.subr.mxu0 0.0
      %1269 = vmatpush1.msra.mxu0 0.0
      %1270 = vmatprep.subr.mxu0 0.0
      %1271 = vmatpush1.msra.mxu0 0.0
      %1272 = vmatprep.subr.mxu0 0.0
      %1273 = vmatpush1.msra.mxu0 0.0
      %1274 = vmatprep.subr.mxu0 0.0
      %1275 = vmatpush1.msra.mxu0 0.0
      %1276 = vmatprep.subr.mxu0 0.0
      %1277 = vmatpush1.msra.mxu0 0.0
      %1278 = vmatprep.subr.mxu0 0.0
      %1279 = vmatpush1.msra.mxu0 0.0
      %1280 = vmatprep.subr.mxu0 0.0
      %1281 = vmatpush1.msra.mxu0 0.0
      %1282 = vmatprep.subr.mxu0 0.0
      %1283 = vmatpush1.msra.mxu0 0.0
      %1284 = vmatprep.subr.mxu0 0.0
      %1285 = vmatpush1.msra.mxu0 0.0
      %1286 = vmatprep.subr.mxu0 0.0
      %1287 = vmatpush1.msra.mxu0 0.0
      %1288 = vmatprep.subr.mxu0 0.0
      %1289 = vmatpush1.msra.mxu0 0.0
      %1290 = vmatprep.subr.mxu0 0.0
      %1291 = vmatpush1.msra.mxu0 0.0
      %1292 = vmatprep.subr.mxu0 0.0
      %1293 = vmatpush1.msra.mxu0 0.0
      %1294 = vmatprep.subr.mxu0 0.0
      %1295 = vmatpush1.msra.mxu0 0.0
      %1296 = vmatprep.subr.mxu0 0.0
      %1297 = vmatpush1.msra.mxu0 0.0
      %1298 = vmatprep.subr.mxu0 0.0
      %1299 = vmatpush1.msra.mxu0 0.0
      %1300 = vmatprep.subr.mxu0 0.0
      %1301 = vmatpush1.msra.mxu0 0.0
      %1302 = vmatprep.subr.mxu0 0.0
      %1303 = vmatpush1.msra.mxu0 0.0
      %1304 = vmatprep.subr.mxu0 0.0
      %1305 = vmatpush1.msra.mxu0 0.0
      %1306 = vmatprep.subr.mxu0 0.0
      %1307 = vmatpush1.msra.mxu0 0.0
      %1308 = vmatprep.subr.mxu0 0.0
      %1309 = vmatpush1.msra.mxu0 0.0
      %1310 = vmatprep.subr.mxu0 0.0
      %1311 = vmatpush1.msra.mxu0 0.0
      %1312 = vmatprep.subr.mxu0 0.0
      %1313 = vmatpush1.msra.mxu0 0.0
      %1314 = vmatprep.subr.mxu0 0.0
      %1315 = vmatpush1.msra.mxu0 0.0
      %1316 = vmatprep.subr.mxu0 0.0
      %1317 = vmatpush1.msra.mxu0 0.0
      %1318 = vmatprep.mubr.f32.mxu0 0.0
      %1319 = vmatmul.mubr.f32.gmra.mrb[0].mxu0 %v1246
      %v1320 = vpop.f32.mrb[0].mxu0
      %v1321 = vadd.f32 0.0, %v1320
      %v1322 = vpop.f32.mrb[0].mxu0
      %v1323 = vadd.f32 0.0, %v1322
      %1324 = vmatprep.mubr.f32.mxu0 0.0
      %1325 = vmatmul.mubr.f32.gmra.mrb[0].mxu0 %v1249
      %v1326 = vpop.f32.mrb[0].mxu0
      %v1327 = vadd.f32 0.0, %v1326
      %v1328 = vpop.f32.mrb[0].mxu0
      %v1329 = vadd.f32 0.0, %v1328
      %1330 = vmatprep.mubr.f32.mxu0 0.0
      %1331 = vmatmul.mubr.f32.gmra.mrb[0].mxu0 %v1252
      %v1332 = vpop.f32.mrb[0].mxu0
      %v1333 = vadd.f32 0.0, %v1332
      %v1334 = vpop.f32.mrb[0].mxu0
      %v1335 = vadd.f32 0.0, %v1334
      %1336 = vdwg.mxu0
      %1337 = vmatprep.subr.mxu0 0.0
      %1338 = vmatpush1.msra.mxu0 %v1240
      %1339 = vmatprep.subr.mxu0 0.0
      %1340 = vmatpush1.msra.mxu0 0.0
      %1341 = vmatprep.subr.mxu0 0.0
      %1342 = vmatpush1.msra.mxu0 0.0
      %1343 = vmatprep.subr.mxu0 0.0
      %1344 = vmatpush1.msra.mxu0 0.0
      %1345 = vmatprep.subr.mxu0 0.0
      %1346 = vmatpush1.msra.mxu0 0.0
      %1347 = vmatprep.subr.mxu0 0.0
      %1348 = vmatpush1.msra.mxu0 0.0
      %1349 = vmatprep.subr.mxu0 0.0
      %1350 = vmatpush1.msra.mxu0 0.0
      %1351 = vmatprep.subr.mxu0 0.0
      %1352 = vmatpush1.msra.mxu0 0.0
      %1353 = vmatprep.subr.mxu0 0.0
      %1354 = vmatpush1.msra.mxu0 0.0
      %1355 = vmatprep.subr.mxu0 0.0
      %1356 = vmatpush1.msra.mxu0 0.0
      %1357 = vmatprep.subr.mxu0 0.0
      %1358 = vmatpush1.msra.mxu0 0.0
      %1359 = vmatprep.subr.mxu0 0.0
      %1360 = vmatpush1.msra.mxu0 0.0
      %1361 = vmatprep.subr.mxu0 0.0
      %1362 = vmatpush1.msra.mxu0 0.0
      %1363 = vmatprep.subr.mxu0 0.0
      %1364 = vmatpush1.msra.mxu0 0.0
      %1365 = vmatprep.subr.mxu0 0.0
      %1366 = vmatpush1.msra.mxu0 0.0
      %1367 = vmatprep.subr.mxu0 0.0
      %1368 = vmatpush1.msra.mxu0 0.0
      %1369 = vmatprep.subr.mxu0 0.0
      %1370 = vmatpush1.msra.mxu0 0.0
      %1371 = vmatprep.subr.mxu0 0.0
      %1372 = vmatpush1.msra.mxu0 0.0
      %1373 = vmatprep.subr.mxu0 0.0
      %1374 = vmatpush1.msra.mxu0 0.0
      %1375 = vmatprep.subr.mxu0 0.0
      %1376 = vmatpush1.msra.mxu0 0.0
      %1377 = vmatprep.subr.mxu0 0.0
      %1378 = vmatpush1.msra.mxu0 0.0
      %1379 = vmatprep.subr.mxu0 0.0
      %1380 = vmatpush1.msra.mxu0 0.0
      %1381 = vmatprep.subr.mxu0 0.0
      %1382 = vmatpush1.msra.mxu0 0.0
      %1383 = vmatprep.subr.mxu0 0.0
      %1384 = vmatpush1.msra.mxu0 0.0
      %1385 = vmatprep.subr.mxu0 0.0
      %1386 = vmatpush1.msra.mxu0 0.0
      %1387 = vmatprep.subr.mxu0 0.0
      %1388 = vmatpush1.msra.mxu0 0.0
      %1389 = vmatprep.subr.mxu0 0.0
      %1390 = vmatpush1.msra.mxu0 0.0
      %1391 = vmatprep.subr.mxu0 0.0
      %1392 = vmatpush1.msra.mxu0 0.0
      %1393 = vmatprep.subr.mxu0 0.0
      %1394 = vmatpush1.msra.mxu0 0.0
      %1395 = vmatprep.subr.mxu0 0.0
      %1396 = vmatpush1.msra.mxu0 0.0
      %1397 = vmatprep.subr.mxu0 0.0
      %1398 = vmatpush1.msra.mxu0 0.0
      %1399 = vmatprep.subr.mxu0 0.0
      %1400 = vmatpush1.msra.mxu0 0.0
      %1401 = vmatprep.mubr.f32.mxu0 0.0
      %1402 = vmatmul.mubr.f32.gmra.mrb[0].mxu0 %v1246
      %v1403 = vpop.f32.mrb[0].mxu0
      %v1404 = vadd.f32 0.0, %v1403
      %v1405 = vpop.f32.mrb[0].mxu0
      %1406 = vmatprep.mubr.f32.mxu0 0.0
      %1407 = vmatmul.mubr.f32.gmra.mrb[0].mxu0 %v1249
      %v1408 = vpop.f32.mrb[0].mxu0
      %v1409 = vadd.f32 0.0, %v1408
      %v1410 = vpop.f32.mrb[0].mxu0
      %1411 = vmatprep.mubr.f32.mxu0 0.0
      %1412 = vmatmul.mubr.f32.gmra.mrb[0].mxu0 %v1252
      %v1413 = vpop.f32.mrb[0].mxu0
      %v1414 = vadd.f32 0.0, %v1413
      %v1415 = vpop.f32.mrb[0].mxu0
      %1416 = vdwg.mxu0
      %1426 = vrot.lane.b32.xlu0 %v1321, 1
      %v1427 = vpop.permute.xlu0 %1426
      %1428 = vrot.lane.b32.xlu0 %v1323, 1
      %v1429 = vpop.permute.xlu0 %1428
      %1430 = vrot.lane.b32.xlu0 %v1404, 1
      %v1431 = vpop.permute.xlu0 %1430
      %1432 = vrot.lane.b32.xlu0 %v1327, 1
      %v1433 = vpop.permute.xlu0 %1432
      %1434 = vrot.lane.b32.xlu0 %v1329, 1
      %v1435 = vpop.permute.xlu0 %1434
      %1436 = vrot.lane.b32.xlu0 %v1409, 1
      %v1437 = vpop.permute.xlu0 %1436
      %1438 = vrot.lane.b32.xlu0 %v1333, 1
      %v1439 = vpop.permute.xlu0 %1438
      %1440 = vrot.lane.b32.xlu0 %v1335, 1
      %v1441 = vpop.permute.xlu0 %1440
      %1442 = vrot.lane.b32.xlu0 %v1414, 1
      %v1443 = vpop.permute.xlu0 %1442
      %v1444 = vsel %vm835, %v1427, %v1429
      %v1445 = vsel %vm835, %v1429, %v1431
      %v1446 = vsel %vm835, %v1433, %v1435
      %v1447 = vsel %vm835, %v1435, %v1437
      %v1448 = vsel %vm835, %v1439, %v1441
      %v1449 = vsel %vm835, %v1441, %v1443
      %v1459 = vsel %vm835, 0.0, %v1427
      %v1460 = vsel %vm835, 0.0, %v1433
      %v1461 = vsel %vm835, 0.0, %v1439
      %v1462 = vsel %vm1042, %v1445, 0.0
      %v1463 = vsel %vm1042, %v1447, 0.0
      %v1464 = vsel %vm1042, %v1449, 0.0
      %v1467 = vmul.f32 %v1459, %v724
      %v1468 = vmul.f32 %v1444, %v728
      %v1469 = vadd.f32 %v1467, 0.0
      %v1470 = vadd.f32 %v1468, 0.0
      %v1473 = vrot.slane %v1459, 2
      %v1474 = vrot.slane %v1444, 2
      %v1475 = vrot.slane %v1462, 2
      %1476 = vrot.lane.b32.xlu0 %v1473, 127
      %v1477 = vpop.permute.xlu0 %1476
      %1478 = vrot.lane.b32.xlu0 %v1474, 127
      %v1479 = vpop.permute.xlu0 %1478
      %1480 = vrot.lane.b32.xlu0 %v1475, 127
      %v1481 = vpop.permute.xlu0 %1480
      %v1482 = vsel %vm818, %v1477, %v1479
      %v1483 = vsel %vm818, %v1479, %v1481
      %v1486 = vadd.f32 %v1469, %v1482
      %v1487 = vadd.f32 %v1470, %v1483
      %1488 = vrot.lane.b32.xlu0 %v752, 2
      %v1489 = vpop.permute.xlu0 %1488
      %1490 = vrot.lane.b32.xlu0 %v756, 2
      %v1491 = vpop.permute.xlu0 %1490
      %vm1492 = vcmask 15360
      %v1493 = vsel %vm1492, %v1489, %v1491
      %v1497 = vmul.f32 %v1459, %v1489
      %v1498 = vmul.f32 %v1444, %v1493
      %v1499 = vmul.f32 %v1462, %v1491
      %v1503 = vrot.slane %v1497, 4
      %v1504 = vrot.slane %v1498, 4
      %v1505 = vrot.slane %v1499, 4
      %1506 = vrot.lane.b32.xlu0 %v1503, 126
      %v1507 = vpop.permute.xlu0 %1506
      %1508 = vrot.lane.b32.xlu0 %v1504, 126
      %v1509 = vpop.permute.xlu0 %1508
      %1510 = vrot.lane.b32.xlu0 %v1505, 126
      %v1511 = vpop.permute.xlu0 %1510
      %v1512 = vsel %vm874, %v1507, %v1509
      %v1513 = vsel %vm874, %v1509, %v1511
      %v1516 = vadd.f32 %v1486, %v1512
      %v1517 = vadd.f32 %v1487, %v1513
      %1518 = vrot.lane.b32.xlu0 %v724, 16
      %v1519 = vpop.permute.xlu0 %1518
      %1520 = vrot.lane.b32.xlu0 %v728, 16
      %v1521 = vpop.permute.xlu0 %1520
      %vm1522 = vcmask 130048
      %v1523 = vsel %vm1522, %v1519, %v1521
      %v1527 = vmul.f32 %v1459, %v1519
      %v1528 = vmul.f32 %v1444, %v1523
      %v1529 = vmul.f32 %v1462, %v1521
      %v1533 = vrot.slane %v1527, 6
      %v1534 = vrot.slane %v1528, 6
      %v1535 = vrot.slane %v1529, 6
      %1536 = vrot.lane.b32.xlu0 %v1533, 112
      %v1537 = vpop.permute.xlu0 %1536
      %1538 = vrot.lane.b32.xlu0 %v1534, 112
      %v1539 = vpop.permute.xlu0 %1538
      %1540 = vrot.lane.b32.xlu0 %v1535, 112
      %v1541 = vpop.permute.xlu0 %1540
      %v1542 = vsel %vm897, %v1537, %v1539
      %v1543 = vsel %vm897, %v1539, %v1541
      %v1546 = vadd.f32 %v1516, %v1542
      %v1547 = vadd.f32 %v1517, %v1543
      %1550 = vrot.lane.b32.xlu0 %v1460, 111
      %v1551 = vpop.permute.xlu0 %1550
      %1552 = vrot.lane.b32.xlu0 %v1446, 111
      %v1553 = vpop.permute.xlu0 %1552
      %1554 = vrot.lane.b32.xlu0 %v1463, 111
      %v1555 = vpop.permute.xlu0 %1554
      %v1556 = vsel %vm784, %v1551, %v1553
      %v1557 = vsel %vm784, %v1553, %v1555
      %v1560 = vadd.f32 %v1546, %v1556
      %v1561 = vadd.f32 %v1547, %v1557
      %1562 = vrot.lane.b32.xlu0 %v752, 18
      %v1563 = vpop.permute.xlu0 %1562
      %1564 = vrot.lane.b32.xlu0 %v756, 18
      %v1565 = vpop.permute.xlu0 %1564
      %v1566 = vsel %vm1055, %v1563, %v1565
      %v1570 = vmul.f32 %v1460, %v1563
      %v1571 = vmul.f32 %v1446, %v1566
      %v1572 = vmul.f32 %v1463, %v1565
      %v1576 = vrot.slane %v1570, 2
      %v1577 = vrot.slane %v1571, 2
      %v1578 = vrot.slane %v1572, 2
      %1579 = vrot.lane.b32.xlu0 %v1576, 110
      %v1580 = vpop.permute.xlu0 %1579
      %1581 = vrot.lane.b32.xlu0 %v1577, 110
      %v1582 = vpop.permute.xlu0 %1581
      %1583 = vrot.lane.b32.xlu0 %v1578, 110
      %v1584 = vpop.permute.xlu0 %1583
      %v1585 = vsel %vm934, %v1580, %v1582
      %v1586 = vsel %vm934, %v1582, %v1584
      %v1589 = vadd.f32 %v1560, %v1585
      %v1590 = vadd.f32 %v1561, %v1586
      %1591 = vrot.lane.b32.xlu0 %v724, 32
      %v1592 = vpop.permute.xlu0 %1591
      %1593 = vrot.lane.b32.xlu0 %v728, 32
      %v1594 = vpop.permute.xlu0 %1593
      %vm1595 = vcmask 261120
      %v1596 = vsel %vm1595, %v1592, %v1594
      %v1600 = vmul.f32 %v1460, %v1592
      %v1601 = vmul.f32 %v1446, %v1596
      %v1602 = vmul.f32 %v1463, %v1594
      %v1606 = vrot.slane %v1600, 4
      %v1607 = vrot.slane %v1601, 4
      %v1608 = vrot.slane %v1602, 4
      %1609 = vrot.lane.b32.xlu0 %v1606, 96
      %v1610 = vpop.permute.xlu0 %1609
      %1611 = vrot.lane.b32.xlu0 %v1607, 96
      %v1612 = vpop.permute.xlu0 %1611
      %1613 = vrot.lane.b32.xlu0 %v1608, 96
      %v1614 = vpop.permute.xlu0 %1613
      %v1615 = vsel %vm957, %v1610, %v1612
      %v1616 = vsel %vm957, %v1612, %v1614
      %v1619 = vadd.f32 %v1589, %v1615
      %v1620 = vadd.f32 %v1590, %v1616
      %v1621 = vrot.slane %v1460, 6
      %v1622 = vrot.slane %v1446, 6
      %v1623 = vrot.slane %v1463, 6
      %1624 = vrot.lane.b32.xlu0 %v1621, 95
      %v1625 = vpop.permute.xlu0 %1624
      %1626 = vrot.lane.b32.xlu0 %v1622, 95
      %v1627 = vpop.permute.xlu0 %1626
      %1628 = vrot.lane.b32.xlu0 %v1623, 95
      %v1629 = vpop.permute.xlu0 %1628
      %v1630 = vsel %vm739, %v1625, %v1627
      %v1631 = vsel %vm739, %v1627, %v1629
      %v1634 = vadd.f32 %v1619, %v1630
      %v1635 = vadd.f32 %v1620, %v1631
      %1636 = vrot.lane.b32.xlu0 %v752, 34
      %v1637 = vpop.permute.xlu0 %1636
      %1638 = vrot.lane.b32.xlu0 %v756, 34
      %v1639 = vpop.permute.xlu0 %1638
      %vm1640 = vcmask 277504
      %v1641 = vsel %vm1640, %v1637, %v1639
      %v1645 = vmul.f32 %v1461, %v1637
      %v1646 = vmul.f32 %v1448, %v1641
      %v1647 = vmul.f32 %v1464, %v1639
      %1651 = vrot.lane.b32.xlu0 %v1645, 94
      %v1652 = vpop.permute.xlu0 %1651
      %1653 = vrot.lane.b32.xlu0 %v1646, 94
      %v1654 = vpop.permute.xlu0 %1653
      %1655 = vrot.lane.b32.xlu0 %v1647, 94
      %v1656 = vpop.permute.xlu0 %1655
      %v1657 = vsel %vm987, %v1652, %v1654
      %v1658 = vsel %vm987, %v1654, %v1656
      %v1661 = vadd.f32 %v1634, %v1657
      %v1662 = vadd.f32 %v1635, %v1658
      %v1663 = vld [vmem:[%s8] sm:$0x3]
      %1665 = vset.pattern.permute.xlu0 0
      %1666 = vperm.xlu0 %1665, %v1663
      %v1667 = vpop.permute.xlu0 %1666
      %v1669 = vadd.f32 %v1661, %v1667
      %v1670 = vadd.f32 %v1662, %v1667
      %v1673 = vcombine.low %v1669, %v1670
      %v1675 = vunpack.c.l.s4 1983009808
      %v1676 = vunpack.c.0.s8 %v1675
      %v1677 = vlaneseq
      %v1678 = vshrl.u32 %v1677, 7
      %v1679 = vsub.s32 %v1676, %v1678
      %v1680 = vrot.slane %v1673, %v1679
      %v1682 = vsub.f32 %v686, %v1680
      %1683 = vst [vmem:[%s663] sm:$0xf] %v1682
      %v1684 = vld [vmem:[%s643] sm:$0xff]
      %v1685 = vld [vmem:[%s653] sm:$0xff]
      %v1687 = vlaneseq
      %v1688 = vshrl.u32 %v1687, 7
      %v1689 = vsub.s32 0, %v1688
      %v1690 = vrot.slane %v1682, %v1689
      %v1691 = vlaneseq
      %v1692 = vshrl.u32 %v1691, 7
      %v1693 = vsub.s32 2, %v1692
      %v1694 = vrot.slane %v1682, %v1693
      %v1697 = vlaneseq
      %v1698 = vshrl.u32 %v1697, 7
      %v1699 = vsub.s32 0, %v1698
      %v1700 = vrot.slane %v1690, %v1699
      %v1701 = vlaneseq
      %v1702 = vshrl.u32 %v1701, 7
      %v1703 = vsub.s32 0, %v1702
      %v1704 = vrot.slane %v1694, %v1703
      %v1707 = vcombine.low %v1700, %v1704
      %v1709 = vmul.f32 %v1684, %v1707
      %v1710 = vlaneseq
      %v1711 = vshrl.u32 %v1710, 7
      %v1712 = vsub.s32 1, %v1711
      %v1713 = vrot.slane %v1682, %v1712
      %v1714 = vlaneseq
      %v1715 = vshrl.u32 %v1714, 7
      %v1716 = vsub.s32 3, %v1715
      %v1717 = vrot.slane %v1682, %v1716
      %v1720 = vlaneseq
      %v1721 = vshrl.u32 %v1720, 7
      %v1722 = vsub.s32 1, %v1721
      %v1723 = vrot.slane %v1713, %v1722
      %v1724 = vlaneseq
      %v1725 = vshrl.u32 %v1724, 7
      %v1726 = vsub.s32 1, %v1725
      %v1727 = vrot.slane %v1717, %v1726
      %v1730 = vcombine.low %v1723, %v1727
      %v1732 = vmul.f32 %v1685, %v1730
      %v1733 = vsub.f32 %v1709, %v1732
      %1734 = vst [vmem:[%s673] sm:$0xff] %v1733
      %v1735 = vmul.f32 %v1684, %v1730
      %v1736 = vmul.f32 %v1685, %v1707
      %v1737 = vadd.f32 %v1735, %v1736
      %1738 = vst [vmem:[%s683] sm:$0xff] %v1737
      %s1739 = smul.u32 2, %s30
      %p1740 = scmp.lt.s32.totalorder %s29, 1
      %s1741 = scalar_select %p1740, %s29, 1
      %p1742 = scmp.lt.s32.totalorder %s1739, 1
      %s1743 = scalar_select %p1742, %s1739, 1
      %s1744 = smul.addr %s1741, 2
      %s1745 = sadd.s32 %s1743, %s1744
      %s1746 = smul.addr %s1745, 2
      %s1747 = scalar_lea.vmem %s11, %s1746
      %s1748 = smul.u32 2, %s30
      %p1749 = scmp.lt.s32.totalorder %s29, 1
      %s1750 = scalar_select %p1749, %s29, 1
      %p1751 = scmp.lt.s32.totalorder %s1748, 1
      %s1752 = scalar_select %p1751, %s1748, 1
      %s1753 = smul.addr %s1750, 2
      %s1754 = sadd.s32 %s1752, %s1753
      %s1755 = smul.addr %s1754, 4
      %s1756 = scalar_lea.vmem %s12, %s1755
      %s1757 = smul.u32 2, %s30
      %p1758 = scmp.lt.s32.totalorder %s29, 1
      %s1759 = scalar_select %p1758, %s29, 1
      %p1760 = scmp.lt.s32.totalorder %s1757, 1
      %s1761 = scalar_select %p1760, %s1757, 1
      %s1762 = smul.addr %s1759, 2
      %s1763 = sadd.s32 %s1761, %s1762
      %s1764 = smul.addr %s1763, 4
      %s1765 = scalar_lea.vmem %s13, %s1764
      // Predicated region
      $region65: #{mwdunet_forward.4} parent=63 // pred_check
        %p1766 = pneg %p327
      $region66: #{mwdunet_forward.4} parent=63 // pred_check_branch
        %1768 = sbr.rel (%p1766) target = $region68
      $region67: #{mwdunet_forward.4} parent=63 // pred_region
        %s1769 = smul.u32 2, %s30
      $region68: #{mwdunet_forward.4} parent=63 // pred_fallthru
        _
      // Predicated region
      $region69: #{mwdunet_forward.4} parent=63 // pred_check
        %p1770 = pneg %p355
      $region70: #{mwdunet_forward.4} parent=63 // pred_check_branch
        %1772 = sbr.rel (%p1770) target = $region72
      $region71: #{mwdunet_forward.4} parent=63 // pred_region
        %s1773 = smul.u32 2, %s30
      $region72: #{mwdunet_forward.4} parent=63 // pred_fallthru
        _
      // Predicated region
      $region73: #{mwdunet_forward.4} parent=63 // pred_check
        %p1774 = pneg %p383
      $region74: #{mwdunet_forward.4} parent=63 // pred_check_branch
        %1776 = sbr.rel (%p1774) target = $region76
      $region75: #{mwdunet_forward.4} parent=63 // pred_region
        %s1777 = smul.u32 2, %s30
      $region76: #{mwdunet_forward.4} parent=63 // pred_fallthru
        _
    $region64: #{mwdunet_forward.4} parent=5 // pred_fallthru
      _
    %p1778 = scmp.le.s32.totalorder 2, %s20
    // Predicated region
    $region77: #{mwdunet_forward.4} parent=5 // pred_check
      %p1779 = pneg %p1778
    $region78: #{mwdunet_forward.4} parent=5 // pred_check_branch
      %1781 = sbr.rel (%p1779) target = $region80
    $region79: #{mwdunet_forward.4} parent=5 // pred_region
      %s1782 = ssub.s32 %s20, 2
      // Predicated region
      $region81: #{mwdunet_forward.4} parent=79 // pred_check
        %p1783 = pneg %p333
      $region82: #{mwdunet_forward.4} parent=79 // pred_check_branch
        %1785 = sbr.rel (%p1783) target = $region84
      $region83: #{mwdunet_forward.4} parent=79 // pred_region
        %s1786 = smul.u32 2, %s32
        %p1787 = scmp.lt.s32.totalorder %s31, 1
        %s1788 = scalar_select %p1787, %s31, 1
        %p1789 = scmp.lt.s32.totalorder %s1786, 1
        %s1790 = scalar_select %p1789, %s1786, 1
        %s1791 = smul.addr %s1788, 2
        %s1792 = sadd.s32 %s1790, %s1791
        %s1793 = smul.addr %s1792, 2
        %s1794 = scalar_lea.vmem %s11, %s1793
      $region84: #{mwdunet_forward.4} parent=79 // pred_fallthru
        _
      // Predicated region
      $region85: #{mwdunet_forward.4} parent=79 // pred_check
        %p1795 = pneg %p361
      $region86: #{mwdunet_forward.4} parent=79 // pred_check_branch
        %1797 = sbr.rel (%p1795) target = $region88
      $region87: #{mwdunet_forward.4} parent=79 // pred_region
        %s1798 = smul.u32 2, %s32
        %p1799 = scmp.lt.s32.totalorder %s31, 1
        %s1800 = scalar_select %p1799, %s31, 1
        %p1801 = scmp.lt.s32.totalorder %s1798, 1
        %s1802 = scalar_select %p1801, %s1798, 1
        %s1803 = smul.addr %s1800, 2
        %s1804 = sadd.s32 %s1802, %s1803
        %s1805 = smul.addr %s1804, 4
        %s1806 = scalar_lea.vmem %s12, %s1805
      $region88: #{mwdunet_forward.4} parent=79 // pred_fallthru
        _
      // Predicated region
      $region89: #{mwdunet_forward.4} parent=79 // pred_check
        %p1807 = pneg %p389
      $region90: #{mwdunet_forward.4} parent=79 // pred_check_branch
        %1809 = sbr.rel (%p1807) target = $region92
      $region91: #{mwdunet_forward.4} parent=79 // pred_region
        %s1810 = smul.u32 2, %s32
        %p1811 = scmp.lt.s32.totalorder %s31, 1
        %s1812 = scalar_select %p1811, %s31, 1
        %p1813 = scmp.lt.s32.totalorder %s1810, 1
        %s1814 = scalar_select %p1813, %s1810, 1
        %s1815 = smul.addr %s1812, 2
        %s1816 = sadd.s32 %s1814, %s1815
        %s1817 = smul.addr %s1816, 4
        %s1818 = scalar_lea.vmem %s13, %s1817
      $region92: #{mwdunet_forward.4} parent=79 // pred_fallthru
        _
    $region80: #{mwdunet_forward.4} parent=5 // pred_fallthru
      _
  $region6: #{mwdunet_forward.4} parent=0 // loop_footer
    %s24 = sadd.s32 1, %s20
  $region7: #{mwdunet_forward.4} parent=0 // loop_footer_branch
    %19 = sbr.rel target = $region3
  $region8: #{mwdunet_forward.4} parent=0 // loop_exit
    _

// kernel: custom-call.6
$region0: #{custom-call.6}
  %s0 = inlined_call_operand.vmem [shape: f32[2,16,16], index: 0, kind: input, shape index: {}]
  %s1 = inlined_call_operand.vmem [shape: f32[2,16,16], index: 1, kind: input, shape index: {}]
  %s2 = inlined_call_operand.hbm [shape: c64[2,16,16], index: 2, kind: output, shape index: {}]
  %s3 = scalar_lea.hbm %s2, 512
  $region1: #{custom-call.6} parent=0
    #allocation0 [shape = 's32[1]{0}', space=sflag, size = 0x4, scoped, tag = 'scoped memory for custom-call.6']
    %4 = vsyncpa [#allocation0], 0
    %s5 = sshll.u32 %s0, 4
    %s6 = int_to_ptr.vmem [resolvable:$true] %s5
    %8 = dma.vmem_to_hbm [thread:$0]  %s6, 512, %s2, [#allocation0]
    %9 = dma.done [#allocation0], 512
    %10 = vsyncpa [#allocation0], 1
  $region2: #{custom-call.6} parent=0
    #allocation1 [shape = 's32[1]{0}', space=sflag, size = 0x4, scoped, tag = 'scoped memory for custom-call.6']
    %11 = vsyncpa [#allocation1], 0
    %s12 = sshll.u32 %s1, 4
    %s13 = int_to_ptr.vmem [resolvable:$true] %s12
    %15 = dma.vmem_to_hbm [thread:$0]  %s13, 512, %s3, [#allocation1]
    %16 = dma.done [#allocation1], 512
    %17 = vsyncpa [#allocation1], 1

// kernel: mwdunet_forward.5
$region0: #{mwdunet_forward.5}
  #allocation0 [shape = 'u32[]', space=smem, size = 0x4, offset = 0x4, fixed_abs, tag = 'smem constant byte address 0x4 - core index']
  #allocation1 [shape = 'u32[144,128]{1,0:T(1,128)}', space=vmem, size = 0x12000, scoped, tag = 'internal scratch']
  #allocation2 [shape = 'f32[16,16]{1,0:T(8,128)}', space=vmem, size = 0x2000, scoped, tag = 'scratch operand']
  #allocation3 [shape = 'f32[16,16]{1,0:T(8,128)}', space=vmem, size = 0x2000, scoped, tag = 'scratch operand']
  %s0 = inlined_call_operand.vmem [shape: f32[2,4,16,16], index: 0, kind: input, shape index: {}]
  %s1 = inlined_call_operand.vmem [shape: f32[2,4,16,16], index: 1, kind: input, shape index: {}]
  %s2 = inlined_call_operand.vmem [shape: f32[2,4,16,16], index: 2, kind: input, shape index: {}]
  %s3 = inlined_call_operand.vmem [shape: f32[2,4,16,16], index: 3, kind: input, shape index: {}]
  %s4 = inlined_call_operand.vmem [shape: f32[2,2,16,16], index: 4, kind: input, shape index: {}]
  %s5 = inlined_call_operand.vmem [shape: f32[2,2,16,16], index: 5, kind: input, shape index: {}]
  %s6 = inlined_call_operand.vmem [shape: f32[2,2,16,16], index: 6, kind: output, shape index: {}]
  %s7 = sld [smem:[#allocation0]]
  $region65: #{mwdunet_forward.5} parent=0
    _
  %s9 = ssub.s32 1, %s7
  %s10 = scalar_select 0, %s9, %s7
  loop: start=0, step=1, limit=4
  $region2: #{mwdunet_forward.5} parent=0 // loop_pre_header
    _
  $region3: #{mwdunet_forward.5} parent=0 // loop_header
    %s12 = sphi 0, %s16
    %p13 = scmp.ge.s32.totalorder %s12, 4
    %s19 = sphi 0, %s38
    %s20 = sphi 0, %s34
    %s21 = sphi 0, %s30
    %s22 = sphi 0, %s19
    %s23 = sphi 0, %s20
    %s24 = sphi 0, %s21
    %s25 = sphi 0, %s22
    %s26 = sphi 0, %s23
    %s27 = sphi 0, %s24
    %s45 = sphi 0, %s47
    %s48 = sphi 0, %s45
    %s49 = sphi 0, %s48
    %s65 = sphi 0, %s49
    %s75 = sphi 0, %s77
    %s78 = sphi 0, %s75
    %s79 = sphi 0, %s78
    %s95 = sphi 0, %s79
    %s105 = sphi 0, %s107
    %s108 = sphi 0, %s105
    %s109 = sphi 0, %s108
    %s125 = sphi 0, %s109
    %s135 = sphi 0, %s137
    %s138 = sphi 0, %s135
    %s139 = sphi 0, %s138
    %s155 = sphi 0, %s139
    %s163 = sphi 0, %s165
    %s166 = sphi 0, %s163
    %s167 = sphi 0, %s166
    %s183 = sphi 0, %s167
    %s191 = sphi 0, %s193
    %s194 = sphi 0, %s191
    %s195 = sphi 0, %s194
    %s211 = sphi 0, %s195
    %s219 = sphi 0, %s221
    %s222 = sphi 0, %s219
    %s223 = sphi 0, %s222
    %s239 = sphi 0, %s223
  $region4: #{mwdunet_forward.5} parent=0 // loop_header_branch
    %15 = sbr.rel (%p13) target = $region8
  $region5: #{mwdunet_forward.5} parent=0 // loop_body
    %s17 = ssub.s32 %s12, 1
    %s18 = ssub.s32 %s12, 2
    %s28 = sadd.s32 1, %s21
    %p29 = scmp.ge.s32.totalorder %s28, 1
    %s30 = scalar_select %p29, 0, %s28
    %s31 = sadd.s32 1, %s20
    %s32 = scalar_select %p29, %s31, %s20
    %p33 = scmp.ge.s32.totalorder %s32, 1
    %s34 = scalar_select %p33, 0, %s32
    %s35 = sadd.s32 1, %s19
    %s36 = scalar_select %p33, %s35, %s19
    %p37 = scmp.ge.s32.totalorder %s36, 2
    %s38 = scalar_select %p37, 0, %s36
    %s39 = ssub.s32 %s19, %s38
    %s40 = ssub.s32 %s21, %s30
    %s41 = sor.u32 %s39, %s40
    %s42 = ssub.s32 %s20, %s34
    %s43 = sor.u32 %s41, %s42
    %p44 = scmp.eq.s32.totalorder %s43, 0
    %s46 = sadd.s32 %s45, 1
    %s47 = scalar_select %p44, %s45, %s46
    %p50 = pneg %p44
    %p51 = scmp.eq.s32.totalorder %s12, 1
    %p52 = por %p50, %p51
    %p53 = scmp.ne.s32.totalorder %s45, %s48
    %p54 = scmp.eq.s32.totalorder %s12, 0
    %p55 = por %p53, %p54
    %p56 = scmp.ne.s32.totalorder %s45, %s48
    %p57 = scmp.eq.s32.totalorder %s17, 1
    %p58 = por %p56, %p57
    %p59 = scmp.ne.s32.totalorder %s48, %s49
    %p60 = scmp.eq.s32.totalorder %s17, 0
    %p61 = por %p59, %p60
    %p62 = scmp.ne.s32.totalorder %s48, %s49
    %p63 = scmp.eq.s32.totalorder %s18, 1
    %p64 = por %p62, %p63
    %p66 = scmp.ne.s32.totalorder %s49, %s65
    %p67 = scmp.eq.s32.totalorder %s18, 0
    %p68 = por %p66, %p67
    %s69 = ssub.s32 %s19, %s38
    %s70 = ssub.s32 %s21, %s30
    %s71 = sor.u32 %s69, %s70
    %s72 = ssub.s32 %s20, %s34
    %s73 = sor.u32 %s71, %s72
    %p74 = scmp.eq.s32.totalorder %s73, 0
    %s76 = sadd.s32 %s75, 1
    %s77 = scalar_select %p74, %s75, %s76
    %p80 = pneg %p74
    %p81 = scmp.eq.s32.totalorder %s12, 1
    %p82 = por %p80, %p81
    %p83 = scmp.ne.s32.totalorder %s75, %s78
    %p84 = scmp.eq.s32.totalorder %s12, 0
    %p85 = por %p83, %p84
    %p86 = scmp.ne.s32.totalorder %s75, %s78
    %p87 = scmp.eq.s32.totalorder %s17, 1
    %p88 = por %p86, %p87
    %p89 = scmp.ne.s32.totalorder %s78, %s79
    %p90 = scmp.eq.s32.totalorder %s17, 0
    %p91 = por %p89, %p90
    %p92 = scmp.ne.s32.totalorder %s78, %s79
    %p93 = scmp.eq.s32.totalorder %s18, 1
    %p94 = por %p92, %p93
    %p96 = scmp.ne.s32.totalorder %s79, %s95
    %p97 = scmp.eq.s32.totalorder %s18, 0
    %p98 = por %p96, %p97
    %s99 = ssub.s32 %s19, %s38
    %s100 = ssub.s32 %s21, %s30
    %s101 = sor.u32 %s99, %s100
    %s102 = ssub.s32 %s20, %s34
    %s103 = sor.u32 %s101, %s102
    %p104 = scmp.eq.s32.totalorder %s103, 0
    %s106 = sadd.s32 %s105, 1
    %s107 = scalar_select %p104, %s105, %s106
    %p110 = pneg %p104
    %p111 = scmp.eq.s32.totalorder %s12, 1
    %p112 = por %p110, %p111
    %p113 = scmp.ne.s32.totalorder %s105, %s108
    %p114 = scmp.eq.s32.totalorder %s12, 0
    %p115 = por %p113, %p114
    %p116 = scmp.ne.s32.totalorder %s105, %s108
    %p117 = scmp.eq.s32.totalorder %s17, 1
    %p118 = por %p116, %p117
    %p119 = scmp.ne.s32.totalorder %s108, %s109
    %p120 = scmp.eq.s32.totalorder %s17, 0
    %p121 = por %p119, %p120
    %p122 = scmp.ne.s32.totalorder %s108, %s109
    %p123 = scmp.eq.s32.totalorder %s18, 1
    %p124 = por %p122, %p123
    %p126 = scmp.ne.s32.totalorder %s109, %s125
    %p127 = scmp.eq.s32.totalorder %s18, 0
    %p128 = por %p126, %p127
    %s129 = ssub.s32 %s19, %s38
    %s130 = ssub.s32 %s21, %s30
    %s131 = sor.u32 %s129, %s130
    %s132 = ssub.s32 %s20, %s34
    %s133 = sor.u32 %s131, %s132
    %p134 = scmp.eq.s32.totalorder %s133, 0
    %s136 = sadd.s32 %s135, 1
    %s137 = scalar_select %p134, %s135, %s136
    %p140 = pneg %p134
    %p141 = scmp.eq.s32.totalorder %s12, 1
    %p142 = por %p140, %p141
    %p143 = scmp.ne.s32.totalorder %s135, %s138
    %p144 = scmp.eq.s32.totalorder %s12, 0
    %p145 = por %p143, %p144
    %p146 = scmp.ne.s32.totalorder %s135, %s138
    %p147 = scmp.eq.s32.totalorder %s17, 1
    %p148 = por %p146, %p147
    %p149 = scmp.ne.s32.totalorder %s138, %s139
    %p150 = scmp.eq.s32.totalorder %s17, 0
    %p151 = por %p149, %p150
    %p152 = scmp.ne.s32.totalorder %s138, %s139
    %p153 = scmp.eq.s32.totalorder %s18, 1
    %p154 = por %p152, %p153
    %p156 = scmp.ne.s32.totalorder %s139, %s155
    %p157 = scmp.eq.s32.totalorder %s18, 0
    %p158 = por %p156, %p157
    %s159 = ssub.s32 %s19, %s38
    %s160 = ssub.s32 %s20, %s34
    %s161 = sor.u32 %s159, %s160
    %p162 = scmp.eq.s32.totalorder %s161, 0
    %s164 = sadd.s32 %s163, 1
    %s165 = scalar_select %p162, %s163, %s164
    %p168 = pneg %p162
    %p169 = scmp.eq.s32.totalorder %s12, 1
    %p170 = por %p168, %p169
    %p171 = scmp.ne.s32.totalorder %s163, %s166
    %p172 = scmp.eq.s32.totalorder %s12, 0
    %p173 = por %p171, %p172
    %p174 = scmp.ne.s32.totalorder %s163, %s166
    %p175 = scmp.eq.s32.totalorder %s17, 1
    %p176 = por %p174, %p175
    %p177 = scmp.ne.s32.totalorder %s166, %s167
    %p178 = scmp.eq.s32.totalorder %s17, 0
    %p179 = por %p177, %p178
    %p180 = scmp.ne.s32.totalorder %s166, %s167
    %p181 = scmp.eq.s32.totalorder %s18, 1
    %p182 = por %p180, %p181
    %p184 = scmp.ne.s32.totalorder %s167, %s183
    %p185 = scmp.eq.s32.totalorder %s18, 0
    %p186 = por %p184, %p185
    %s187 = ssub.s32 %s19, %s38
    %s188 = ssub.s32 %s20, %s34
    %s189 = sor.u32 %s187, %s188
    %p190 = scmp.eq.s32.totalorder %s189, 0
    %s192 = sadd.s32 %s191, 1
    %s193 = scalar_select %p190, %s191, %s192
    %p196 = pneg %p190
    %p197 = scmp.eq.s32.totalorder %s12, 1
    %p198 = por %p196, %p197
    %p199 = scmp.ne.s32.totalorder %s191, %s194
    %p200 = scmp.eq.s32.totalorder %s12, 0
    %p201 = por %p199, %p200
    %p202 = scmp.ne.s32.totalorder %s191, %s194
    %p203 = scmp.eq.s32.totalorder %s17, 1
    %p204 = por %p202, %p203
    %p205 = scmp.ne.s32.totalorder %s194, %s195
    %p206 = scmp.eq.s32.totalorder %s17, 0
    %p207 = por %p205, %p206
    %p208 = scmp.ne.s32.totalorder %s194, %s195
    %p209 = scmp.eq.s32.totalorder %s18, 1
    %p210 = por %p208, %p209
    %p212 = scmp.ne.s32.totalorder %s195, %s211
    %p213 = scmp.eq.s32.totalorder %s18, 0
    %p214 = por %p212, %p213
    %s215 = ssub.s32 %s19, %s38
    %s216 = ssub.s32 %s20, %s34
    %s217 = sor.u32 %s215, %s216
    %p218 = scmp.eq.s32.totalorder %s217, 0
    %s220 = sadd.s32 %s219, 1
    %s221 = scalar_select %p218, %s219, %s220
    %p224 = pneg %p218
    %p225 = scmp.eq.s32.totalorder %s12, 1
    %p226 = por %p224, %p225
    %p227 = scmp.ne.s32.totalorder %s219, %s222
    %p228 = scmp.eq.s32.totalorder %s12, 0
    %p229 = por %p227, %p228
    %p230 = scmp.ne.s32.totalorder %s219, %s222
    %p231 = scmp.eq.s32.totalorder %s17, 1
    %p232 = por %p230, %p231
    %p233 = scmp.ne.s32.totalorder %s222, %s223
    %p234 = scmp.eq.s32.totalorder %s17, 0
    %p235 = por %p233, %p234
    %p236 = scmp.ne.s32.totalorder %s222, %s223
    %p237 = scmp.eq.s32.totalorder %s18, 1
    %p238 = por %p236, %p237
    %p240 = scmp.ne.s32.totalorder %s223, %s239
    %p241 = scmp.eq.s32.totalorder %s18, 0
    %p242 = por %p240, %p241
    %p243 = scmp.le.s32.totalorder 1, %s12
    %p244 = scmp.lt.s32.totalorder %s12, 3
    %p245 = pnand %p243, %p244
    %p246 = pneg %p245
    // Predicated region
    $region9: #{mwdunet_forward.5} parent=5 // pred_check
      _
    $region10: #{mwdunet_forward.5} parent=5 // pred_check_branch
      %248 = sbr.rel (%p245) target = $region12
    $region11: #{mwdunet_forward.5} parent=5 // pred_region
      %s249 = ssub.s32 %s12, 1
    $region12: #{mwdunet_forward.5} parent=5 // pred_fallthru
      _
    %p250 = scmp.lt.s32.totalorder %s12, 2
    // Predicated region
    $region13: #{mwdunet_forward.5} parent=5 // pred_check
      %p251 = pneg %p250
    $region14: #{mwdunet_forward.5} parent=5 // pred_check_branch
      %253 = sbr.rel (%p251) target = $region16
    $region15: #{mwdunet_forward.5} parent=5 // pred_region
      // Predicated region
      $region17: #{mwdunet_forward.5} parent=15 // pred_check
        %p254 = pneg %p55
      $region18: #{mwdunet_forward.5} parent=15 // pred_check_branch
        %256 = sbr.rel (%p254) target = $region20
      $region19: #{mwdunet_forward.5} parent=15 // pred_region
        %s257 = smul.u32 4, %s21
        %s258 = smul.u32 2, %s20
        %p259 = scmp.lt.s32.totalorder %s19, 1
        %s260 = scalar_select %p259, %s19, 1
        %p261 = scmp.lt.s32.totalorder %s257, 3
        %s262 = scalar_select %p261, %s257, 3
        %p263 = scmp.lt.s32.totalorder %s258, 1
        %s264 = scalar_select %p263, %s258, 1
        %s265 = smul.addr %s262, 2
        %s266 = sadd.s32 %s264, %s265
        %s267 = smul.addr %s260, 8
        %s268 = sadd.s32 %s266, %s267
        %s269 = smul.addr %s268, 8
        %s270 = scalar_lea.vmem %s0, %s269
        %s271 = smul.u32 4, %s21
        %s272 = smul.u32 2, %s20
      $region20: #{mwdunet_forward.5} parent=15 // pred_fallthru
        _
      // Predicated region
      $region21: #{mwdunet_forward.5} parent=15 // pred_check
        %p273 = pneg %p85
      $region22: #{mwdunet_forward.5} parent=15 // pred_check_branch
        %275 = sbr.rel (%p273) target = $region24
      $region23: #{mwdunet_forward.5} parent=15 // pred_region
        %s276 = smul.u32 4, %s21
        %s277 = smul.u32 2, %s20
        %p278 = scmp.lt.s32.totalorder %s19, 1
        %s279 = scalar_select %p278, %s19, 1
        %p280 = scmp.lt.s32.totalorder %s276, 3
        %s281 = scalar_select %p280, %s276, 3
        %p282 = scmp.lt.s32.totalorder %s277, 1
        %s283 = scalar_select %p282, %s277, 1
        %s284 = smul.addr %s281, 2
        %s285 = sadd.s32 %s283, %s284
        %s286 = smul.addr %s279, 8
        %s287 = sadd.s32 %s285, %s286
        %s288 = smul.addr %s287, 8
        %s289 = scalar_lea.vmem %s1, %s288
        %s290 = smul.u32 4, %s21
        %s291 = smul.u32 2, %s20
      $region24: #{mwdunet_forward.5} parent=15 // pred_fallthru
        _
      // Predicated region
      $region25: #{mwdunet_forward.5} parent=15 // pred_check
        %p292 = pneg %p115
      $region26: #{mwdunet_forward.5} parent=15 // pred_check_branch
        %294 = sbr.rel (%p292) target = $region28
      $region27: #{mwdunet_forward.5} parent=15 // pred_region
        %s295 = smul.u32 4, %s21
        %s296 = smul.u32 2, %s20
        %p297 = scmp.lt.s32.totalorder %s19, 1
        %s298 = scalar_select %p297, %s19, 1
        %p299 = scmp.lt.s32.totalorder %s295, 3
        %s300 = scalar_select %p299, %s295, 3
        %p301 = scmp.lt.s32.totalorder %s296, 1
        %s302 = scalar_select %p301, %s296, 1
        %s303 = smul.addr %s300, 2
        %s304 = sadd.s32 %s302, %s303
        %s305 = smul.addr %s298, 8
        %s306 = sadd.s32 %s304, %s305
        %s307 = smul.addr %s306, 8
        %s308 = scalar_lea.vmem %s2, %s307
        %s309 = smul.u32 4, %s21
        %s310 = smul.u32 2, %s20
      $region28: #{mwdunet_forward.5} parent=15 // pred_fallthru
        _
      // Predicated region
      $region29: #{mwdunet_forward.5} parent=15 // pred_check
        %p311 = pneg %p145
      $region30: #{mwdunet_forward.5} parent=15 // pred_check_branch
        %313 = sbr.rel (%p311) target = $region32
      $region31: #{mwdunet_forward.5} parent=15 // pred_region
        %s314 = smul.u32 4, %s21
        %s315 = smul.u32 2, %s20
        %p316 = scmp.lt.s32.totalorder %s19, 1
        %s317 = scalar_select %p316, %s19, 1
        %p318 = scmp.lt.s32.totalorder %s314, 3
        %s319 = scalar_select %p318, %s314, 3
        %p320 = scmp.lt.s32.totalorder %s315, 1
        %s321 = scalar_select %p320, %s315, 1
        %s322 = smul.addr %s319, 2
        %s323 = sadd.s32 %s321, %s322
        %s324 = smul.addr %s317, 8
        %s325 = sadd.s32 %s323, %s324
        %s326 = smul.addr %s325, 8
        %s327 = scalar_lea.vmem %s3, %s326
        %s328 = smul.u32 4, %s21
        %s329 = smul.u32 2, %s20
      $region32: #{mwdunet_forward.5} parent=15 // pred_fallthru
        _
      // Predicated region
      $region33: #{mwdunet_forward.5} parent=15 // pred_check
        %p330 = pneg %p173
      $region34: #{mwdunet_forward.5} parent=15 // pred_check_branch
        %332 = sbr.rel (%p330) target = $region36
      $region35: #{mwdunet_forward.5} parent=15 // pred_region
        %s333 = smul.u32 2, %s20
        %p334 = scmp.lt.s32.totalorder %s19, 1
        %s335 = scalar_select %p334, %s19, 1
        %p336 = scmp.lt.s32.totalorder %s333, 1
        %s337 = scalar_select %p336, %s333, 1
        %s338 = smul.addr %s335, 4
        %s339 = sadd.s32 %s337, %s338
        %s340 = smul.addr %s339, 8
        %s341 = scalar_lea.vmem %s4, %s340
        %s342 = smul.u32 2, %s20
      $region36: #{mwdunet_forward.5} parent=15 // pred_fallthru
        _
      // Predicated region
      $region37: #{mwdunet_forward.5} parent=15 // pred_check
        %p343 = pneg %p201
      $region38: #{mwdunet_forward.5} parent=15 // pred_check_branch
        %345 = sbr.rel (%p343) target = $region40
      $region39: #{mwdunet_forward.5} parent=15 // pred_region
        %s346 = smul.u32 2, %s20
        %p347 = scmp.lt.s32.totalorder %s19, 1
        %s348 = scalar_select %p347, %s19, 1
        %p349 = scmp.lt.s32.totalorder %s346, 1
        %s350 = scalar_select %p349, %s346, 1
        %s351 = smul.addr %s348, 4
        %s352 = sadd.s32 %s350, %s351
        %s353 = smul.addr %s352, 8
        %s354 = scalar_lea.vmem %s5, %s353
        %s355 = smul.u32 2, %s20
      $region40: #{mwdunet_forward.5} parent=15 // pred_fallthru
        _
    $region16: #{mwdunet_forward.5} parent=5 // pred_fallthru
      _
    %p356 = scmp.le.s32.totalorder 1, %s12
    %p357 = scmp.lt.s32.totalorder %s12, 3
    %p358 = pnand %p356, %p357
    %p359 = pneg %p358
    // Predicated region
    $region41: #{mwdunet_forward.5} parent=5 // pred_check
      _
    $region42: #{mwdunet_forward.5} parent=5 // pred_check_branch
      %361 = sbr.rel (%p358) target = $region44
    $region43: #{mwdunet_forward.5} parent=5 // pred_region
      %s362 = ssub.s32 %s12, 1
      %s363 = smul.u32 4, %s24
      %s364 = smul.u32 2, %s23
      %p365 = scmp.lt.s32.totalorder %s22, 1
      %s366 = scalar_select %p365, %s22, 1
      %p367 = scmp.lt.s32.totalorder %s363, 3
      %s368 = scalar_select %p367, %s363, 3
      %p369 = scmp.lt.s32.totalorder %s364, 1
      %s370 = scalar_select %p369, %s364, 1
      %s371 = smul.addr %s368, 2
      %s372 = sadd.s32 %s370, %s371
      %s373 = smul.addr %s366, 8
      %s374 = sadd.s32 %s372, %s373
      %s375 = smul.addr %s374, 8
      %s376 = scalar_lea.vmem %s0, %s375
      %p377 = pneg %p61
      %p378 = pneg %p58
      %s379 = smul.u32 4, %s24
      %s380 = smul.u32 2, %s23
      %p381 = scmp.lt.s32.totalorder %s22, 1
      %s382 = scalar_select %p381, %s22, 1
      %p383 = scmp.lt.s32.totalorder %s379, 3
      %s384 = scalar_select %p383, %s379, 3
      %p385 = scmp.lt.s32.totalorder %s380, 1
      %s386 = scalar_select %p385, %s380, 1
      %s387 = smul.addr %s384, 2
      %s388 = sadd.s32 %s386, %s387
      %s389 = smul.addr %s382, 8
      %s390 = sadd.s32 %s388, %s389
      %s391 = smul.addr %s390, 8
      %s392 = scalar_lea.vmem %s1, %s391
      %p393 = pneg %p91
      %p394 = pneg %p88
      %s395 = smul.u32 4, %s24
      %s396 = smul.u32 2, %s23
      %p397 = scmp.lt.s32.totalorder %s22, 1
      %s398 = scalar_select %p397, %s22, 1
      %p399 = scmp.lt.s32.totalorder %s395, 3
      %s400 = scalar_select %p399, %s395, 3
      %p401 = scmp.lt.s32.totalorder %s396, 1
      %s402 = scalar_select %p401, %s396, 1
      %s403 = smul.addr %s400, 2
      %s404 = sadd.s32 %s402, %s403
      %s405 = smul.addr %s398, 8
      %s406 = sadd.s32 %s404, %s405
      %s407 = smul.addr %s406, 8
      %s408 = scalar_lea.vmem %s2, %s407
      %p409 = pneg %p121
      %p410 = pneg %p118
      %s411 = smul.u32 4, %s24
      %s412 = smul.u32 2, %s23
      %p413 = scmp.lt.s32.totalorder %s22, 1
      %s414 = scalar_select %p413, %s22, 1
      %p415 = scmp.lt.s32.totalorder %s411, 3
      %s416 = scalar_select %p415, %s411, 3
      %p417 = scmp.lt.s32.totalorder %s412, 1
      %s418 = scalar_select %p417, %s412, 1
      %s419 = smul.addr %s416, 2
      %s420 = sadd.s32 %s418, %s419
      %s421 = smul.addr %s414, 8
      %s422 = sadd.s32 %s420, %s421
      %s423 = smul.addr %s422, 8
      %s424 = scalar_lea.vmem %s3, %s423
      %p425 = pneg %p151
      %p426 = pneg %p148
      %s427 = smul.u32 2, %s23
      %p428 = scmp.lt.s32.totalorder %s22, 1
      %s429 = scalar_select %p428, %s22, 1
      %p430 = scmp.lt.s32.totalorder %s427, 1
      %s431 = scalar_select %p430, %s427, 1
      %s432 = smul.addr %s429, 4
      %s433 = sadd.s32 %s431, %s432
      %s434 = smul.addr %s433, 8
      %s435 = scalar_lea.vmem %s4, %s434
      %p436 = pneg %p179
      %p437 = pneg %p176
      %s438 = smul.u32 2, %s23
      %p439 = scmp.lt.s32.totalorder %s22, 1
      %s440 = scalar_select %p439, %s22, 1
      %p441 = scmp.lt.s32.totalorder %s438, 1
      %s442 = scalar_select %p441, %s438, 1
      %s443 = smul.addr %s440, 4
      %s444 = sadd.s32 %s442, %s443
      %s445 = smul.addr %s444, 8
      %s446 = scalar_lea.vmem %s5, %s445
      %p447 = pneg %p207
      %p448 = pneg %p204
      %p449 = pneg %p235
      %p450 = pneg %p232
      %s451 = smul.u32 2, %s23
      %p452 = scmp.lt.s32.totalorder %s22, 1
      %s453 = scalar_select %p452, %s22, 1
      %p454 = scmp.lt.s32.totalorder %s451, 1
      %s455 = scalar_select %p454, %s451, 1
      %s456 = smul.addr %s453, 4
      %s457 = sadd.s32 %s455, %s456
      %s458 = smul.addr %s457, 8
      %s459 = scalar_lea.vmem %s6, %s458
      %s460 = smul.u32 4, %s24
      %s461 = smul.u32 2, %s23
      %p462 = scmp.lt.s32.totalorder %s22, 1
      %s463 = scalar_select %p462, %s22, 1
      %p464 = scmp.lt.s32.totalorder %s460, 3
      %s465 = scalar_select %p464, %s460, 3
      %p466 = scmp.lt.s32.totalorder %s461, 1
      %s467 = scalar_select %p466, %s461, 1
      %s468 = smul.addr %s465, 2
      %s469 = sadd.s32 %s467, %s468
      %s470 = smul.addr %s463, 8
      %s471 = sadd.s32 %s469, %s470
      %s472 = smul.addr %s471, 8
      %s473 = scalar_lea.vmem %s0, %s472
      %s474 = smul.u32 4, %s24
      %s475 = smul.u32 2, %s23
      %s476 = smul.u32 4, %s24
      %s477 = smul.u32 2, %s23
      %p478 = scmp.lt.s32.totalorder %s22, 1
      %s479 = scalar_select %p478, %s22, 1
      %p480 = scmp.lt.s32.totalorder %s476, 3
      %s481 = scalar_select %p480, %s476, 3
      %p482 = scmp.lt.s32.totalorder %s477, 1
      %s483 = scalar_select %p482, %s477, 1
      %s484 = smul.addr %s481, 2
      %s485 = sadd.s32 %s483, %s484
      %s486 = smul.addr %s479, 8
      %s487 = sadd.s32 %s485, %s486
      %s488 = smul.addr %s487, 8
      %s489 = scalar_lea.vmem %s1, %s488
      %s490 = smul.u32 4, %s24
      %s491 = smul.u32 2, %s23
      %s492 = smul.u32 4, %s24
      %s493 = smul.u32 2, %s23
      %p494 = scmp.lt.s32.totalorder %s22, 1
      %s495 = scalar_select %p494, %s22, 1
      %p496 = scmp.lt.s32.totalorder %s492, 3
      %s497 = scalar_select %p496, %s492, 3
      %p498 = scmp.lt.s32.totalorder %s493, 1
      %s499 = scalar_select %p498, %s493, 1
      %s500 = smul.addr %s497, 2
      %s501 = sadd.s32 %s499, %s500
      %s502 = smul.addr %s495, 8
      %s503 = sadd.s32 %s501, %s502
      %s504 = smul.addr %s503, 8
      %s505 = scalar_lea.vmem %s2, %s504
      %s506 = smul.u32 4, %s24
      %s507 = smul.u32 2, %s23
      %s508 = smul.u32 4, %s24
      %s509 = smul.u32 2, %s23
      %p510 = scmp.lt.s32.totalorder %s22, 1
      %s511 = scalar_select %p510, %s22, 1
      %p512 = scmp.lt.s32.totalorder %s508, 3
      %s513 = scalar_select %p512, %s508, 3
      %p514 = scmp.lt.s32.totalorder %s509, 1
      %s515 = scalar_select %p514, %s509, 1
      %s516 = smul.addr %s513, 2
      %s517 = sadd.s32 %s515, %s516
      %s518 = smul.addr %s511, 8
      %s519 = sadd.s32 %s517, %s518
      %s520 = smul.addr %s519, 8
      %s521 = scalar_lea.vmem %s3, %s520
      %s522 = smul.u32 4, %s24
      %s523 = smul.u32 2, %s23
      %s524 = smul.u32 2, %s23
      %p525 = scmp.lt.s32.totalorder %s22, 1
      %s526 = scalar_select %p525, %s22, 1
      %p527 = scmp.lt.s32.totalorder %s524, 1
      %s528 = scalar_select %p527, %s524, 1
      %s529 = smul.addr %s526, 4
      %s530 = sadd.s32 %s528, %s529
      %s531 = smul.addr %s530, 8
      %s532 = scalar_lea.vmem %s4, %s531
      %s533 = smul.u32 2, %s23
      %s534 = smul.u32 2, %s23
      %p535 = scmp.lt.s32.totalorder %s22, 1
      %s536 = scalar_select %p535, %s22, 1
      %p537 = scmp.lt.s32.totalorder %s534, 1
      %s538 = scalar_select %p537, %s534, 1
      %s539 = smul.addr %s536, 4
      %s540 = sadd.s32 %s538, %s539
      %s541 = smul.addr %s540, 8
      %s542 = scalar_lea.vmem %s5, %s541
      %s543 = smul.u32 2, %s23
      %s544 = smul.u32 2, %s23
      %p545 = scmp.lt.s32.totalorder %s22, 1
      %s546 = scalar_select %p545, %s22, 1
      %p547 = scmp.lt.s32.totalorder %s544, 1
      %s548 = scalar_select %p547, %s544, 1
      %s549 = smul.addr %s546, 4
      %s550 = sadd.s32 %s548, %s549
      %s551 = smul.addr %s550, 8
      %s552 = scalar_lea.vmem %s6, %s551
      %s553 = smul.u32 2, %s23
      %p554 = scmp.eq.s32.totalorder %s24, 0
      // Predicated region
      $region45: #{mwdunet_forward.5} parent=43 // pred_check
        %p555 = pneg %p554
      $region46: #{mwdunet_forward.5} parent=43 // pred_check_branch
        %557 = sbr.rel (%p555) target = $region48
      $region47: #{mwdunet_forward.5} parent=43 // pred_region
        %vm558 = vcmask 130048
        %559 = vst.msk [vmem:[#allocation2] sm:$0xff] %vm558, 0.0
        %560 = vst.msk [vmem:[#allocation2 + $0x8] sm:$0xff] %vm558, 0.0
        %561 = vst.msk [vmem:[#allocation3] sm:$0xff] %vm558, 0.0
        %562 = vst.msk [vmem:[#allocation3 + $0x8] sm:$0xff] %vm558, 0.0
      $region48: #{mwdunet_forward.5} parent=43 // pred_fallthru
        _
      %v563 = vld [vmem:[%s505] sm:$0xff]
      %v564 = vld [vmem:[%s505 + $0x8] sm:$0xff]
      %v565 = vld [vmem:[%s505 + $0x10] sm:$0xff]
      %v566 = vld [vmem:[%s505 + $0x18] sm:$0xff]
      %v567 = vld [vmem:[%s505 + $0x20] sm:$0xff]
      %v568 = vld [vmem:[%s505 + $0x28] sm:$0xff]
      %v569 = vld [vmem:[%s505 + $0x30] sm:$0xff]
      %v570 = vld [vmem:[%s505 + $0x38] sm:$0xff]
      %v571 = vld [vmem:[%s521] sm:$0xff]
      %v572 = vld [vmem:[%s521 + $0x8] sm:$0xff]
      %v573 = vld [vmem:[%s521 + $0x10] sm:$0xff]
      %v574 = vld [vmem:[%s521 + $0x18] sm:$0xff]
      %v575 = vld [vmem:[%s521 + $0x20] sm:$0xff]
      %v576 = vld [vmem:[%s521 + $0x28] sm:$0xff]
      %v577 = vld [vmem:[%s521 + $0x30] sm:$0xff]
      %v578 = vld [vmem:[%s521 + $0x38] sm:$0xff]
      %v579 = vld [vmem:[%s473] sm:$0xff]
      %v580 = vld [vmem:[%s473 + $0x8] sm:$0xff]
      %v581 = vld [vmem:[%s473 + $0x10] sm:$0xff]
      %v582 = vld [vmem:[%s473 + $0x18] sm:$0xff]
      %v583 = vld [vmem:[%s473 + $0x20] sm:$0xff]
      %v584 = vld [vmem:[%s473 + $0x28] sm:$0xff]
      %v585 = vld [vmem:[%s473 + $0x30] sm:$0xff]
      %v586 = vld [vmem:[%s473 + $0x38] sm:$0xff]
      %v587 = vld [vmem:[%s489] sm:$0xff]
      %v588 = vld [vmem:[%s489 + $0x8] sm:$0xff]
      %v589 = vld [vmem:[%s489 + $0x10] sm:$0xff]
      %v590 = vld [vmem:[%s489 + $0x18] sm:$0xff]
      %v591 = vld [vmem:[%s489 + $0x20] sm:$0xff]
      %v592 = vld [vmem:[%s489 + $0x28] sm:$0xff]
      %v593 = vld [vmem:[%s489 + $0x30] sm:$0xff]
      %v594 = vld [vmem:[%s489 + $0x38] sm:$0xff]
      %v595 = vld [vmem:[#allocation2] sm:$0xff]
      %v596 = vld [vmem:[#allocation2 + $0x8] sm:$0xff]
      %v597 = vmul.f32 %v563, %v579
      %v598 = vmul.f32 %v564, %v580
      %v599 = vmul.f32 %v565, %v581
      %v600 = vmul.f32 %v566, %v582
      %v601 = vmul.f32 %v567, %v583
      %v602 = vmul.f32 %v568, %v584
      %v603 = vmul.f32 %v569, %v585
      %v604 = vmul.f32 %v570, %v586
      %v605 = vmul.f32 %v571, %v587
      %v606 = vmul.f32 %v572, %v588
      %v607 = vmul.f32 %v573, %v589
      %v608 = vmul.f32 %v574, %v590
      %v609 = vmul.f32 %v575, %v591
      %v610 = vmul.f32 %v576, %v592
      %v611 = vmul.f32 %v577, %v593
      %v612 = vmul.f32 %v578, %v594
      %v613 = vadd.f32 %v597, %v605
      %v614 = vadd.f32 %v598, %v606
      %v615 = vadd.f32 %v599, %v607
      %v616 = vadd.f32 %v600, %v608
      %v617 = vadd.f32 %v601, %v609
      %v618 = vadd.f32 %v602, %v610
      %v619 = vadd.f32 %v603, %v611
      %v620 = vadd.f32 %v604, %v612
      %vm621 = vcmask 130048
      %v622 = vsel %vm621, %v613, 0.0
      %v623 = vsel %vm621, %v615, 0.0
      %v624 = vadd.f32 %v622, %v623
      %v625 = vsel %vm621, %v617, 0.0
      %v626 = vadd.f32 %v624, %v625
      %v627 = vsel %vm621, %v619, 0.0
      %v628 = vadd.f32 %v626, %v627
      %v629 = vsel %vm621, %v614, 0.0
      %v630 = vsel %vm621, %v616, 0.0
      %v631 = vadd.f32 %v629, %v630
      %v632 = vsel %vm621, %v618, 0.0
      %v633 = vadd.f32 %v631, %v632
      %v634 = vsel %vm621, %v620, 0.0
      %v635 = vadd.f32 %v633, %v634
      %v636 = vadd.f32 %v595, %v628
      %v637 = vadd.f32 %v596, %v635
      %638 = vst.msk [vmem:[#allocation2] sm:$0xff] %vm621, %v636
      %639 = vst.msk [vmem:[#allocation2 + $0x8] sm:$0xff] %vm621, %v637
      %v640 = vld [vmem:[#allocation3] sm:$0xff]
      %v641 = vld [vmem:[#allocation3 + $0x8] sm:$0xff]
      %v642 = vmul.f32 %v563, %v587
      %v643 = vmul.f32 %v564, %v588
      %v644 = vmul.f32 %v565, %v589
      %v645 = vmul.f32 %v566, %v590
      %v646 = vmul.f32 %v567, %v591
      %v647 = vmul.f32 %v568, %v592
      %v648 = vmul.f32 %v569, %v593
      %v649 = vmul.f32 %v570, %v594
      %v650 = vmul.f32 %v571, %v579
      %v651 = vmul.f32 %v572, %v580
      %v652 = vmul.f32 %v573, %v581
      %v653 = vmul.f32 %v574, %v582
      %v654 = vmul.f32 %v575, %v583
      %v655 = vmul.f32 %v576, %v584
      %v656 = vmul.f32 %v577, %v585
      %v657 = vmul.f32 %v578, %v586
      %v658 = vsub.f32 %v642, %v650
      %v659 = vsub.f32 %v643, %v651
      %v660 = vsub.f32 %v644, %v652
      %v661 = vsub.f32 %v645, %v653
      %v662 = vsub.f32 %v646, %v654
      %v663 = vsub.f32 %v647, %v655
      %v664 = vsub.f32 %v648, %v656
      %v665 = vsub.f32 %v649, %v657
      %v666 = vsel %vm621, %v658, 0.0
      %v667 = vsel %vm621, %v660, 0.0
      %v668 = vadd.f32 %v666, %v667
      %v669 = vsel %vm621, %v662, 0.0
      %v670 = vadd.f32 %v668, %v669
      %v671 = vsel %vm621, %v664, 0.0
      %v672 = vadd.f32 %v670, %v671
      %v673 = vsel %vm621, %v659, 0.0
      %v674 = vsel %vm621, %v661, 0.0
      %v675 = vadd.f32 %v673, %v674
      %v676 = vsel %vm621, %v663, 0.0
      %v677 = vadd.f32 %v675, %v676
      %v678 = vsel %vm621, %v665, 0.0
      %v679 = vadd.f32 %v677, %v678
      %v680 = vadd.f32 %v640, %v672
      %v681 = vadd.f32 %v641, %v679
      %682 = vst.msk [vmem:[#allocation3] sm:$0xff] %vm621, %v680
      %683 = vst.msk [vmem:[#allocation3 + $0x8] sm:$0xff] %vm621, %v681
      // Predicated region
      $region49: #{mwdunet_forward.5} parent=43 // pred_check
        %p684 = pneg %p554
      $region50: #{mwdunet_forward.5} parent=43 // pred_check_branch
        %686 = sbr.rel (%p684) target = $region52
      $region51: #{mwdunet_forward.5} parent=43 // pred_region
        %v687 = vld [vmem:[%s532] sm:$0xff]
        %v688 = vld [vmem:[%s532 + $0x8] sm:$0xff]
        %v689 = vld [vmem:[#allocation2] sm:$0xff]
        %v690 = vld [vmem:[#allocation2 + $0x8] sm:$0xff]
        %v691 = vmul.f32 %v689, 0.5
        %v692 = vmul.f32 %v690, 0.5
        %v693 = vsub.f32 %v687, %v691
        %v694 = vsub.f32 %v688, %v692
        %v695 = vld [vmem:[%s542] sm:$0xff]
        %v696 = vld [vmem:[%s542 + $0x8] sm:$0xff]
        %v697 = vadd.f32 %v693, %v695
        %v698 = vadd.f32 %v694, %v696
        %699 = vst.msk [vmem:[%s552] sm:$0xff] %vm621, %v697
        %700 = vst.msk [vmem:[%s552 + $0x8] sm:$0xff] %vm621, %v698
        %s701 = scalar_lea.vmem %s532, 16
        %v702 = vld [vmem:[%s701] sm:$0xff]
        %v703 = vld [vmem:[%s701 + $0x8] sm:$0xff]
        %v704 = vld [vmem:[#allocation3] sm:$0xff]
        %v705 = vld [vmem:[#allocation3 + $0x8] sm:$0xff]
        %v706 = vmul.f32 %v704, 0.5
        %v707 = vmul.f32 %v705, 0.5
        %v708 = vsub.f32 %v702, %v706
        %v709 = vsub.f32 %v703, %v707
        %s710 = scalar_lea.vmem %s542, 16
        %v711 = vld [vmem:[%s710] sm:$0xff]
        %v712 = vld [vmem:[%s710 + $0x8] sm:$0xff]
        %v713 = vadd.f32 %v708, %v711
        %v714 = vadd.f32 %v709, %v712
        %s715 = scalar_lea.vmem %s552, 16
        %716 = vst.msk [vmem:[%s715] sm:$0xff] %vm621, %v713
        %717 = vst.msk [vmem:[%s715 + $0x8] sm:$0xff] %vm621, %v714
      $region52: #{mwdunet_forward.5} parent=43 // pred_fallthru
        _
      %s718 = smul.u32 2, %s23
      %p719 = scmp.lt.s32.totalorder %s22, 1
      %s720 = scalar_select %p719, %s22, 1
      %p721 = scmp.lt.s32.totalorder %s718, 1
      %s722 = scalar_select %p721, %s718, 1
      %s723 = smul.addr %s720, 4
      %s724 = sadd.s32 %s722, %s723
      %s725 = smul.addr %s724, 8
      %s726 = scalar_lea.vmem %s6, %s725
      // Predicated region
      $region53: #{mwdunet_forward.5} parent=43 // pred_check
        %p727 = pneg %p232
      $region54: #{mwdunet_forward.5} parent=43 // pred_check_branch
        %729 = sbr.rel (%p727) target = $region56
      $region55: #{mwdunet_forward.5} parent=43 // pred_region
        %s730 = smul.u32 2, %s23
      $region56: #{mwdunet_forward.5} parent=43 // pred_fallthru
        _
    $region44: #{mwdunet_forward.5} parent=5 // pred_fallthru
      _
    %p731 = scmp.le.s32.totalorder 2, %s12
    // Predicated region
    $region57: #{mwdunet_forward.5} parent=5 // pred_check
      %p732 = pneg %p731
    $region58: #{mwdunet_forward.5} parent=5 // pred_check_branch
      %734 = sbr.rel (%p732) target = $region60
    $region59: #{mwdunet_forward.5} parent=5 // pred_region
      %s735 = ssub.s32 %s12, 2
      // Predicated region
      $region61: #{mwdunet_forward.5} parent=59 // pred_check
        %p736 = pneg %p238
      $region62: #{mwdunet_forward.5} parent=59 // pred_check_branch
        %738 = sbr.rel (%p736) target = $region64
      $region63: #{mwdunet_forward.5} parent=59 // pred_region
        %s739 = smul.u32 2, %s26
        %p740 = scmp.lt.s32.totalorder %s25, 1
        %s741 = scalar_select %p740, %s25, 1
        %p742 = scmp.lt.s32.totalorder %s739, 1
        %s743 = scalar_select %p742, %s739, 1
        %s744 = smul.addr %s741, 4
        %s745 = sadd.s32 %s743, %s744
        %s746 = smul.addr %s745, 8
        %s747 = scalar_lea.vmem %s6, %s746
      $region64: #{mwdunet_forward.5} parent=59 // pred_fallthru
        _
    $region60: #{mwdunet_forward.5} parent=5 // pred_fallthru
      _
  $region6: #{mwdunet_forward.5} parent=0 // loop_footer
    %s16 = sadd.s32 1, %s12
  $region7: #{mwdunet_forward.5} parent=0 // loop_footer_branch
    %11 = sbr.rel target = $region3
  $region8: #{mwdunet_forward.5} parent=0 // loop_exit
    _

</llo_original>
